<compile_context>
chip_gen: v7x
topology: tpu7x:2x2x1
jax: 0.10.0
libtpu: 0.0.40
codegen_flags: <defaults>
</compile_context>

<pallas_src>
import functools

import jax
import jax.numpy as jnp
from jax.experimental import pallas as pl
from jax.experimental.pallas import tpu as pltpu

BN_EPS = 1e-5


def _round_up(n, m):
    return (n + m - 1) // m * m


# ---------------------------------------------------------------------------
# Fused Pallas kernel (single invocation, everything resident in VMEM)
# ---------------------------------------------------------------------------

def _cnn_forward_kernel(x9_ref, w1_ref, t1_ref, w2_ref, t2_ref,
                        f1w_ref, f1b_ref, f2w_ref, f2b_ref, f3w_ref, f3b_ref,
                        o_ref, y1_scr, xp2_scr, y2_scr,
                        *, batch, h, w, approx_recip):
    """Whole CNNAgent forward pass (eval mode).

    x9_ref : (B*H*W, 9*Cin)  channel-only im2col of the zero-padded input,
                             rows ordered (b, y, x), cols ordered (kh, kw, c).
    w1_ref : (9*Cin, C1)     conv1 taps stacked along K, BN1 scale folded in.
    w2_ref : (9, C1, C2)     conv2 taps, BN2 scale folded in, tap = kh*3 + kw.
    t*_ref : (1, C*)         folded BatchNorm shifts (conv bias absorbed).
    f*_ref : fc weights (in, out) / biases (1, out); fc1 pre-permuted to the
             kernel's (hw, c) flatten order.
    """
    f32 = jnp.float32
    mm_dtype = w1_ref.dtype                      # MXU operand dtype (bf16 or f32)

    ph, pw = h // 2, w // 2                      # pooled dims after stage 1
    hp2, wp2 = ph + 2, pw + 2                    # zero-padded conv2 grid
    rows2 = batch * hp2 * wp2
    qh, qw = ph // 2, pw // 2                    # pooled dims after stage 2

    # ---- Stage 1: conv1 as ONE K=9*Cin matmul (BN scale folded) + shift + ReLU
    y1 = jnp.dot(x9_ref[...], w1_ref[...], preferred_element_type=f32)
    y1_scr[...] = jnp.maximum(y1 + t1_ref[...], 0.0)

    # ---- MaxPool 2x2/2 fused with the zero-pad for conv2: strided anchor gathers.
    #      Anchors live at rows (b*h + 2*hh)*w + 2*ww of y1_scr; the 4 window taps
    #      are row offsets {0, 1, w, w+1}.  All reads stay inside batch b's own
    #      rows (max read = (b*h + h-2)*w + w+1 + (pw-1)*2 < (b+1)*h*w).
    #      Gathered blocks land in the INTERIOR of the padded conv2 grid; borders
    #      (and the tap-reach tail rows) stay zero — that IS the conv2 padding.
    xp2_scr[...] = jnp.zeros(xp2_scr.shape, xp2_scr.dtype)
    for b in range(batch):
        for hh in range(ph):
            base = (b * h + 2 * hh) * w
            blk = y1_scr[pl.ds(base, pw, stride=2), :]
            for tap in (1, w, w + 1):
                blk = jnp.maximum(blk, y1_scr[pl.ds(base + tap, pw, stride=2), :])
            dst = (b * hp2 + hh + 1) * wp2 + 1
            xp2_scr[pl.ds(dst, pw), :] = blk

    # ---- Stage 2: conv2 as 9 tap matmuls over static-offset slices of xp2_scr.
    #      Output pixel (y, x) of batch b accumulates on padded-grid row
    #      (b*hp2 + y)*wp2 + x; tap (kh, kw) reads the slice shifted by
    #      kh*wp2 + kw.  Rows with y >= ph or x >= pw are garbage and are never
    #      read by the pool-2 anchor gather below (anchor offsets <= (ph-2)*wp2 +
    #      pw-2 + wp2+1 < hp2*wp2) — the selector invariant.
    #      TODO(synk): conv2 taps could be K-packed in pairs (K=128) for the MXU;
    #      negligible at this size, so left as 9 plain taps.
    parts = []
    for kh in range(3):
        for kw in range(3):
            lhs = xp2_scr[pl.ds(kh * wp2 + kw, rows2), :].astype(mm_dtype)
            parts.append(jnp.dot(lhs, w2_ref[kh * 3 + kw],
                                 preferred_element_type=f32))
    while len(parts) > 1:                          # pairwise accumulation tree
        parts = [parts[i] + parts[i + 1] if i + 1 < len(parts) else parts[i]
                 for i in range(0, len(parts), 2)]
    y2_scr[...] = jnp.maximum(parts[0] + t2_ref[...], 0.0)

    # ---- MaxPool 2x2/2 + torch-order flatten: per pooled pixel hw, gather the
    #      (B, C2) anchor block (row stride hp2*wp2 between batches) and
    #      lane-concat into flat[b, hw*C2 + c]; fc1_w was pre-permuted to match.
    blocks = []
    for hh in range(qh):
        for ww in range(qw):
            off = (2 * hh) * wp2 + 2 * ww
            blk = y2_scr[pl.ds(off, batch, stride=hp2 * wp2), :]
            for tap in (1, wp2, wp2 + 1):
                blk = jnp.maximum(
                    blk, y2_scr[pl.ds(off + tap, batch, stride=hp2 * wp2), :])
            blocks.append(blk)
    flat = jnp.concatenate(blocks, axis=-1).astype(mm_dtype)   # (B, qh*qw*C2)

    # ---- fc1 + ReLU, fc2 + ReLU, (Dropout = identity in eval), fc3 + softmax
    h1 = jnp.dot(flat, f1w_ref[...], preferred_element_type=f32) + f1b_ref[...]
    h1 = jnp.maximum(h1, 0.0).astype(mm_dtype)
    h2 = jnp.dot(h1, f2w_ref[...], preferred_element_type=f32) + f2b_ref[...]
    h2 = jnp.maximum(h2, 0.0).astype(mm_dtype)
    # TODO(synk): nn.Dropout(p=0.5) is identity in eval mode; training-mode
    # stochastic masking is not implemented.
    logits = jnp.dot(h2, f3w_ref[...], preferred_element_type=f32) + f3b_ref[...]
    z = logits - jnp.max(logits, axis=-1, keepdims=True)
    e = jnp.exp(z)
    o_ref[...] = e * pl.reciprocal(jnp.sum(e, axis=-1, keepdims=True),
                                   approx=approx_recip)


# ---------------------------------------------------------------------------
# Wrapper: channel-only im2col + one pallas_call
# ---------------------------------------------------------------------------

def cnn_agent_forward(x_nchw, kp, approx_recip=True):
    """x_nchw: (B, C, H, W) float input; kp: output of prepare_params()."""
    B, C, H, W = x_nchw.shape
    assert H % 4 == 0 and W % 4 == 0, "kernel assumes even pooled dims"
    # TODO(synk): PyTorch MaxPool2d floors odd spatial dims; odd sizes unsupported.

    mm_dtype = kp["conv1_w"].dtype
    c1 = kp["conv1_w"].shape[-1]
    c2 = kp["conv2_w"].shape[-1]
    action_size = kp["fc3_w"].shape[-1]

    # Channel-only im2col for conv1 (K = 9*C): one XLA gather fusion replacing
    # the nine K=4 tap matmuls inside the kernel.
    x = jnp.transpose(x_nchw, (0, 2, 3, 1)).astype(jnp.float32)        # NHWC
    xpad = jnp.pad(x, ((0, 0), (1, 1), (1, 1), (0, 0)))
    x9 = jnp.concatenate(
        [xpad[:, kh:kh + H, kw:kw + W, :] for kh in range(3) for kw in range(3)],
        axis=-1).reshape(B * H * W, 9 * C).astype(mm_dtype)

    hp2, wp2 = H // 2 + 2, W // 2 + 2
    rows2 = B * hp2 * wp2
    xp2_rows = _round_up(rows2 + 2 * wp2 + 2, 8)   # + conv2 tap reach (kept zero)

    kernel = functools.partial(_cnn_forward_kernel, batch=B, h=H, w=W,
                               approx_recip=approx_recip)
    return pl.pallas_call(
        kernel,
        out_shape=jax.ShapeDtypeStruct((B, action_size), jnp.float32),
        scratch_shapes=[
            pltpu.VMEM((B * H * W, c1), jnp.float32),   # conv1 out (pool-1 source)
            pltpu.VMEM((xp2_rows, c1), jnp.float32),    # zero-padded conv2 input
            pltpu.VMEM((rows2, c2), jnp.float32),       # conv2 out (pool-2 source)
        ],
        # TODO(synk): on v7x (2 TensorCores) a leading "parallel" grid axis over
        # batch would use both cores; omitted at B=2 to keep the whole forward a
        # single fused invocation.
        compiler_params=pltpu.CompilerParams(vmem_limit_bytes=32 * 1024 * 1024),
    )(x9,
      kp["conv1_w"], kp["bn1_shift"],
      kp["conv2_w"], kp["bn2_shift"],
      kp["fc1_w"], kp["fc1_b"], kp["fc2_w"], kp["fc2_b"],
      kp["fc3_w"], kp["fc3_b"])


# ---------------------------------------------------------------------------
# Parameters (PyTorch layout) + one-time kernel-layout preparation
# ---------------------------------------------------------------------------

def init_params(key, obs_dims, action_size):
    """PyTorch-layout parameters (Conv2d OIHW, Linear (out, in)) + BN running stats."""
    W0, H0, C0 = obs_dims  # module convention: obs_dims = (W, H, C)
    ks = jax.random.split(key, 18)

    def u(k, shape, fan_in):
        b = float(fan_in) ** -0.5
        return jax.random.uniform(k, shape, jnp.float32, -b, b)

    p = {}
    p["conv1_w"] = u(ks[0], (64, C0, 3, 3), C0 * 9)
    p["conv1_b"] = u(ks[1], (64,), C0 * 9)
    p["bn1_gamma"] = 1.0 + 0.1 * jax.random.normal(ks[2], (64,), jnp.float32)
    p["bn1_beta"] = 0.1 * jax.random.normal(ks[3], (64,), jnp.float32)
    p["bn1_mean"] = 0.1 * jax.random.normal(ks[4], (64,), jnp.float32)
    p["bn1_var"] = jax.random.uniform(ks[5], (64,), jnp.float32, 0.5, 1.5)

    p["conv2_w"] = u(ks[6], (32, 64, 3, 3), 64 * 9)
    p["conv2_b"] = u(ks[7], (32,), 64 * 9)
    p["bn2_gamma"] = 1.0 + 0.1 * jax.random.normal(ks[8], (32,), jnp.float32)
    p["bn2_beta"] = 0.1 * jax.random.normal(ks[9], (32,), jnp.float32)
    p["bn2_mean"] = 0.1 * jax.random.normal(ks[10], (32,), jnp.float32)
    p["bn2_var"] = jax.random.uniform(ks[11], (32,), jnp.float32, 0.5, 1.5)

    wf = ((W0 - 2) // 2 + 1 - 2) // 2 + 1
    hf = ((H0 - 2) // 2 + 1 - 2) // 2 + 1
    flat = wf * hf * 32

    p["fc1_w"] = u(ks[12], (128, flat), flat)
    p["fc1_b"] = u(ks[13], (128,), flat)
    p["fc2_w"] = u(ks[14], (128, 128), 128)
    p["fc2_b"] = u(ks[15], (128,), 128)
    p["fc3_w"] = u(ks[16], (action_size, 128), 128)
    p["fc3_b"] = u(ks[17], (128,), 128) if False else u(ks[17], (action_size,), 128)
    return p


def prepare_params(p, obs_dims, dtype=jnp.bfloat16):
    """One-time layout work: fold BN scale into the conv weights, stack conv1 taps
    along K (im2col order), pre-transpose fc weights, and permute fc1 into the
    kernel's (hw, c) flatten order.  `dtype` sets the MXU operand precision."""
    W0, H0, C0 = obs_dims
    f32 = jnp.float32

    def bn_fold(bias, gamma, beta, mean, var):
        scale = gamma / jnp.sqrt(var + BN_EPS)
        shift = (bias - mean) * scale + beta
        return scale, shift

    s1, t1 = bn_fold(p["conv1_b"], p["bn1_gamma"], p["bn1_beta"],
                     p["bn1_mean"], p["bn1_var"])
    s2, t2 = bn_fold(p["conv2_b"], p["bn2_gamma"], p["bn2_beta"],
                     p["bn2_mean"], p["bn2_var"])

    # conv1: OIHW -> (kh, kw, cin, cout) * scale -> (9*Cin, Cout)
    c1 = p["conv1_w"].shape[0]
    w1 = (jnp.transpose(p["conv1_w"], (2, 3, 1, 0)) * s1).reshape(9 * C0, c1)
    # conv2: OIHW -> (kh, kw, cin, cout) * scale -> (9, Cin, Cout), tap = kh*3+kw
    c2, cin2 = p["conv2_w"].shape[0], p["conv2_w"].shape[1]
    w2 = (jnp.transpose(p["conv2_w"], (2, 3, 1, 0)) * s2).reshape(9, cin2, c2)

    # fc1: torch (out, c*n_hw + hw)  ->  (hw*C2 + c, out)  to match kernel flatten
    qh, qw = H0 // 4, W0 // 4
    n_hw = qh * qw
    n_hidden = p["fc1_w"].shape[0]
    assert p["fc1_w"].shape[1] == c2 * n_hw
    f1 = jnp.transpose(p["fc1_w"].reshape(n_hidden, c2, n_hw),
                       (2, 1, 0)).reshape(n_hw * c2, n_hidden)

    return {
        "conv1_w": w1.astype(dtype),
        "bn1_shift": t1.reshape(1, -1).astype(f32),
        "conv2_w": w2.astype(dtype),
        "bn2_shift": t2.reshape(1, -1).astype(f32),
        "fc1_w": f1.astype(dtype), "fc1_b": p["fc1_b"].reshape(1, -1).astype(f32),
        "fc2_w": p["fc2_w"].T.astype(dtype),
        "fc2_b": p["fc2_b"].reshape(1, -1).astype(f32),
        "fc3_w": p["fc3_w"].T.astype(dtype),
        "fc3_b": p["fc3_b"].reshape(1, -1).astype(f32),
    }


# ---------------------------------------------------------------------------
# Pure-XLA reference (eval-mode torch semantics) for correctness checking
# ---------------------------------------------------------------------------

def reference_forward(x_nchw, p):
    prec = jax.lax.Precision.HIGHEST          # keep the f32 check tight
    x = x_nchw.astype(jnp.float32)

    def stage(x, w, b, gamma, beta, mean, var):
        y = jax.lax.conv_general_dilated(
            x, w, window_strides=(1, 1), padding=((1, 1), (1, 1)),
            dimension_numbers=("NCHW", "OIHW", "NCHW"), precision=prec)
        y = y + b[None, :, None, None]
        y = (y - mean[None, :, None, None]) * (
            gamma[None, :, None, None] / jnp.sqrt(var + BN_EPS)[None, :, None, None]
        ) + beta[None, :, None, None]
        y = jnp.maximum(y, 0.0)
        return jax.lax.reduce_window(y, -jnp.inf, jax.lax.max,
                                     (1, 1, 2, 2), (1, 1, 2, 2), "VALID")

    x = stage(x, p["conv1_w"], p["conv1_b"], p["bn1_gamma"], p["bn1_beta"],
              p["bn1_mean"], p["bn1_var"])
    x = stage(x, p["conv2_w"], p["conv2_b"], p["bn2_gamma"], p["bn2_beta"],
              p["bn2_mean"], p["bn2_var"])
    flat = x.reshape(x.shape[0], -1)
    h = jnp.maximum(jnp.dot(flat, p["fc1_w"].T, precision=prec) + p["fc1_b"], 0.0)
    h = jnp.maximum(jnp.dot(h, p["fc2_w"].T, precision=prec) + p["fc2_b"], 0.0)
    logits = jnp.dot(h, p["fc3_w"].T, precision=prec) + p["fc3_b"]
    return jax.nn.softmax(logits, axis=1)


if __name__ == "__main__":
    key = jax.random.PRNGKey(0)
    k_x, k_p = jax.random.split(key)

    obs_dims = (16, 16, 4)      # (W, H, C) as in the PyTorch module
    action_size = 6
    batch = 2

    # PyTorch conv input convention: NCHW
    x = jax.random.normal(k_x, (batch, obs_dims[2], obs_dims[1], obs_dims[0]),
                          jnp.float32)
    params = init_params(k_p, obs_dims, action_size)
    ref = reference_forward(x, params)

    # Strict layout/selector check: f32 MXU operands + exact softmax reciprocal.
    kp_f32 = prepare_params(params, obs_dims, dtype=jnp.float32)
    fwd_f32 = jax.jit(functools.partial(cnn_agent_forward, approx_recip=False))
    out_f32 = jax.block_until_ready(fwd_f32(x, kp_f32))
    assert out_f32.shape == (batch, action_size)
    assert bool(jnp.allclose(out_f32, ref, atol=2e-5)), (out_f32, ref)

    # Fast path: bf16 MXU operands + EUP approx reciprocal (loose sanity bound;
    # exactness is established by the f32 check above).
    kp_bf16 = prepare_params(params, obs_dims, dtype=jnp.bfloat16)
    fwd = jax.jit(cnn_agent_forward)
    out = jax.block_until_ready(fwd(x, kp_bf16))
    assert out.shape == (batch, action_size)
    assert bool(jnp.all(jnp.isfinite(out)))
    assert bool(jnp.allclose(jnp.sum(out, axis=1), 1.0, atol=5e-3))
    assert bool(jnp.allclose(out, ref, atol=3e-2)), (out, ref)
    print("KERNEL_OK")
</pallas_src>

<mosaic_0001>
module attributes {stable_mosaic.version = 11 : i64} {
  func.func @_cnn_forward_kernel(%arg0: memref<512x36xf32, #tpu.memory_space<vmem>>, %arg1: memref<36x64xf32, #tpu.memory_space<vmem>>, %arg2: memref<1x64xf32, #tpu.memory_space<vmem>>, %arg3: memref<9x64x32xf32, #tpu.memory_space<vmem>>, %arg4: memref<1x32xf32, #tpu.memory_space<vmem>>, %arg5: memref<512x128xf32, #tpu.memory_space<vmem>>, %arg6: memref<1x128xf32, #tpu.memory_space<vmem>>, %arg7: memref<128x128xf32, #tpu.memory_space<vmem>>, %arg8: memref<1x128xf32, #tpu.memory_space<vmem>>, %arg9: memref<128x6xf32, #tpu.memory_space<vmem>>, %arg10: memref<1x6xf32, #tpu.memory_space<vmem>>, %arg11: memref<2x6xf32, #tpu.memory_space<vmem>>, %arg12: memref<512x64xf32, #tpu.memory_space<vmem>>, %arg13: memref<224x64xf32, #tpu.memory_space<vmem>>, %arg14: memref<200x32xf32, #tpu.memory_space<vmem>>) attributes {dimension_semantics = [], scalar_prefetch = 0 : i64, scratch_operands = 3 : i64, tpu.core_type = #tpu.core_type<tc>} {
    %c0 = arith.constant 0 : index
    %c0_0 = arith.constant 0 : index
    %0 = vector.load %arg0[%c0, %c0_0] : memref<512x36xf32, #tpu.memory_space<vmem>>, vector<512x36xf32>
    %c0_1 = arith.constant 0 : index
    %c0_2 = arith.constant 0 : index
    %1 = vector.load %arg1[%c0_1, %c0_2] : memref<36x64xf32, #tpu.memory_space<vmem>>, vector<36x64xf32>
    %cst = arith.constant dense<0.000000e+00> : vector<512x64xf32>
    %2 = tpu.matmul %0, %1, %cst {dimension_numbers = #tpu.dot_dimension_numbers<[1], [0], [0], [1], [0, 0, 1, 1], [], []>} : vector<512x36xf32>, vector<36x64xf32>, vector<512x64xf32> -> vector<512x64xf32>
    %c0_3 = arith.constant 0 : index
    %c0_4 = arith.constant 0 : index
    %3 = vector.load %arg2[%c0_3, %c0_4] : memref<1x64xf32, #tpu.memory_space<vmem>>, vector<1x64xf32>
    %4 = vector.broadcast %3 : vector<1x64xf32> to vector<512x64xf32>
    %5 = arith.addf %2, %4 : vector<512x64xf32>
    %cst_5 = arith.constant 0.000000e+00 : f32
    %6 = vector.broadcast %cst_5 : f32 to vector<512x64xf32>
    %7 = arith.maximumf %5, %6 : vector<512x64xf32>
    %c0_6 = arith.constant 0 : index
    %c0_7 = arith.constant 0 : index
    %8 = vector.load %arg12[%c0_6, %c0_7] : memref<512x64xf32, #tpu.memory_space<vmem>>, vector<512x64xf32>
    tpu.vector_store %arg12[%c0_6, %c0_7], %7 {strides = array<i32>} : memref<512x64xf32, #tpu.memory_space<vmem>>, vector<512x64xf32>,
    %cst_8 = arith.constant 0.000000e+00 : f32
    %9 = vector.broadcast %cst_8 : f32 to vector<224x64xf32>
    %c0_9 = arith.constant 0 : index
    %c0_10 = arith.constant 0 : index
    %10 = vector.load %arg13[%c0_9, %c0_10] : memref<224x64xf32, #tpu.memory_space<vmem>>, vector<224x64xf32>
    tpu.vector_store %arg13[%c0_9, %c0_10], %9 {strides = array<i32>} : memref<224x64xf32, #tpu.memory_space<vmem>>, vector<224x64xf32>,
    %c0_11 = arith.constant 0 : index
    %c0_12 = arith.constant 0 : index
    %11 = tpu.strided_load %arg12[%c0_11, %c0_12] {strides = array<i32: 2, 1>} : memref<512x64xf32, #tpu.memory_space<vmem>>, vector<8x64xf32>
    %c1 = arith.constant 1 : index
    %c0_13 = arith.constant 0 : index
    %12 = tpu.strided_load %arg12[%c1, %c0_13] {strides = array<i32: 2, 1>} : memref<512x64xf32, #tpu.memory_space<vmem>>, vector<8x64xf32>
    %13 = arith.maximumf %11, %12 : vector<8x64xf32>
    %c16 = arith.constant 16 : index
    %c0_14 = arith.constant 0 : index
    %14 = tpu.strided_load %arg12[%c16, %c0_14] {strides = array<i32: 2, 1>} : memref<512x64xf32, #tpu.memory_space<vmem>>, vector<8x64xf32>
    %15 = arith.maximumf %13, %14 : vector<8x64xf32>
    %c17 = arith.constant 17 : index
    %c0_15 = arith.constant 0 : index
    %16 = tpu.strided_load %arg12[%c17, %c0_15] {strides = array<i32: 2, 1>} : memref<512x64xf32, #tpu.memory_space<vmem>>, vector<8x64xf32>
    %17 = arith.maximumf %15, %16 : vector<8x64xf32>
    %c11 = arith.constant 11 : index
    %c0_16 = arith.constant 0 : index
    %18 = vector.load %arg13[%c11, %c0_16] : memref<224x64xf32, #tpu.memory_space<vmem>>, vector<8x64xf32>
    tpu.vector_store %arg13[%c11, %c0_16], %17 {strides = array<i32>} : memref<224x64xf32, #tpu.memory_space<vmem>>, vector<8x64xf32>,
    %c32 = arith.constant 32 : index
    %c0_17 = arith.constant 0 : index
    %19 = tpu.strided_load %arg12[%c32, %c0_17] {strides = array<i32: 2, 1>} : memref<512x64xf32, #tpu.memory_space<vmem>>, vector<8x64xf32>
    %c33 = arith.constant 33 : index
    %c0_18 = arith.constant 0 : index
    %20 = tpu.strided_load %arg12[%c33, %c0_18] {strides = array<i32: 2, 1>} : memref<512x64xf32, #tpu.memory_space<vmem>>, vector<8x64xf32>
    %21 = arith.maximumf %19, %20 : vector<8x64xf32>
    %c48 = arith.constant 48 : index
    %c0_19 = arith.constant 0 : index
    %22 = tpu.strided_load %arg12[%c48, %c0_19] {strides = array<i32: 2, 1>} : memref<512x64xf32, #tpu.memory_space<vmem>>, vector<8x64xf32>
    %23 = arith.maximumf %21, %22 : vector<8x64xf32>
    %c49 = arith.constant 49 : index
    %c0_20 = arith.constant 0 : index
    %24 = tpu.strided_load %arg12[%c49, %c0_20] {strides = array<i32: 2, 1>} : memref<512x64xf32, #tpu.memory_space<vmem>>, vector<8x64xf32>
    %25 = arith.maximumf %23, %24 : vector<8x64xf32>
    %c21 = arith.constant 21 : index
    %c0_21 = arith.constant 0 : index
    %26 = vector.load %arg13[%c21, %c0_21] : memref<224x64xf32, #tpu.memory_space<vmem>>, vector<8x64xf32>
    tpu.vector_store %arg13[%c21, %c0_21], %25 {strides = array<i32>} : memref<224x64xf32, #tpu.memory_space<vmem>>, vector<8x64xf32>,
    %c64 = arith.constant 64 : index
    %c0_22 = arith.constant 0 : index
    %27 = tpu.strided_load %arg12[%c64, %c0_22] {strides = array<i32: 2, 1>} : memref<512x64xf32, #tpu.memory_space<vmem>>, vector<8x64xf32>
    %c65 = arith.constant 65 : index
    %c0_23 = arith.constant 0 : index
    %28 = tpu.strided_load %arg12[%c65, %c0_23] {strides = array<i32: 2, 1>} : memref<512x64xf32, #tpu.memory_space<vmem>>, vector<8x64xf32>
    %29 = arith.maximumf %27, %28 : vector<8x64xf32>
    %c80 = arith.constant 80 : index
    %c0_24 = arith.constant 0 : index
    %30 = tpu.strided_load %arg12[%c80, %c0_24] {strides = array<i32: 2, 1>} : memref<512x64xf32, #tpu.memory_space<vmem>>, vector<8x64xf32>
    %31 = arith.maximumf %29, %30 : vector<8x64xf32>
    %c81 = arith.constant 81 : index
    %c0_25 = arith.constant 0 : index
    %32 = tpu.strided_load %arg12[%c81, %c0_25] {strides = array<i32: 2, 1>} : memref<512x64xf32, #tpu.memory_space<vmem>>, vector<8x64xf32>
    %33 = arith.maximumf %31, %32 : vector<8x64xf32>
    %c31 = arith.constant 31 : index
    %c0_26 = arith.constant 0 : index
    %34 = vector.load %arg13[%c31, %c0_26] : memref<224x64xf32, #tpu.memory_space<vmem>>, vector<8x64xf32>
    tpu.vector_store %arg13[%c31, %c0_26], %33 {strides = array<i32>} : memref<224x64xf32, #tpu.memory_space<vmem>>, vector<8x64xf32>,
    %c96 = arith.constant 96 : index
    %c0_27 = arith.constant 0 : index
    %35 = tpu.strided_load %arg12[%c96, %c0_27] {strides = array<i32: 2, 1>} : memref<512x64xf32, #tpu.memory_space<vmem>>, vector<8x64xf32>
    %c97 = arith.constant 97 : index
    %c0_28 = arith.constant 0 : index
    %36 = tpu.strided_load %arg12[%c97, %c0_28] {strides = array<i32: 2, 1>} : memref<512x64xf32, #tpu.memory_space<vmem>>, vector<8x64xf32>
    %37 = arith.maximumf %35, %36 : vector<8x64xf32>
    %c112 = arith.constant 112 : index
    %c0_29 = arith.constant 0 : index
    %38 = tpu.strided_load %arg12[%c112, %c0_29] {strides = array<i32: 2, 1>} : memref<512x64xf32, #tpu.memory_space<vmem>>, vector<8x64xf32>
    %39 = arith.maximumf %37, %38 : vector<8x64xf32>
    %c113 = arith.constant 113 : index
    %c0_30 = arith.constant 0 : index
    %40 = tpu.strided_load %arg12[%c113, %c0_30] {strides = array<i32: 2, 1>} : memref<512x64xf32, #tpu.memory_space<vmem>>, vector<8x64xf32>
    %41 = arith.maximumf %39, %40 : vector<8x64xf32>
    %c41 = arith.constant 41 : index
    %c0_31 = arith.constant 0 : index
    %42 = vector.load %arg13[%c41, %c0_31] : memref<224x64xf32, #tpu.memory_space<vmem>>, vector<8x64xf32>
    tpu.vector_store %arg13[%c41, %c0_31], %41 {strides = array<i32>} : memref<224x64xf32, #tpu.memory_space<vmem>>, vector<8x64xf32>,
    %c128 = arith.constant 128 : index
    %c0_32 = arith.constant 0 : index
    %43 = tpu.strided_load %arg12[%c128, %c0_32] {strides = array<i32: 2, 1>} : memref<512x64xf32, #tpu.memory_space<vmem>>, vector<8x64xf32>
    %c129 = arith.constant 129 : index
    %c0_33 = arith.constant 0 : index
    %44 = tpu.strided_load %arg12[%c129, %c0_33] {strides = array<i32: 2, 1>} : memref<512x64xf32, #tpu.memory_space<vmem>>, vector<8x64xf32>
    %45 = arith.maximumf %43, %44 : vector<8x64xf32>
    %c144 = arith.constant 144 : index
    %c0_34 = arith.constant 0 : index
    %46 = tpu.strided_load %arg12[%c144, %c0_34] {strides = array<i32: 2, 1>} : memref<512x64xf32, #tpu.memory_space<vmem>>, vector<8x64xf32>
    %47 = arith.maximumf %45, %46 : vector<8x64xf32>
    %c145 = arith.constant 145 : index
    %c0_35 = arith.constant 0 : index
    %48 = tpu.strided_load %arg12[%c145, %c0_35] {strides = array<i32: 2, 1>} : memref<512x64xf32, #tpu.memory_space<vmem>>, vector<8x64xf32>
    %49 = arith.maximumf %47, %48 : vector<8x64xf32>
    %c51 = arith.constant 51 : index
    %c0_36 = arith.constant 0 : index
    %50 = vector.load %arg13[%c51, %c0_36] : memref<224x64xf32, #tpu.memory_space<vmem>>, vector<8x64xf32>
    tpu.vector_store %arg13[%c51, %c0_36], %49 {strides = array<i32>} : memref<224x64xf32, #tpu.memory_space<vmem>>, vector<8x64xf32>,
    %c160 = arith.constant 160 : index
    %c0_37 = arith.constant 0 : index
    %51 = tpu.strided_load %arg12[%c160, %c0_37] {strides = array<i32: 2, 1>} : memref<512x64xf32, #tpu.memory_space<vmem>>, vector<8x64xf32>
    %c161 = arith.constant 161 : index
    %c0_38 = arith.constant 0 : index
    %52 = tpu.strided_load %arg12[%c161, %c0_38] {strides = array<i32: 2, 1>} : memref<512x64xf32, #tpu.memory_space<vmem>>, vector<8x64xf32>
    %53 = arith.maximumf %51, %52 : vector<8x64xf32>
    %c176 = arith.constant 176 : index
    %c0_39 = arith.constant 0 : index
    %54 = tpu.strided_load %arg12[%c176, %c0_39] {strides = array<i32: 2, 1>} : memref<512x64xf32, #tpu.memory_space<vmem>>, vector<8x64xf32>
    %55 = arith.maximumf %53, %54 : vector<8x64xf32>
    %c177 = arith.constant 177 : index
    %c0_40 = arith.constant 0 : index
    %56 = tpu.strided_load %arg12[%c177, %c0_40] {strides = array<i32: 2, 1>} : memref<512x64xf32, #tpu.memory_space<vmem>>, vector<8x64xf32>
    %57 = arith.maximumf %55, %56 : vector<8x64xf32>
    %c61 = arith.constant 61 : index
    %c0_41 = arith.constant 0 : index
    %58 = vector.load %arg13[%c61, %c0_41] : memref<224x64xf32, #tpu.memory_space<vmem>>, vector<8x64xf32>
    tpu.vector_store %arg13[%c61, %c0_41], %57 {strides = array<i32>} : memref<224x64xf32, #tpu.memory_space<vmem>>, vector<8x64xf32>,
    %c192 = arith.constant 192 : index
    %c0_42 = arith.constant 0 : index
    %59 = tpu.strided_load %arg12[%c192, %c0_42] {strides = array<i32: 2, 1>} : memref<512x64xf32, #tpu.memory_space<vmem>>, vector<8x64xf32>
    %c193 = arith.constant 193 : index
    %c0_43 = arith.constant 0 : index
    %60 = tpu.strided_load %arg12[%c193, %c0_43] {strides = array<i32: 2, 1>} : memref<512x64xf32, #tpu.memory_space<vmem>>, vector<8x64xf32>
    %61 = arith.maximumf %59, %60 : vector<8x64xf32>
    %c208 = arith.constant 208 : index
    %c0_44 = arith.constant 0 : index
    %62 = tpu.strided_load %arg12[%c208, %c0_44] {strides = array<i32: 2, 1>} : memref<512x64xf32, #tpu.memory_space<vmem>>, vector<8x64xf32>
    %63 = arith.maximumf %61, %62 : vector<8x64xf32>
    %c209 = arith.constant 209 : index
    %c0_45 = arith.constant 0 : index
    %64 = tpu.strided_load %arg12[%c209, %c0_45] {strides = array<i32: 2, 1>} : memref<512x64xf32, #tpu.memory_space<vmem>>, vector<8x64xf32>
    %65 = arith.maximumf %63, %64 : vector<8x64xf32>
    %c71 = arith.constant 71 : index
    %c0_46 = arith.constant 0 : index
    %66 = vector.load %arg13[%c71, %c0_46] : memref<224x64xf32, #tpu.memory_space<vmem>>, vector<8x64xf32>
    tpu.vector_store %arg13[%c71, %c0_46], %65 {strides = array<i32>} : memref<224x64xf32, #tpu.memory_space<vmem>>, vector<8x64xf32>,
    %c224 = arith.constant 224 : index
    %c0_47 = arith.constant 0 : index
    %67 = tpu.strided_load %arg12[%c224, %c0_47] {strides = array<i32: 2, 1>} : memref<512x64xf32, #tpu.memory_space<vmem>>, vector<8x64xf32>
    %c225 = arith.constant 225 : index
    %c0_48 = arith.constant 0 : index
    %68 = tpu.strided_load %arg12[%c225, %c0_48] {strides = array<i32: 2, 1>} : memref<512x64xf32, #tpu.memory_space<vmem>>, vector<8x64xf32>
    %69 = arith.maximumf %67, %68 : vector<8x64xf32>
    %c240 = arith.constant 240 : index
    %c0_49 = arith.constant 0 : index
    %70 = tpu.strided_load %arg12[%c240, %c0_49] {strides = array<i32: 2, 1>} : memref<512x64xf32, #tpu.memory_space<vmem>>, vector<8x64xf32>
    %71 = arith.maximumf %69, %70 : vector<8x64xf32>
    %c241 = arith.constant 241 : index
    %c0_50 = arith.constant 0 : index
    %72 = tpu.strided_load %arg12[%c241, %c0_50] {strides = array<i32: 2, 1>} : memref<512x64xf32, #tpu.memory_space<vmem>>, vector<8x64xf32>
    %73 = arith.maximumf %71, %72 : vector<8x64xf32>
    %c81_51 = arith.constant 81 : index
    %c0_52 = arith.constant 0 : index
    %74 = vector.load %arg13[%c81_51, %c0_52] : memref<224x64xf32, #tpu.memory_space<vmem>>, vector<8x64xf32>
    tpu.vector_store %arg13[%c81_51, %c0_52], %73 {strides = array<i32>} : memref<224x64xf32, #tpu.memory_space<vmem>>, vector<8x64xf32>,
    %c256 = arith.constant 256 : index
    %c0_53 = arith.constant 0 : index
    %75 = tpu.strided_load %arg12[%c256, %c0_53] {strides = array<i32: 2, 1>} : memref<512x64xf32, #tpu.memory_space<vmem>>, vector<8x64xf32>
    %c257 = arith.constant 257 : index
    %c0_54 = arith.constant 0 : index
    %76 = tpu.strided_load %arg12[%c257, %c0_54] {strides = array<i32: 2, 1>} : memref<512x64xf32, #tpu.memory_space<vmem>>, vector<8x64xf32>
    %77 = arith.maximumf %75, %76 : vector<8x64xf32>
    %c272 = arith.constant 272 : index
    %c0_55 = arith.constant 0 : index
    %78 = tpu.strided_load %arg12[%c272, %c0_55] {strides = array<i32: 2, 1>} : memref<512x64xf32, #tpu.memory_space<vmem>>, vector<8x64xf32>
    %79 = arith.maximumf %77, %78 : vector<8x64xf32>
    %c273 = arith.constant 273 : index
    %c0_56 = arith.constant 0 : index
    %80 = tpu.strided_load %arg12[%c273, %c0_56] {strides = array<i32: 2, 1>} : memref<512x64xf32, #tpu.memory_space<vmem>>, vector<8x64xf32>
    %81 = arith.maximumf %79, %80 : vector<8x64xf32>
    %c111 = arith.constant 111 : index
    %c0_57 = arith.constant 0 : index
    %82 = vector.load %arg13[%c111, %c0_57] : memref<224x64xf32, #tpu.memory_space<vmem>>, vector<8x64xf32>
    tpu.vector_store %arg13[%c111, %c0_57], %81 {strides = array<i32>} : memref<224x64xf32, #tpu.memory_space<vmem>>, vector<8x64xf32>,
    %c288 = arith.constant 288 : index
    %c0_58 = arith.constant 0 : index
    %83 = tpu.strided_load %arg12[%c288, %c0_58] {strides = array<i32: 2, 1>} : memref<512x64xf32, #tpu.memory_space<vmem>>, vector<8x64xf32>
    %c289 = arith.constant 289 : index
    %c0_59 = arith.constant 0 : index
    %84 = tpu.strided_load %arg12[%c289, %c0_59] {strides = array<i32: 2, 1>} : memref<512x64xf32, #tpu.memory_space<vmem>>, vector<8x64xf32>
    %85 = arith.maximumf %83, %84 : vector<8x64xf32>
    %c304 = arith.constant 304 : index
    %c0_60 = arith.constant 0 : index
    %86 = tpu.strided_load %arg12[%c304, %c0_60] {strides = array<i32: 2, 1>} : memref<512x64xf32, #tpu.memory_space<vmem>>, vector<8x64xf32>
    %87 = arith.maximumf %85, %86 : vector<8x64xf32>
    %c305 = arith.constant 305 : index
    %c0_61 = arith.constant 0 : index
    %88 = tpu.strided_load %arg12[%c305, %c0_61] {strides = array<i32: 2, 1>} : memref<512x64xf32, #tpu.memory_space<vmem>>, vector<8x64xf32>
    %89 = arith.maximumf %87, %88 : vector<8x64xf32>
    %c121 = arith.constant 121 : index
    %c0_62 = arith.constant 0 : index
    %90 = vector.load %arg13[%c121, %c0_62] : memref<224x64xf32, #tpu.memory_space<vmem>>, vector<8x64xf32>
    tpu.vector_store %arg13[%c121, %c0_62], %89 {strides = array<i32>} : memref<224x64xf32, #tpu.memory_space<vmem>>, vector<8x64xf32>,
    %c320 = arith.constant 320 : index
    %c0_63 = arith.constant 0 : index
    %91 = tpu.strided_load %arg12[%c320, %c0_63] {strides = array<i32: 2, 1>} : memref<512x64xf32, #tpu.memory_space<vmem>>, vector<8x64xf32>
    %c321 = arith.constant 321 : index
    %c0_64 = arith.constant 0 : index
    %92 = tpu.strided_load %arg12[%c321, %c0_64] {strides = array<i32: 2, 1>} : memref<512x64xf32, #tpu.memory_space<vmem>>, vector<8x64xf32>
    %93 = arith.maximumf %91, %92 : vector<8x64xf32>
    %c336 = arith.constant 336 : index
    %c0_65 = arith.constant 0 : index
    %94 = tpu.strided_load %arg12[%c336, %c0_65] {strides = array<i32: 2, 1>} : memref<512x64xf32, #tpu.memory_space<vmem>>, vector<8x64xf32>
    %95 = arith.maximumf %93, %94 : vector<8x64xf32>
    %c337 = arith.constant 337 : index
    %c0_66 = arith.constant 0 : index
    %96 = tpu.strided_load %arg12[%c337, %c0_66] {strides = array<i32: 2, 1>} : memref<512x64xf32, #tpu.memory_space<vmem>>, vector<8x64xf32>
    %97 = arith.maximumf %95, %96 : vector<8x64xf32>
    %c131 = arith.constant 131 : index
    %c0_67 = arith.constant 0 : index
    %98 = vector.load %arg13[%c131, %c0_67] : memref<224x64xf32, #tpu.memory_space<vmem>>, vector<8x64xf32>
    tpu.vector_store %arg13[%c131, %c0_67], %97 {strides = array<i32>} : memref<224x64xf32, #tpu.memory_space<vmem>>, vector<8x64xf32>,
    %c352 = arith.constant 352 : index
    %c0_68 = arith.constant 0 : index
    %99 = tpu.strided_load %arg12[%c352, %c0_68] {strides = array<i32: 2, 1>} : memref<512x64xf32, #tpu.memory_space<vmem>>, vector<8x64xf32>
    %c353 = arith.constant 353 : index
    %c0_69 = arith.constant 0 : index
    %100 = tpu.strided_load %arg12[%c353, %c0_69] {strides = array<i32: 2, 1>} : memref<512x64xf32, #tpu.memory_space<vmem>>, vector<8x64xf32>
    %101 = arith.maximumf %99, %100 : vector<8x64xf32>
    %c368 = arith.constant 368 : index
    %c0_70 = arith.constant 0 : index
    %102 = tpu.strided_load %arg12[%c368, %c0_70] {strides = array<i32: 2, 1>} : memref<512x64xf32, #tpu.memory_space<vmem>>, vector<8x64xf32>
    %103 = arith.maximumf %101, %102 : vector<8x64xf32>
    %c369 = arith.constant 369 : index
    %c0_71 = arith.constant 0 : index
    %104 = tpu.strided_load %arg12[%c369, %c0_71] {strides = array<i32: 2, 1>} : memref<512x64xf32, #tpu.memory_space<vmem>>, vector<8x64xf32>
    %105 = arith.maximumf %103, %104 : vector<8x64xf32>
    %c141 = arith.constant 141 : index
    %c0_72 = arith.constant 0 : index
    %106 = vector.load %arg13[%c141, %c0_72] : memref<224x64xf32, #tpu.memory_space<vmem>>, vector<8x64xf32>
    tpu.vector_store %arg13[%c141, %c0_72], %105 {strides = array<i32>} : memref<224x64xf32, #tpu.memory_space<vmem>>, vector<8x64xf32>,
    %c384 = arith.constant 384 : index
    %c0_73 = arith.constant 0 : index
    %107 = tpu.strided_load %arg12[%c384, %c0_73] {strides = array<i32: 2, 1>} : memref<512x64xf32, #tpu.memory_space<vmem>>, vector<8x64xf32>
    %c385 = arith.constant 385 : index
    %c0_74 = arith.constant 0 : index
    %108 = tpu.strided_load %arg12[%c385, %c0_74] {strides = array<i32: 2, 1>} : memref<512x64xf32, #tpu.memory_space<vmem>>, vector<8x64xf32>
    %109 = arith.maximumf %107, %108 : vector<8x64xf32>
    %c400 = arith.constant 400 : index
    %c0_75 = arith.constant 0 : index
    %110 = tpu.strided_load %arg12[%c400, %c0_75] {strides = array<i32: 2, 1>} : memref<512x64xf32, #tpu.memory_space<vmem>>, vector<8x64xf32>
    %111 = arith.maximumf %109, %110 : vector<8x64xf32>
    %c401 = arith.constant 401 : index
    %c0_76 = arith.constant 0 : index
    %112 = tpu.strided_load %arg12[%c401, %c0_76] {strides = array<i32: 2, 1>} : memref<512x64xf32, #tpu.memory_space<vmem>>, vector<8x64xf32>
    %113 = arith.maximumf %111, %112 : vector<8x64xf32>
    %c151 = arith.constant 151 : index
    %c0_77 = arith.constant 0 : index
    %114 = vector.load %arg13[%c151, %c0_77] : memref<224x64xf32, #tpu.memory_space<vmem>>, vector<8x64xf32>
    tpu.vector_store %arg13[%c151, %c0_77], %113 {strides = array<i32>} : memref<224x64xf32, #tpu.memory_space<vmem>>, vector<8x64xf32>,
    %c416 = arith.constant 416 : index
    %c0_78 = arith.constant 0 : index
    %115 = tpu.strided_load %arg12[%c416, %c0_78] {strides = array<i32: 2, 1>} : memref<512x64xf32, #tpu.memory_space<vmem>>, vector<8x64xf32>
    %c417 = arith.constant 417 : index
    %c0_79 = arith.constant 0 : index
    %116 = tpu.strided_load %arg12[%c417, %c0_79] {strides = array<i32: 2, 1>} : memref<512x64xf32, #tpu.memory_space<vmem>>, vector<8x64xf32>
    %117 = arith.maximumf %115, %116 : vector<8x64xf32>
    %c432 = arith.constant 432 : index
    %c0_80 = arith.constant 0 : index
    %118 = tpu.strided_load %arg12[%c432, %c0_80] {strides = array<i32: 2, 1>} : memref<512x64xf32, #tpu.memory_space<vmem>>, vector<8x64xf32>
    %119 = arith.maximumf %117, %118 : vector<8x64xf32>
    %c433 = arith.constant 433 : index
    %c0_81 = arith.constant 0 : index
    %120 = tpu.strided_load %arg12[%c433, %c0_81] {strides = array<i32: 2, 1>} : memref<512x64xf32, #tpu.memory_space<vmem>>, vector<8x64xf32>
    %121 = arith.maximumf %119, %120 : vector<8x64xf32>
    %c161_82 = arith.constant 161 : index
    %c0_83 = arith.constant 0 : index
    %122 = vector.load %arg13[%c161_82, %c0_83] : memref<224x64xf32, #tpu.memory_space<vmem>>, vector<8x64xf32>
    tpu.vector_store %arg13[%c161_82, %c0_83], %121 {strides = array<i32>} : memref<224x64xf32, #tpu.memory_space<vmem>>, vector<8x64xf32>,
    %c448 = arith.constant 448 : index
    %c0_84 = arith.constant 0 : index
    %123 = tpu.strided_load %arg12[%c448, %c0_84] {strides = array<i32: 2, 1>} : memref<512x64xf32, #tpu.memory_space<vmem>>, vector<8x64xf32>
    %c449 = arith.constant 449 : index
    %c0_85 = arith.constant 0 : index
    %124 = tpu.strided_load %arg12[%c449, %c0_85] {strides = array<i32: 2, 1>} : memref<512x64xf32, #tpu.memory_space<vmem>>, vector<8x64xf32>
    %125 = arith.maximumf %123, %124 : vector<8x64xf32>
    %c464 = arith.constant 464 : index
    %c0_86 = arith.constant 0 : index
    %126 = tpu.strided_load %arg12[%c464, %c0_86] {strides = array<i32: 2, 1>} : memref<512x64xf32, #tpu.memory_space<vmem>>, vector<8x64xf32>
    %127 = arith.maximumf %125, %126 : vector<8x64xf32>
    %c465 = arith.constant 465 : index
    %c0_87 = arith.constant 0 : index
    %128 = tpu.strided_load %arg12[%c465, %c0_87] {strides = array<i32: 2, 1>} : memref<512x64xf32, #tpu.memory_space<vmem>>, vector<8x64xf32>
    %129 = arith.maximumf %127, %128 : vector<8x64xf32>
    %c171 = arith.constant 171 : index
    %c0_88 = arith.constant 0 : index
    %130 = vector.load %arg13[%c171, %c0_88] : memref<224x64xf32, #tpu.memory_space<vmem>>, vector<8x64xf32>
    tpu.vector_store %arg13[%c171, %c0_88], %129 {strides = array<i32>} : memref<224x64xf32, #tpu.memory_space<vmem>>, vector<8x64xf32>,
    %c480 = arith.constant 480 : index
    %c0_89 = arith.constant 0 : index
    %131 = tpu.strided_load %arg12[%c480, %c0_89] {strides = array<i32: 2, 1>} : memref<512x64xf32, #tpu.memory_space<vmem>>, vector<8x64xf32>
    %c481 = arith.constant 481 : index
    %c0_90 = arith.constant 0 : index
    %132 = tpu.strided_load %arg12[%c481, %c0_90] {strides = array<i32: 2, 1>} : memref<512x64xf32, #tpu.memory_space<vmem>>, vector<8x64xf32>
    %133 = arith.maximumf %131, %132 : vector<8x64xf32>
    %c496 = arith.constant 496 : index
    %c0_91 = arith.constant 0 : index
    %134 = tpu.strided_load %arg12[%c496, %c0_91] {strides = array<i32: 2, 1>} : memref<512x64xf32, #tpu.memory_space<vmem>>, vector<8x64xf32>
    %135 = arith.maximumf %133, %134 : vector<8x64xf32>
    %c497 = arith.constant 497 : index
    %c0_92 = arith.constant 0 : index
    %136 = tpu.strided_load %arg12[%c497, %c0_92] {strides = array<i32: 2, 1>} : memref<512x64xf32, #tpu.memory_space<vmem>>, vector<8x64xf32>
    %137 = arith.maximumf %135, %136 : vector<8x64xf32>
    %c181 = arith.constant 181 : index
    %c0_93 = arith.constant 0 : index
    %138 = vector.load %arg13[%c181, %c0_93] : memref<224x64xf32, #tpu.memory_space<vmem>>, vector<8x64xf32>
    tpu.vector_store %arg13[%c181, %c0_93], %137 {strides = array<i32>} : memref<224x64xf32, #tpu.memory_space<vmem>>, vector<8x64xf32>,
    %c0_94 = arith.constant 0 : index
    %c0_95 = arith.constant 0 : index
    %139 = vector.load %arg13[%c0_94, %c0_95] : memref<224x64xf32, #tpu.memory_space<vmem>>, vector<200x64xf32>
    %c0_96 = arith.constant 0 : index
    %c0_97 = arith.constant 0 : index
    %c0_98 = arith.constant 0 : index
    %140 = vector.load %arg3[%c0_96, %c0_97, %c0_98] : memref<9x64x32xf32, #tpu.memory_space<vmem>>, vector<1x64x32xf32>
    %141 = vector.shape_cast %140 : vector<1x64x32xf32> to vector<64x32xf32>
    %cst_99 = arith.constant dense<0.000000e+00> : vector<200x32xf32>
    %142 = tpu.matmul %139, %141, %cst_99 {dimension_numbers = #tpu.dot_dimension_numbers<[1], [0], [0], [1], [0, 0, 1, 1], [], []>} : vector<200x64xf32>, vector<64x32xf32>, vector<200x32xf32> -> vector<200x32xf32>
    %c1_100 = arith.constant 1 : index
    %c0_101 = arith.constant 0 : index
    %143 = vector.load %arg13[%c1_100, %c0_101] : memref<224x64xf32, #tpu.memory_space<vmem>>, vector<200x64xf32>
    %c1_102 = arith.constant 1 : index
    %c0_103 = arith.constant 0 : index
    %c0_104 = arith.constant 0 : index
    %144 = vector.load %arg3[%c1_102, %c0_103, %c0_104] : memref<9x64x32xf32, #tpu.memory_space<vmem>>, vector<1x64x32xf32>
    %145 = vector.shape_cast %144 : vector<1x64x32xf32> to vector<64x32xf32>
    %cst_105 = arith.constant dense<0.000000e+00> : vector<200x32xf32>
    %146 = tpu.matmul %143, %145, %cst_105 {dimension_numbers = #tpu.dot_dimension_numbers<[1], [0], [0], [1], [0, 0, 1, 1], [], []>} : vector<200x64xf32>, vector<64x32xf32>, vector<200x32xf32> -> vector<200x32xf32>
    %c2 = arith.constant 2 : index
    %c0_106 = arith.constant 0 : index
    %147 = vector.load %arg13[%c2, %c0_106] : memref<224x64xf32, #tpu.memory_space<vmem>>, vector<200x64xf32>
    %c2_107 = arith.constant 2 : index
    %c0_108 = arith.constant 0 : index
    %c0_109 = arith.constant 0 : index
    %148 = vector.load %arg3[%c2_107, %c0_108, %c0_109] : memref<9x64x32xf32, #tpu.memory_space<vmem>>, vector<1x64x32xf32>
    %149 = vector.shape_cast %148 : vector<1x64x32xf32> to vector<64x32xf32>
    %cst_110 = arith.constant dense<0.000000e+00> : vector<200x32xf32>
    %150 = tpu.matmul %147, %149, %cst_110 {dimension_numbers = #tpu.dot_dimension_numbers<[1], [0], [0], [1], [0, 0, 1, 1], [], []>} : vector<200x64xf32>, vector<64x32xf32>, vector<200x32xf32> -> vector<200x32xf32>
    %c10 = arith.constant 10 : index
    %c0_111 = arith.constant 0 : index
    %151 = vector.load %arg13[%c10, %c0_111] : memref<224x64xf32, #tpu.memory_space<vmem>>, vector<200x64xf32>
    %c3 = arith.constant 3 : index
    %c0_112 = arith.constant 0 : index
    %c0_113 = arith.constant 0 : index
    %152 = vector.load %arg3[%c3, %c0_112, %c0_113] : memref<9x64x32xf32, #tpu.memory_space<vmem>>, vector<1x64x32xf32>
    %153 = vector.shape_cast %152 : vector<1x64x32xf32> to vector<64x32xf32>
    %cst_114 = arith.constant dense<0.000000e+00> : vector<200x32xf32>
    %154 = tpu.matmul %151, %153, %cst_114 {dimension_numbers = #tpu.dot_dimension_numbers<[1], [0], [0], [1], [0, 0, 1, 1], [], []>} : vector<200x64xf32>, vector<64x32xf32>, vector<200x32xf32> -> vector<200x32xf32>
    %c11_115 = arith.constant 11 : index
    %c0_116 = arith.constant 0 : index
    %155 = vector.load %arg13[%c11_115, %c0_116] : memref<224x64xf32, #tpu.memory_space<vmem>>, vector<200x64xf32>
    %c4 = arith.constant 4 : index
    %c0_117 = arith.constant 0 : index
    %c0_118 = arith.constant 0 : index
    %156 = vector.load %arg3[%c4, %c0_117, %c0_118] : memref<9x64x32xf32, #tpu.memory_space<vmem>>, vector<1x64x32xf32>
    %157 = vector.shape_cast %156 : vector<1x64x32xf32> to vector<64x32xf32>
    %cst_119 = arith.constant dense<0.000000e+00> : vector<200x32xf32>
    %158 = tpu.matmul %155, %157, %cst_119 {dimension_numbers = #tpu.dot_dimension_numbers<[1], [0], [0], [1], [0, 0, 1, 1], [], []>} : vector<200x64xf32>, vector<64x32xf32>, vector<200x32xf32> -> vector<200x32xf32>
    %c12 = arith.constant 12 : index
    %c0_120 = arith.constant 0 : index
    %159 = vector.load %arg13[%c12, %c0_120] : memref<224x64xf32, #tpu.memory_space<vmem>>, vector<200x64xf32>
    %c5 = arith.constant 5 : index
    %c0_121 = arith.constant 0 : index
    %c0_122 = arith.constant 0 : index
    %160 = vector.load %arg3[%c5, %c0_121, %c0_122] : memref<9x64x32xf32, #tpu.memory_space<vmem>>, vector<1x64x32xf32>
    %161 = vector.shape_cast %160 : vector<1x64x32xf32> to vector<64x32xf32>
    %cst_123 = arith.constant dense<0.000000e+00> : vector<200x32xf32>
    %162 = tpu.matmul %159, %161, %cst_123 {dimension_numbers = #tpu.dot_dimension_numbers<[1], [0], [0], [1], [0, 0, 1, 1], [], []>} : vector<200x64xf32>, vector<64x32xf32>, vector<200x32xf32> -> vector<200x32xf32>
    %c20 = arith.constant 20 : index
    %c0_124 = arith.constant 0 : index
    %163 = vector.load %arg13[%c20, %c0_124] : memref<224x64xf32, #tpu.memory_space<vmem>>, vector<200x64xf32>
    %c6 = arith.constant 6 : index
    %c0_125 = arith.constant 0 : index
    %c0_126 = arith.constant 0 : index
    %164 = vector.load %arg3[%c6, %c0_125, %c0_126] : memref<9x64x32xf32, #tpu.memory_space<vmem>>, vector<1x64x32xf32>
    %165 = vector.shape_cast %164 : vector<1x64x32xf32> to vector<64x32xf32>
    %cst_127 = arith.constant dense<0.000000e+00> : vector<200x32xf32>
    %166 = tpu.matmul %163, %165, %cst_127 {dimension_numbers = #tpu.dot_dimension_numbers<[1], [0], [0], [1], [0, 0, 1, 1], [], []>} : vector<200x64xf32>, vector<64x32xf32>, vector<200x32xf32> -> vector<200x32xf32>
    %c21_128 = arith.constant 21 : index
    %c0_129 = arith.constant 0 : index
    %167 = vector.load %arg13[%c21_128, %c0_129] : memref<224x64xf32, #tpu.memory_space<vmem>>, vector<200x64xf32>
    %c7 = arith.constant 7 : index
    %c0_130 = arith.constant 0 : index
    %c0_131 = arith.constant 0 : index
    %168 = vector.load %arg3[%c7, %c0_130, %c0_131] : memref<9x64x32xf32, #tpu.memory_space<vmem>>, vector<1x64x32xf32>
    %169 = vector.shape_cast %168 : vector<1x64x32xf32> to vector<64x32xf32>
    %cst_132 = arith.constant dense<0.000000e+00> : vector<200x32xf32>
    %170 = tpu.matmul %167, %169, %cst_132 {dimension_numbers = #tpu.dot_dimension_numbers<[1], [0], [0], [1], [0, 0, 1, 1], [], []>} : vector<200x64xf32>, vector<64x32xf32>, vector<200x32xf32> -> vector<200x32xf32>
    %c22 = arith.constant 22 : index
    %c0_133 = arith.constant 0 : index
    %171 = vector.load %arg13[%c22, %c0_133] : memref<224x64xf32, #tpu.memory_space<vmem>>, vector<200x64xf32>
    %c8 = arith.constant 8 : index
    %c0_134 = arith.constant 0 : index
    %c0_135 = arith.constant 0 : index
    %172 = vector.load %arg3[%c8, %c0_134, %c0_135] : memref<9x64x32xf32, #tpu.memory_space<vmem>>, vector<1x64x32xf32>
    %173 = vector.shape_cast %172 : vector<1x64x32xf32> to vector<64x32xf32>
    %cst_136 = arith.constant dense<0.000000e+00> : vector<200x32xf32>
    %174 = tpu.matmul %171, %173, %cst_136 {dimension_numbers = #tpu.dot_dimension_numbers<[1], [0], [0], [1], [0, 0, 1, 1], [], []>} : vector<200x64xf32>, vector<64x32xf32>, vector<200x32xf32> -> vector<200x32xf32>
    %175 = arith.addf %142, %146 : vector<200x32xf32>
    %176 = arith.addf %150, %154 : vector<200x32xf32>
    %177 = arith.addf %158, %162 : vector<200x32xf32>
    %178 = arith.addf %166, %170 : vector<200x32xf32>
    %179 = arith.addf %175, %176 : vector<200x32xf32>
    %180 = arith.addf %177, %178 : vector<200x32xf32>
    %181 = arith.addf %179, %180 : vector<200x32xf32>
    %182 = arith.addf %181, %174 : vector<200x32xf32>
    %c0_137 = arith.constant 0 : index
    %c0_138 = arith.constant 0 : index
    %183 = vector.load %arg4[%c0_137, %c0_138] : memref<1x32xf32, #tpu.memory_space<vmem>>, vector<1x32xf32>
    %184 = vector.broadcast %183 : vector<1x32xf32> to vector<200x32xf32>
    %185 = arith.addf %182, %184 : vector<200x32xf32>
    %cst_139 = arith.constant 0.000000e+00 : f32
    %186 = vector.broadcast %cst_139 : f32 to vector<200x32xf32>
    %187 = arith.maximumf %185, %186 : vector<200x32xf32>
    %c0_140 = arith.constant 0 : index
    %c0_141 = arith.constant 0 : index
    %188 = vector.load %arg14[%c0_140, %c0_141] : memref<200x32xf32, #tpu.memory_space<vmem>>, vector<200x32xf32>
    tpu.vector_store %arg14[%c0_140, %c0_141], %187 {strides = array<i32>} : memref<200x32xf32, #tpu.memory_space<vmem>>, vector<200x32xf32>,
    %c0_142 = arith.constant 0 : index
    %c0_143 = arith.constant 0 : index
    %189 = tpu.strided_load %arg14[%c0_142, %c0_143] {strides = array<i32: 100, 1>} : memref<200x32xf32, #tpu.memory_space<vmem>>, vector<2x32xf32>
    %c1_144 = arith.constant 1 : index
    %c0_145 = arith.constant 0 : index
    %190 = tpu.strided_load %arg14[%c1_144, %c0_145] {strides = array<i32: 100, 1>} : memref<200x32xf32, #tpu.memory_space<vmem>>, vector<2x32xf32>
    %191 = arith.maximumf %189, %190 : vector<2x32xf32>
    %c10_146 = arith.constant 10 : index
    %c0_147 = arith.constant 0 : index
    %192 = tpu.strided_load %arg14[%c10_146, %c0_147] {strides = array<i32: 100, 1>} : memref<200x32xf32, #tpu.memory_space<vmem>>, vector<2x32xf32>
    %193 = arith.maximumf %191, %192 : vector<2x32xf32>
    %c11_148 = arith.constant 11 : index
    %c0_149 = arith.constant 0 : index
    %194 = tpu.strided_load %arg14[%c11_148, %c0_149] {strides = array<i32: 100, 1>} : memref<200x32xf32, #tpu.memory_space<vmem>>, vector<2x32xf32>
    %195 = arith.maximumf %193, %194 : vector<2x32xf32>
    %c2_150 = arith.constant 2 : index
    %c0_151 = arith.constant 0 : index
    %196 = tpu.strided_load %arg14[%c2_150, %c0_151] {strides = array<i32: 100, 1>} : memref<200x32xf32, #tpu.memory_space<vmem>>, vector<2x32xf32>
    %c3_152 = arith.constant 3 : index
    %c0_153 = arith.constant 0 : index
    %197 = tpu.strided_load %arg14[%c3_152, %c0_153] {strides = array<i32: 100, 1>} : memref<200x32xf32, #tpu.memory_space<vmem>>, vector<2x32xf32>
    %198 = arith.maximumf %196, %197 : vector<2x32xf32>
    %c12_154 = arith.constant 12 : index
    %c0_155 = arith.constant 0 : index
    %199 = tpu.strided_load %arg14[%c12_154, %c0_155] {strides = array<i32: 100, 1>} : memref<200x32xf32, #tpu.memory_space<vmem>>, vector<2x32xf32>
    %200 = arith.maximumf %198, %199 : vector<2x32xf32>
    %c13 = arith.constant 13 : index
    %c0_156 = arith.constant 0 : index
    %201 = tpu.strided_load %arg14[%c13, %c0_156] {strides = array<i32: 100, 1>} : memref<200x32xf32, #tpu.memory_space<vmem>>, vector<2x32xf32>
    %202 = arith.maximumf %200, %201 : vector<2x32xf32>
    %c4_157 = arith.constant 4 : index
    %c0_158 = arith.constant 0 : index
    %203 = tpu.strided_load %arg14[%c4_157, %c0_158] {strides = array<i32: 100, 1>} : memref<200x32xf32, #tpu.memory_space<vmem>>, vector<2x32xf32>
    %c5_159 = arith.constant 5 : index
    %c0_160 = arith.constant 0 : index
    %204 = tpu.strided_load %arg14[%c5_159, %c0_160] {strides = array<i32: 100, 1>} : memref<200x32xf32, #tpu.memory_space<vmem>>, vector<2x32xf32>
    %205 = arith.maximumf %203, %204 : vector<2x32xf32>
    %c14 = arith.constant 14 : index
    %c0_161 = arith.constant 0 : index
    %206 = tpu.strided_load %arg14[%c14, %c0_161] {strides = array<i32: 100, 1>} : memref<200x32xf32, #tpu.memory_space<vmem>>, vector<2x32xf32>
    %207 = arith.maximumf %205, %206 : vector<2x32xf32>
    %c15 = arith.constant 15 : index
    %c0_162 = arith.constant 0 : index
    %208 = tpu.strided_load %arg14[%c15, %c0_162] {strides = array<i32: 100, 1>} : memref<200x32xf32, #tpu.memory_space<vmem>>, vector<2x32xf32>
    %209 = arith.maximumf %207, %208 : vector<2x32xf32>
    %c6_163 = arith.constant 6 : index
    %c0_164 = arith.constant 0 : index
    %210 = tpu.strided_load %arg14[%c6_163, %c0_164] {strides = array<i32: 100, 1>} : memref<200x32xf32, #tpu.memory_space<vmem>>, vector<2x32xf32>
    %c7_165 = arith.constant 7 : index
    %c0_166 = arith.constant 0 : index
    %211 = tpu.strided_load %arg14[%c7_165, %c0_166] {strides = array<i32: 100, 1>} : memref<200x32xf32, #tpu.memory_space<vmem>>, vector<2x32xf32>
    %212 = arith.maximumf %210, %211 : vector<2x32xf32>
    %c16_167 = arith.constant 16 : index
    %c0_168 = arith.constant 0 : index
    %213 = tpu.strided_load %arg14[%c16_167, %c0_168] {strides = array<i32: 100, 1>} : memref<200x32xf32, #tpu.memory_space<vmem>>, vector<2x32xf32>
    %214 = arith.maximumf %212, %213 : vector<2x32xf32>
    %c17_169 = arith.constant 17 : index
    %c0_170 = arith.constant 0 : index
    %215 = tpu.strided_load %arg14[%c17_169, %c0_170] {strides = array<i32: 100, 1>} : memref<200x32xf32, #tpu.memory_space<vmem>>, vector<2x32xf32>
    %216 = arith.maximumf %214, %215 : vector<2x32xf32>
    %c20_171 = arith.constant 20 : index
    %c0_172 = arith.constant 0 : index
    %217 = tpu.strided_load %arg14[%c20_171, %c0_172] {strides = array<i32: 100, 1>} : memref<200x32xf32, #tpu.memory_space<vmem>>, vector<2x32xf32>
    %c21_173 = arith.constant 21 : index
    %c0_174 = arith.constant 0 : index
    %218 = tpu.strided_load %arg14[%c21_173, %c0_174] {strides = array<i32: 100, 1>} : memref<200x32xf32, #tpu.memory_space<vmem>>, vector<2x32xf32>
    %219 = arith.maximumf %217, %218 : vector<2x32xf32>
    %c30 = arith.constant 30 : index
    %c0_175 = arith.constant 0 : index
    %220 = tpu.strided_load %arg14[%c30, %c0_175] {strides = array<i32: 100, 1>} : memref<200x32xf32, #tpu.memory_space<vmem>>, vector<2x32xf32>
    %221 = arith.maximumf %219, %220 : vector<2x32xf32>
    %c31_176 = arith.constant 31 : index
    %c0_177 = arith.constant 0 : index
    %222 = tpu.strided_load %arg14[%c31_176, %c0_177] {strides = array<i32: 100, 1>} : memref<200x32xf32, #tpu.memory_space<vmem>>, vector<2x32xf32>
    %223 = arith.maximumf %221, %222 : vector<2x32xf32>
    %c22_178 = arith.constant 22 : index
    %c0_179 = arith.constant 0 : index
    %224 = tpu.strided_load %arg14[%c22_178, %c0_179] {strides = array<i32: 100, 1>} : memref<200x32xf32, #tpu.memory_space<vmem>>, vector<2x32xf32>
    %c23 = arith.constant 23 : index
    %c0_180 = arith.constant 0 : index
    %225 = tpu.strided_load %arg14[%c23, %c0_180] {strides = array<i32: 100, 1>} : memref<200x32xf32, #tpu.memory_space<vmem>>, vector<2x32xf32>
    %226 = arith.maximumf %224, %225 : vector<2x32xf32>
    %c32_181 = arith.constant 32 : index
    %c0_182 = arith.constant 0 : index
    %227 = tpu.strided_load %arg14[%c32_181, %c0_182] {strides = array<i32: 100, 1>} : memref<200x32xf32, #tpu.memory_space<vmem>>, vector<2x32xf32>
    %228 = arith.maximumf %226, %227 : vector<2x32xf32>
    %c33_183 = arith.constant 33 : index
    %c0_184 = arith.constant 0 : index
    %229 = tpu.strided_load %arg14[%c33_183, %c0_184] {strides = array<i32: 100, 1>} : memref<200x32xf32, #tpu.memory_space<vmem>>, vector<2x32xf32>
    %230 = arith.maximumf %228, %229 : vector<2x32xf32>
    %c24 = arith.constant 24 : index
    %c0_185 = arith.constant 0 : index
    %231 = tpu.strided_load %arg14[%c24, %c0_185] {strides = array<i32: 100, 1>} : memref<200x32xf32, #tpu.memory_space<vmem>>, vector<2x32xf32>
    %c25 = arith.constant 25 : index
    %c0_186 = arith.constant 0 : index
    %232 = tpu.strided_load %arg14[%c25, %c0_186] {strides = array<i32: 100, 1>} : memref<200x32xf32, #tpu.memory_space<vmem>>, vector<2x32xf32>
    %233 = arith.maximumf %231, %232 : vector<2x32xf32>
    %c34 = arith.constant 34 : index
    %c0_187 = arith.constant 0 : index
    %234 = tpu.strided_load %arg14[%c34, %c0_187] {strides = array<i32: 100, 1>} : memref<200x32xf32, #tpu.memory_space<vmem>>, vector<2x32xf32>
    %235 = arith.maximumf %233, %234 : vector<2x32xf32>
    %c35 = arith.constant 35 : index
    %c0_188 = arith.constant 0 : index
    %236 = tpu.strided_load %arg14[%c35, %c0_188] {strides = array<i32: 100, 1>} : memref<200x32xf32, #tpu.memory_space<vmem>>, vector<2x32xf32>
    %237 = arith.maximumf %235, %236 : vector<2x32xf32>
    %c26 = arith.constant 26 : index
    %c0_189 = arith.constant 0 : index
    %238 = tpu.strided_load %arg14[%c26, %c0_189] {strides = array<i32: 100, 1>} : memref<200x32xf32, #tpu.memory_space<vmem>>, vector<2x32xf32>
    %c27 = arith.constant 27 : index
    %c0_190 = arith.constant 0 : index
    %239 = tpu.strided_load %arg14[%c27, %c0_190] {strides = array<i32: 100, 1>} : memref<200x32xf32, #tpu.memory_space<vmem>>, vector<2x32xf32>
    %240 = arith.maximumf %238, %239 : vector<2x32xf32>
    %c36 = arith.constant 36 : index
    %c0_191 = arith.constant 0 : index
    %241 = tpu.strided_load %arg14[%c36, %c0_191] {strides = array<i32: 100, 1>} : memref<200x32xf32, #tpu.memory_space<vmem>>, vector<2x32xf32>
    %242 = arith.maximumf %240, %241 : vector<2x32xf32>
    %c37 = arith.constant 37 : index
    %c0_192 = arith.constant 0 : index
    %243 = tpu.strided_load %arg14[%c37, %c0_192] {strides = array<i32: 100, 1>} : memref<200x32xf32, #tpu.memory_space<vmem>>, vector<2x32xf32>
    %244 = arith.maximumf %242, %243 : vector<2x32xf32>
    %c40 = arith.constant 40 : index
    %c0_193 = arith.constant 0 : index
    %245 = tpu.strided_load %arg14[%c40, %c0_193] {strides = array<i32: 100, 1>} : memref<200x32xf32, #tpu.memory_space<vmem>>, vector<2x32xf32>
    %c41_194 = arith.constant 41 : index
    %c0_195 = arith.constant 0 : index
    %246 = tpu.strided_load %arg14[%c41_194, %c0_195] {strides = array<i32: 100, 1>} : memref<200x32xf32, #tpu.memory_space<vmem>>, vector<2x32xf32>
    %247 = arith.maximumf %245, %246 : vector<2x32xf32>
    %c50 = arith.constant 50 : index
    %c0_196 = arith.constant 0 : index
    %248 = tpu.strided_load %arg14[%c50, %c0_196] {strides = array<i32: 100, 1>} : memref<200x32xf32, #tpu.memory_space<vmem>>, vector<2x32xf32>
    %249 = arith.maximumf %247, %248 : vector<2x32xf32>
    %c51_197 = arith.constant 51 : index
    %c0_198 = arith.constant 0 : index
    %250 = tpu.strided_load %arg14[%c51_197, %c0_198] {strides = array<i32: 100, 1>} : memref<200x32xf32, #tpu.memory_space<vmem>>, vector<2x32xf32>
    %251 = arith.maximumf %249, %250 : vector<2x32xf32>
    %c42 = arith.constant 42 : index
    %c0_199 = arith.constant 0 : index
    %252 = tpu.strided_load %arg14[%c42, %c0_199] {strides = array<i32: 100, 1>} : memref<200x32xf32, #tpu.memory_space<vmem>>, vector<2x32xf32>
    %c43 = arith.constant 43 : index
    %c0_200 = arith.constant 0 : index
    %253 = tpu.strided_load %arg14[%c43, %c0_200] {strides = array<i32: 100, 1>} : memref<200x32xf32, #tpu.memory_space<vmem>>, vector<2x32xf32>
    %254 = arith.maximumf %252, %253 : vector<2x32xf32>
    %c52 = arith.constant 52 : index
    %c0_201 = arith.constant 0 : index
    %255 = tpu.strided_load %arg14[%c52, %c0_201] {strides = array<i32: 100, 1>} : memref<200x32xf32, #tpu.memory_space<vmem>>, vector<2x32xf32>
    %256 = arith.maximumf %254, %255 : vector<2x32xf32>
    %c53 = arith.constant 53 : index
    %c0_202 = arith.constant 0 : index
    %257 = tpu.strided_load %arg14[%c53, %c0_202] {strides = array<i32: 100, 1>} : memref<200x32xf32, #tpu.memory_space<vmem>>, vector<2x32xf32>
    %258 = arith.maximumf %256, %257 : vector<2x32xf32>
    %c44 = arith.constant 44 : index
    %c0_203 = arith.constant 0 : index
    %259 = tpu.strided_load %arg14[%c44, %c0_203] {strides = array<i32: 100, 1>} : memref<200x32xf32, #tpu.memory_space<vmem>>, vector<2x32xf32>
    %c45 = arith.constant 45 : index
    %c0_204 = arith.constant 0 : index
    %260 = tpu.strided_load %arg14[%c45, %c0_204] {strides = array<i32: 100, 1>} : memref<200x32xf32, #tpu.memory_space<vmem>>, vector<2x32xf32>
    %261 = arith.maximumf %259, %260 : vector<2x32xf32>
    %c54 = arith.constant 54 : index
    %c0_205 = arith.constant 0 : index
    %262 = tpu.strided_load %arg14[%c54, %c0_205] {strides = array<i32: 100, 1>} : memref<200x32xf32, #tpu.memory_space<vmem>>, vector<2x32xf32>
    %263 = arith.maximumf %261, %262 : vector<2x32xf32>
    %c55 = arith.constant 55 : index
    %c0_206 = arith.constant 0 : index
    %264 = tpu.strided_load %arg14[%c55, %c0_206] {strides = array<i32: 100, 1>} : memref<200x32xf32, #tpu.memory_space<vmem>>, vector<2x32xf32>
    %265 = arith.maximumf %263, %264 : vector<2x32xf32>
    %c46 = arith.constant 46 : index
    %c0_207 = arith.constant 0 : index
    %266 = tpu.strided_load %arg14[%c46, %c0_207] {strides = array<i32: 100, 1>} : memref<200x32xf32, #tpu.memory_space<vmem>>, vector<2x32xf32>
    %c47 = arith.constant 47 : index
    %c0_208 = arith.constant 0 : index
    %267 = tpu.strided_load %arg14[%c47, %c0_208] {strides = array<i32: 100, 1>} : memref<200x32xf32, #tpu.memory_space<vmem>>, vector<2x32xf32>
    %268 = arith.maximumf %266, %267 : vector<2x32xf32>
    %c56 = arith.constant 56 : index
    %c0_209 = arith.constant 0 : index
    %269 = tpu.strided_load %arg14[%c56, %c0_209] {strides = array<i32: 100, 1>} : memref<200x32xf32, #tpu.memory_space<vmem>>, vector<2x32xf32>
    %270 = arith.maximumf %268, %269 : vector<2x32xf32>
    %c57 = arith.constant 57 : index
    %c0_210 = arith.constant 0 : index
    %271 = tpu.strided_load %arg14[%c57, %c0_210] {strides = array<i32: 100, 1>} : memref<200x32xf32, #tpu.memory_space<vmem>>, vector<2x32xf32>
    %272 = arith.maximumf %270, %271 : vector<2x32xf32>
    %c60 = arith.constant 60 : index
    %c0_211 = arith.constant 0 : index
    %273 = tpu.strided_load %arg14[%c60, %c0_211] {strides = array<i32: 100, 1>} : memref<200x32xf32, #tpu.memory_space<vmem>>, vector<2x32xf32>
    %c61_212 = arith.constant 61 : index
    %c0_213 = arith.constant 0 : index
    %274 = tpu.strided_load %arg14[%c61_212, %c0_213] {strides = array<i32: 100, 1>} : memref<200x32xf32, #tpu.memory_space<vmem>>, vector<2x32xf32>
    %275 = arith.maximumf %273, %274 : vector<2x32xf32>
    %c70 = arith.constant 70 : index
    %c0_214 = arith.constant 0 : index
    %276 = tpu.strided_load %arg14[%c70, %c0_214] {strides = array<i32: 100, 1>} : memref<200x32xf32, #tpu.memory_space<vmem>>, vector<2x32xf32>
    %277 = arith.maximumf %275, %276 : vector<2x32xf32>
    %c71_215 = arith.constant 71 : index
    %c0_216 = arith.constant 0 : index
    %278 = tpu.strided_load %arg14[%c71_215, %c0_216] {strides = array<i32: 100, 1>} : memref<200x32xf32, #tpu.memory_space<vmem>>, vector<2x32xf32>
    %279 = arith.maximumf %277, %278 : vector<2x32xf32>
    %c62 = arith.constant 62 : index
    %c0_217 = arith.constant 0 : index
    %280 = tpu.strided_load %arg14[%c62, %c0_217] {strides = array<i32: 100, 1>} : memref<200x32xf32, #tpu.memory_space<vmem>>, vector<2x32xf32>
    %c63 = arith.constant 63 : index
    %c0_218 = arith.constant 0 : index
    %281 = tpu.strided_load %arg14[%c63, %c0_218] {strides = array<i32: 100, 1>} : memref<200x32xf32, #tpu.memory_space<vmem>>, vector<2x32xf32>
    %282 = arith.maximumf %280, %281 : vector<2x32xf32>
    %c72 = arith.constant 72 : index
    %c0_219 = arith.constant 0 : index
    %283 = tpu.strided_load %arg14[%c72, %c0_219] {strides = array<i32: 100, 1>} : memref<200x32xf32, #tpu.memory_space<vmem>>, vector<2x32xf32>
    %284 = arith.maximumf %282, %283 : vector<2x32xf32>
    %c73 = arith.constant 73 : index
    %c0_220 = arith.constant 0 : index
    %285 = tpu.strided_load %arg14[%c73, %c0_220] {strides = array<i32: 100, 1>} : memref<200x32xf32, #tpu.memory_space<vmem>>, vector<2x32xf32>
    %286 = arith.maximumf %284, %285 : vector<2x32xf32>
    %c64_221 = arith.constant 64 : index
    %c0_222 = arith.constant 0 : index
    %287 = tpu.strided_load %arg14[%c64_221, %c0_222] {strides = array<i32: 100, 1>} : memref<200x32xf32, #tpu.memory_space<vmem>>, vector<2x32xf32>
    %c65_223 = arith.constant 65 : index
    %c0_224 = arith.constant 0 : index
    %288 = tpu.strided_load %arg14[%c65_223, %c0_224] {strides = array<i32: 100, 1>} : memref<200x32xf32, #tpu.memory_space<vmem>>, vector<2x32xf32>
    %289 = arith.maximumf %287, %288 : vector<2x32xf32>
    %c74 = arith.constant 74 : index
    %c0_225 = arith.constant 0 : index
    %290 = tpu.strided_load %arg14[%c74, %c0_225] {strides = array<i32: 100, 1>} : memref<200x32xf32, #tpu.memory_space<vmem>>, vector<2x32xf32>
    %291 = arith.maximumf %289, %290 : vector<2x32xf32>
    %c75 = arith.constant 75 : index
    %c0_226 = arith.constant 0 : index
    %292 = tpu.strided_load %arg14[%c75, %c0_226] {strides = array<i32: 100, 1>} : memref<200x32xf32, #tpu.memory_space<vmem>>, vector<2x32xf32>
    %293 = arith.maximumf %291, %292 : vector<2x32xf32>
    %c66 = arith.constant 66 : index
    %c0_227 = arith.constant 0 : index
    %294 = tpu.strided_load %arg14[%c66, %c0_227] {strides = array<i32: 100, 1>} : memref<200x32xf32, #tpu.memory_space<vmem>>, vector<2x32xf32>
    %c67 = arith.constant 67 : index
    %c0_228 = arith.constant 0 : index
    %295 = tpu.strided_load %arg14[%c67, %c0_228] {strides = array<i32: 100, 1>} : memref<200x32xf32, #tpu.memory_space<vmem>>, vector<2x32xf32>
    %296 = arith.maximumf %294, %295 : vector<2x32xf32>
    %c76 = arith.constant 76 : index
    %c0_229 = arith.constant 0 : index
    %297 = tpu.strided_load %arg14[%c76, %c0_229] {strides = array<i32: 100, 1>} : memref<200x32xf32, #tpu.memory_space<vmem>>, vector<2x32xf32>
    %298 = arith.maximumf %296, %297 : vector<2x32xf32>
    %c77 = arith.constant 77 : index
    %c0_230 = arith.constant 0 : index
    %299 = tpu.strided_load %arg14[%c77, %c0_230] {strides = array<i32: 100, 1>} : memref<200x32xf32, #tpu.memory_space<vmem>>, vector<2x32xf32>
    %300 = arith.maximumf %298, %299 : vector<2x32xf32>
    %301 = tpu.concatenate %195, %202, %209, %216, %223, %230, %237, %244, %251, %258, %265, %272, %279, %286, %293, %300 in 1 : vector<2x32xf32>, vector<2x32xf32>, vector<2x32xf32>, vector<2x32xf32>, vector<2x32xf32>, vector<2x32xf32>, vector<2x32xf32>, vector<2x32xf32>, vector<2x32xf32>, vector<2x32xf32>, vector<2x32xf32>, vector<2x32xf32>, vector<2x32xf32>, vector<2x32xf32>, vector<2x32xf32>, vector<2x32xf32> -> vector<2x512xf32>
    %c0_231 = arith.constant 0 : index
    %c0_232 = arith.constant 0 : index
    %302 = vector.load %arg5[%c0_231, %c0_232] : memref<512x128xf32, #tpu.memory_space<vmem>>, vector<512x128xf32>
    %cst_233 = arith.constant dense<0.000000e+00> : vector<2x128xf32>
    %303 = tpu.matmul %301, %302, %cst_233 {dimension_numbers = #tpu.dot_dimension_numbers<[1], [0], [0], [1], [0, 0, 1, 1], [], []>} : vector<2x512xf32>, vector<512x128xf32>, vector<2x128xf32> -> vector<2x128xf32>
    %c0_234 = arith.constant 0 : index
    %c0_235 = arith.constant 0 : index
    %304 = vector.load %arg6[%c0_234, %c0_235] : memref<1x128xf32, #tpu.memory_space<vmem>>, vector<1x128xf32>
    %305 = vector.broadcast %304 : vector<1x128xf32> to vector<2x128xf32>
    %306 = arith.addf %303, %305 : vector<2x128xf32>
    %cst_236 = arith.constant 0.000000e+00 : f32
    %307 = vector.broadcast %cst_236 : f32 to vector<2x128xf32>
    %308 = arith.maximumf %306, %307 : vector<2x128xf32>
    %c0_237 = arith.constant 0 : index
    %c0_238 = arith.constant 0 : index
    %309 = vector.load %arg7[%c0_237, %c0_238] : memref<128x128xf32, #tpu.memory_space<vmem>>, vector<128x128xf32>
    %cst_239 = arith.constant dense<0.000000e+00> : vector<2x128xf32>
    %310 = tpu.matmul %308, %309, %cst_239 {dimension_numbers = #tpu.dot_dimension_numbers<[1], [0], [0], [1], [0, 0, 1, 1], [], []>} : vector<2x128xf32>, vector<128x128xf32>, vector<2x128xf32> -> vector<2x128xf32>
    %c0_240 = arith.constant 0 : index
    %c0_241 = arith.constant 0 : index
    %311 = vector.load %arg8[%c0_240, %c0_241] : memref<1x128xf32, #tpu.memory_space<vmem>>, vector<1x128xf32>
    %312 = vector.broadcast %311 : vector<1x128xf32> to vector<2x128xf32>
    %313 = arith.addf %310, %312 : vector<2x128xf32>
    %cst_242 = arith.constant 0.000000e+00 : f32
    %314 = vector.broadcast %cst_242 : f32 to vector<2x128xf32>
    %315 = arith.maximumf %313, %314 : vector<2x128xf32>
    %c0_243 = arith.constant 0 : index
    %c0_244 = arith.constant 0 : index
    %316 = vector.load %arg9[%c0_243, %c0_244] : memref<128x6xf32, #tpu.memory_space<vmem>>, vector<128x6xf32>
    %cst_245 = arith.constant dense<0.000000e+00> : vector<2x6xf32>
    %317 = tpu.matmul %315, %316, %cst_245 {dimension_numbers = #tpu.dot_dimension_numbers<[1], [0], [0], [1], [0, 0, 1, 1], [], []>} : vector<2x128xf32>, vector<128x6xf32>, vector<2x6xf32> -> vector<2x6xf32>
    %c0_246 = arith.constant 0 : index
    %c0_247 = arith.constant 0 : index
    %318 = vector.load %arg10[%c0_246, %c0_247] : memref<1x6xf32, #tpu.memory_space<vmem>>, vector<1x6xf32>
    %319 = vector.broadcast %318 : vector<1x6xf32> to vector<2x6xf32>
    %320 = arith.addf %317, %319 : vector<2x6xf32>
    %cst_248 = arith.constant dense<0xFF800000> : vector<2xf32>
    %321 = vector.multi_reduction <maximumf>, %320, %cst_248 [1] : vector<2x6xf32> to vector<2xf32>
    %322 = vector.shape_cast %321 : vector<2xf32> to vector<2x1xf32>
    %323 = vector.broadcast %322 : vector<2x1xf32> to vector<2x6xf32>
    %324 = arith.subf %320, %323 : vector<2x6xf32>
    %325 = math.exp %324 : vector<2x6xf32>
    %cst_249 = arith.constant dense<0.000000e+00> : vector<2xf32>
    %326 = vector.multi_reduction <add>, %325, %cst_249 [1] : vector<2x6xf32> to vector<2xf32>
    %327 = vector.shape_cast %326 : vector<2xf32> to vector<2x1xf32>
    %328 = tpu.reciprocal %327 : vector<2x1xf32> -> vector<2x1xf32>
    %329 = vector.broadcast %328 : vector<2x1xf32> to vector<2x6xf32>
    %330 = arith.mulf %325, %329 : vector<2x6xf32>
    %c0_250 = arith.constant 0 : index
    %c0_251 = arith.constant 0 : index
    %331 = vector.load %arg11[%c0_250, %c0_251] : memref<2x6xf32, #tpu.memory_space<vmem>>, vector<2x6xf32>
    tpu.vector_store %arg11[%c0_250, %c0_251], %330 {strides = array<i32>} : memref<2x6xf32, #tpu.memory_space<vmem>>, vector<2x6xf32>,
    return
  }
}

</mosaic_0001>

<llo_original>
// kernel: cnn_agent_forward.1
$region0: #{cnn_agent_forward.1}
  #allocation0 [shape = 'u32[]', space=smem, size = 0x4, offset = 0x4, fixed_abs, tag = 'smem constant byte address 0x4 - core index']
  #allocation1 [shape = 'u32[144,128]{1,0:T(1,128)}', space=vmem, size = 0x12000, scoped, tag = 'internal scratch']
  #allocation2 [shape = 'f32[512,64]{1,0:T(8,128)}', space=vmem, size = 0x40000, scoped, tag = 'scratch operand']
  #allocation3 [shape = 'f32[224,64]{1,0:T(8,128)}', space=vmem, size = 0x1c000, scoped, tag = 'scratch operand']
  #allocation4 [shape = 'f32[200,32]{1,0:T(8,128)}', space=vmem, size = 0x19000, scoped, tag = 'scratch operand']
  %s0 = inlined_call_operand.vmem [shape: f32[512,36], index: 0, kind: input, shape index: {}]
  %s1 = inlined_call_operand.vmem [shape: f32[36,64], index: 1, kind: input, shape index: {}]
  %s2 = inlined_call_operand.vmem [shape: f32[1,64], index: 2, kind: input, shape index: {}]
  %s3 = inlined_call_operand.vmem [shape: f32[9,64,32], index: 3, kind: input, shape index: {}]
  %s4 = inlined_call_operand.vmem [shape: f32[1,32], index: 4, kind: input, shape index: {}]
  %s5 = inlined_call_operand.vmem [shape: f32[512,128], index: 5, kind: input, shape index: {}]
  %s6 = inlined_call_operand.vmem [shape: f32[1,128], index: 6, kind: input, shape index: {}]
  %s7 = inlined_call_operand.vmem [shape: f32[128,128], index: 7, kind: input, shape index: {}]
  %s8 = inlined_call_operand.vmem [shape: f32[1,128], index: 8, kind: input, shape index: {}]
  %s9 = inlined_call_operand.vmem [shape: f32[128,6], index: 9, kind: input, shape index: {}]
  %s10 = inlined_call_operand.vmem [shape: f32[1,6], index: 10, kind: input, shape index: {}]
  %s11 = inlined_call_operand.hbm [shape: f32[2,6], index: 11, kind: output, shape index: {}]
  %s12 = sld [smem:[#allocation0]]
  $region54: #{cnn_agent_forward.1} parent=0
    _
  %s14 = ssub.s32 1, %s12
  %s15 = scalar_select 0, %s14, %s12
  $region1: #{cnn_agent_forward.1} parent=0
    #allocation5 [shape = 'u8[1024]{0}', space=vmem, size = 0x400, scoped, tag = 'output window, operand 0, single buffered']
    #allocation6 [shape = 's32[1]{0}', space=sflag, size = 0x4, scoped, tag = 'scoped memory for cnn_agent_forward.1']
    %16 = vsyncpa [#allocation6], 0
    // Predicated region
    $region2: #{cnn_agent_forward.1} parent=1 // pred_check
      _
    $region3: #{cnn_agent_forward.1} parent=1 // pred_check_branch
      %18 = sbr.rel (0) target = $region5
    $region4: #{cnn_agent_forward.1} parent=1 // pred_region
      _
    $region5: #{cnn_agent_forward.1} parent=1 // pred_fallthru
      _
    // Predicated region
    $region6: #{cnn_agent_forward.1} parent=1 // pred_check
      _
    $region7: #{cnn_agent_forward.1} parent=1 // pred_check_branch
      %20 = sbr.rel (0) target = $region9
    $region8: #{cnn_agent_forward.1} parent=1 // pred_region
      _
    $region9: #{cnn_agent_forward.1} parent=1 // pred_fallthru
      _
    // Predicated region
    $region10: #{cnn_agent_forward.1} parent=1 // pred_check
      _
    $region11: #{cnn_agent_forward.1} parent=1 // pred_check_branch
      %22 = sbr.rel (0) target = $region13
    $region12: #{cnn_agent_forward.1} parent=1 // pred_region
      _
    $region13: #{cnn_agent_forward.1} parent=1 // pred_fallthru
      _
    // Predicated region
    $region14: #{cnn_agent_forward.1} parent=1 // pred_check
      _
    $region15: #{cnn_agent_forward.1} parent=1 // pred_check_branch
      %24 = sbr.rel (0) target = $region17
    $region16: #{cnn_agent_forward.1} parent=1 // pred_region
      _
    $region17: #{cnn_agent_forward.1} parent=1 // pred_fallthru
      _
    // Predicated region
    $region18: #{cnn_agent_forward.1} parent=1 // pred_check
      _
    $region19: #{cnn_agent_forward.1} parent=1 // pred_check_branch
      %26 = sbr.rel (0) target = $region21
    $region20: #{cnn_agent_forward.1} parent=1 // pred_region
      _
    $region21: #{cnn_agent_forward.1} parent=1 // pred_fallthru
      _
    // Predicated region
    $region22: #{cnn_agent_forward.1} parent=1 // pred_check
      _
    $region23: #{cnn_agent_forward.1} parent=1 // pred_check_branch
      %28 = sbr.rel (0) target = $region25
    $region24: #{cnn_agent_forward.1} parent=1 // pred_region
      _
    $region25: #{cnn_agent_forward.1} parent=1 // pred_fallthru
      _
    // Predicated region
    $region26: #{cnn_agent_forward.1} parent=1 // pred_check
      _
    $region27: #{cnn_agent_forward.1} parent=1 // pred_check_branch
      %30 = sbr.rel (0) target = $region29
    $region28: #{cnn_agent_forward.1} parent=1 // pred_region
      _
    $region29: #{cnn_agent_forward.1} parent=1 // pred_fallthru
      _
    // Predicated region
    $region30: #{cnn_agent_forward.1} parent=1 // pred_check
      _
    $region31: #{cnn_agent_forward.1} parent=1 // pred_check_branch
      %32 = sbr.rel (0) target = $region33
    $region32: #{cnn_agent_forward.1} parent=1 // pred_region
      _
    $region33: #{cnn_agent_forward.1} parent=1 // pred_fallthru
      _
    // Predicated region
    $region34: #{cnn_agent_forward.1} parent=1 // pred_check
      _
    $region35: #{cnn_agent_forward.1} parent=1 // pred_check_branch
      %34 = sbr.rel (0) target = $region37
    $region36: #{cnn_agent_forward.1} parent=1 // pred_region
      _
    $region37: #{cnn_agent_forward.1} parent=1 // pred_fallthru
      _
    // Predicated region
    $region38: #{cnn_agent_forward.1} parent=1 // pred_check
      _
    $region39: #{cnn_agent_forward.1} parent=1 // pred_check_branch
      %36 = sbr.rel (0) target = $region41
    $region40: #{cnn_agent_forward.1} parent=1 // pred_region
      _
    $region41: #{cnn_agent_forward.1} parent=1 // pred_fallthru
      _
    // Predicated region
    $region42: #{cnn_agent_forward.1} parent=1 // pred_check
      _
    $region43: #{cnn_agent_forward.1} parent=1 // pred_check_branch
      %38 = sbr.rel (0) target = $region45
    $region44: #{cnn_agent_forward.1} parent=1 // pred_region
      _
    $region45: #{cnn_agent_forward.1} parent=1 // pred_fallthru
      _
    %v39 = vld [vmem:[%s0] sm:$0xff]
    %v40 = vld [vmem:[%s0 + $0x8] sm:$0xff]
    %v41 = vld [vmem:[%s0 + $0x10] sm:$0xff]
    %v42 = vld [vmem:[%s0 + $0x18] sm:$0xff]
    %v43 = vld [vmem:[%s0 + $0x20] sm:$0xff]
    %v44 = vld [vmem:[%s0 + $0x28] sm:$0xff]
    %v45 = vld [vmem:[%s0 + $0x30] sm:$0xff]
    %v46 = vld [vmem:[%s0 + $0x38] sm:$0xff]
    %v47 = vld [vmem:[%s0 + $0x40] sm:$0xff]
    %v48 = vld [vmem:[%s0 + $0x48] sm:$0xff]
    %v49 = vld [vmem:[%s0 + $0x50] sm:$0xff]
    %v50 = vld [vmem:[%s0 + $0x58] sm:$0xff]
    %v51 = vld [vmem:[%s0 + $0x60] sm:$0xff]
    %v52 = vld [vmem:[%s0 + $0x68] sm:$0xff]
    %v53 = vld [vmem:[%s0 + $0x70] sm:$0xff]
    %v54 = vld [vmem:[%s0 + $0x78] sm:$0xff]
    %v55 = vld [vmem:[%s0 + $0x80] sm:$0xff]
    %v56 = vld [vmem:[%s0 + $0x88] sm:$0xff]
    %v57 = vld [vmem:[%s0 + $0x90] sm:$0xff]
    %v58 = vld [vmem:[%s0 + $0x98] sm:$0xff]
    %v59 = vld [vmem:[%s0 + $0xa0] sm:$0xff]
    %v60 = vld [vmem:[%s0 + $0xa8] sm:$0xff]
    %v61 = vld [vmem:[%s0 + $0xb0] sm:$0xff]
    %v62 = vld [vmem:[%s0 + $0xb8] sm:$0xff]
    %v63 = vld [vmem:[%s0 + $0xc0] sm:$0xff]
    %v64 = vld [vmem:[%s0 + $0xc8] sm:$0xff]
    %v65 = vld [vmem:[%s0 + $0xd0] sm:$0xff]
    %v66 = vld [vmem:[%s0 + $0xd8] sm:$0xff]
    %v67 = vld [vmem:[%s0 + $0xe0] sm:$0xff]
    %v68 = vld [vmem:[%s0 + $0xe8] sm:$0xff]
    %v69 = vld [vmem:[%s0 + $0xf0] sm:$0xff]
    %v70 = vld [vmem:[%s0 + $0xf8] sm:$0xff]
    %v71 = vld [vmem:[%s0 + $0x100] sm:$0xff]
    %v72 = vld [vmem:[%s0 + $0x108] sm:$0xff]
    %v73 = vld [vmem:[%s0 + $0x110] sm:$0xff]
    %v74 = vld [vmem:[%s0 + $0x118] sm:$0xff]
    %v75 = vld [vmem:[%s0 + $0x120] sm:$0xff]
    %v76 = vld [vmem:[%s0 + $0x128] sm:$0xff]
    %v77 = vld [vmem:[%s0 + $0x130] sm:$0xff]
    %v78 = vld [vmem:[%s0 + $0x138] sm:$0xff]
    %v79 = vld [vmem:[%s0 + $0x140] sm:$0xff]
    %v80 = vld [vmem:[%s0 + $0x148] sm:$0xff]
    %v81 = vld [vmem:[%s0 + $0x150] sm:$0xff]
    %v82 = vld [vmem:[%s0 + $0x158] sm:$0xff]
    %v83 = vld [vmem:[%s0 + $0x160] sm:$0xff]
    %v84 = vld [vmem:[%s0 + $0x168] sm:$0xff]
    %v85 = vld [vmem:[%s0 + $0x170] sm:$0xff]
    %v86 = vld [vmem:[%s0 + $0x178] sm:$0xff]
    %v87 = vld [vmem:[%s0 + $0x180] sm:$0xff]
    %v88 = vld [vmem:[%s0 + $0x188] sm:$0xff]
    %v89 = vld [vmem:[%s0 + $0x190] sm:$0xff]
    %v90 = vld [vmem:[%s0 + $0x198] sm:$0xff]
    %v91 = vld [vmem:[%s0 + $0x1a0] sm:$0xff]
    %v92 = vld [vmem:[%s0 + $0x1a8] sm:$0xff]
    %v93 = vld [vmem:[%s0 + $0x1b0] sm:$0xff]
    %v94 = vld [vmem:[%s0 + $0x1b8] sm:$0xff]
    %v95 = vld [vmem:[%s0 + $0x1c0] sm:$0xff]
    %v96 = vld [vmem:[%s0 + $0x1c8] sm:$0xff]
    %v97 = vld [vmem:[%s0 + $0x1d0] sm:$0xff]
    %v98 = vld [vmem:[%s0 + $0x1d8] sm:$0xff]
    %v99 = vld [vmem:[%s0 + $0x1e0] sm:$0xff]
    %v100 = vld [vmem:[%s0 + $0x1e8] sm:$0xff]
    %v101 = vld [vmem:[%s0 + $0x1f0] sm:$0xff]
    %v102 = vld [vmem:[%s0 + $0x1f8] sm:$0xff]
    %v103 = vld [vmem:[%s1] sm:$0xff]
    %v104 = vld [vmem:[%s1 + $0x8] sm:$0xff]
    %v105 = vld [vmem:[%s1 + $0x10] sm:$0xff]
    %v106 = vld [vmem:[%s1 + $0x18] sm:$0xff]
    %v107 = vld [vmem:[%s1 + $0x20] sm:$0xf]
    %v108 = vld [vmem:[%s2] sm:$0x1]
    %v110 = vlaneseq
    %v111 = vshrl.u32 %v110, 7
    %v112 = vsub.s32 0, %v111
    %v113 = vrot.slane %v108, %v112
    %vm115 = vcmask 293888
    %v117 = vsel %vm115, %v39, 0
    %v120 = vsel %vm115, %v40, 0
    %v123 = vsel %vm115, %v41, 0
    %v126 = vsel %vm115, %v42, 0
    %v129 = vsel %vm115, %v43, 0
    %v132 = vsel %vm115, %v44, 0
    %v135 = vsel %vm115, %v45, 0
    %v138 = vsel %vm115, %v46, 0
    %v141 = vsel %vm115, %v47, 0
    %v144 = vsel %vm115, %v48, 0
    %v147 = vsel %vm115, %v49, 0
    %v150 = vsel %vm115, %v50, 0
    %v153 = vsel %vm115, %v51, 0
    %v156 = vsel %vm115, %v52, 0
    %v159 = vsel %vm115, %v53, 0
    %v162 = vsel %vm115, %v54, 0
    %v165 = vsel %vm115, %v55, 0
    %v168 = vsel %vm115, %v56, 0
    %v171 = vsel %vm115, %v57, 0
    %v174 = vsel %vm115, %v58, 0
    %v177 = vsel %vm115, %v59, 0
    %v180 = vsel %vm115, %v60, 0
    %v183 = vsel %vm115, %v61, 0
    %v186 = vsel %vm115, %v62, 0
    %v189 = vsel %vm115, %v63, 0
    %v192 = vsel %vm115, %v64, 0
    %v195 = vsel %vm115, %v65, 0
    %v198 = vsel %vm115, %v66, 0
    %v201 = vsel %vm115, %v67, 0
    %v204 = vsel %vm115, %v68, 0
    %v207 = vsel %vm115, %v69, 0
    %v210 = vsel %vm115, %v70, 0
    %v213 = vsel %vm115, %v71, 0
    %v216 = vsel %vm115, %v72, 0
    %v219 = vsel %vm115, %v73, 0
    %v222 = vsel %vm115, %v74, 0
    %v225 = vsel %vm115, %v75, 0
    %v228 = vsel %vm115, %v76, 0
    %v231 = vsel %vm115, %v77, 0
    %v234 = vsel %vm115, %v78, 0
    %v237 = vsel %vm115, %v79, 0
    %v240 = vsel %vm115, %v80, 0
    %v243 = vsel %vm115, %v81, 0
    %v246 = vsel %vm115, %v82, 0
    %v249 = vsel %vm115, %v83, 0
    %v252 = vsel %vm115, %v84, 0
    %v255 = vsel %vm115, %v85, 0
    %v258 = vsel %vm115, %v86, 0
    %v261 = vsel %vm115, %v87, 0
    %v264 = vsel %vm115, %v88, 0
    %v267 = vsel %vm115, %v89, 0
    %v270 = vsel %vm115, %v90, 0
    %v273 = vsel %vm115, %v91, 0
    %v276 = vsel %vm115, %v92, 0
    %v279 = vsel %vm115, %v93, 0
    %v282 = vsel %vm115, %v94, 0
    %v285 = vsel %vm115, %v95, 0
    %v288 = vsel %vm115, %v96, 0
    %v291 = vsel %vm115, %v97, 0
    %v294 = vsel %vm115, %v98, 0
    %v297 = vsel %vm115, %v99, 0
    %v300 = vsel %vm115, %v100, 0
    %v303 = vsel %vm115, %v101, 0
    %v306 = vsel %vm115, %v102, 0
    %vm308 = vcmask 1043456
    %v310 = vsel %vm308, %v107, 0
    %312 = vmatprep.subr.mxu0 0.0
    %313 = vmatpush1.msra.mxu0 %v103
    %314 = vmatprep.subr.mxu0 0.0
    %315 = vmatpush1.msra.mxu0 %v104
    %316 = vmatprep.subr.mxu0 0.0
    %317 = vmatpush1.msra.mxu0 %v105
    %318 = vmatprep.subr.mxu0 0.0
    %319 = vmatpush1.msra.mxu0 %v106
    %320 = vmatprep.subr.mxu0 0.0
    %321 = vmatpush1.msra.mxu0 %v310
    %322 = vmatprep.subr.mxu0 0.0
    %323 = vmatpush1.msra.mxu0 0.0
    %324 = vmatprep.subr.mxu0 0.0
    %325 = vmatpush1.msra.mxu0 0.0
    %326 = vmatprep.subr.mxu0 0.0
    %327 = vmatpush1.msra.mxu0 0.0
    %328 = vmatprep.subr.mxu0 0.0
    %329 = vmatpush1.msra.mxu0 0.0
    %330 = vmatprep.subr.mxu0 0.0
    %331 = vmatpush1.msra.mxu0 0.0
    %332 = vmatprep.subr.mxu0 0.0
    %333 = vmatpush1.msra.mxu0 0.0
    %334 = vmatprep.subr.mxu0 0.0
    %335 = vmatpush1.msra.mxu0 0.0
    %336 = vmatprep.subr.mxu0 0.0
    %337 = vmatpush1.msra.mxu0 0.0
    %338 = vmatprep.subr.mxu0 0.0
    %339 = vmatpush1.msra.mxu0 0.0
    %340 = vmatprep.subr.mxu0 0.0
    %341 = vmatpush1.msra.mxu0 0.0
    %342 = vmatprep.subr.mxu0 0.0
    %343 = vmatpush1.msra.mxu0 0.0
    %344 = vmatprep.subr.mxu0 0.0
    %345 = vmatpush1.msra.mxu0 0.0
    %346 = vmatprep.subr.mxu0 0.0
    %347 = vmatpush1.msra.mxu0 0.0
    %348 = vmatprep.subr.mxu0 0.0
    %349 = vmatpush1.msra.mxu0 0.0
    %350 = vmatprep.subr.mxu0 0.0
    %351 = vmatpush1.msra.mxu0 0.0
    %352 = vmatprep.subr.mxu0 0.0
    %353 = vmatpush1.msra.mxu0 0.0
    %354 = vmatprep.subr.mxu0 0.0
    %355 = vmatpush1.msra.mxu0 0.0
    %356 = vmatprep.subr.mxu0 0.0
    %357 = vmatpush1.msra.mxu0 0.0
    %358 = vmatprep.subr.mxu0 0.0
    %359 = vmatpush1.msra.mxu0 0.0
    %360 = vmatprep.subr.mxu0 0.0
    %361 = vmatpush1.msra.mxu0 0.0
    %362 = vmatprep.subr.mxu0 0.0
    %363 = vmatpush1.msra.mxu0 0.0
    %364 = vmatprep.subr.mxu0 0.0
    %365 = vmatpush1.msra.mxu0 0.0
    %366 = vmatprep.subr.mxu0 0.0
    %367 = vmatpush1.msra.mxu0 0.0
    %368 = vmatprep.subr.mxu0 0.0
    %369 = vmatpush1.msra.mxu0 0.0
    %370 = vmatprep.subr.mxu0 0.0
    %371 = vmatpush1.msra.mxu0 0.0
    %372 = vmatprep.subr.mxu0 0.0
    %373 = vmatpush1.msra.mxu0 0.0
    %374 = vmatprep.subr.mxu0 0.0
    %375 = vmatpush1.msra.mxu0 0.0
    %376 = vmatprep.mubr.f32.mxu0 0.0
    %377 = vmatmul.mubr.f32.gmra.mrb[0].mxu0 %v117
    %v378 = vpop.f32.mrb[0].mxu0
    %v379 = vadd.f32 %v113, %v378
    %v380 = vpop.f32.mrb[0].mxu0
    %381 = vmatprep.mubr.f32.mxu0 0.0
    %382 = vmatmul.mubr.f32.gmra.mrb[0].mxu0 %v120
    %v383 = vpop.f32.mrb[0].mxu0
    %v384 = vadd.f32 %v113, %v383
    %v385 = vpop.f32.mrb[0].mxu0
    %386 = vmatprep.mubr.f32.mxu0 0.0
    %387 = vmatmul.mubr.f32.gmra.mrb[0].mxu0 %v123
    %v388 = vpop.f32.mrb[0].mxu0
    %v389 = vadd.f32 %v113, %v388
    %v390 = vpop.f32.mrb[0].mxu0
    %391 = vmatprep.mubr.f32.mxu0 0.0
    %392 = vmatmul.mubr.f32.gmra.mrb[0].mxu0 %v126
    %v393 = vpop.f32.mrb[0].mxu0
    %v394 = vadd.f32 %v113, %v393
    %v395 = vpop.f32.mrb[0].mxu0
    %396 = vmatprep.mubr.f32.mxu0 0.0
    %397 = vmatmul.mubr.f32.gmra.mrb[0].mxu0 %v129
    %v398 = vpop.f32.mrb[0].mxu0
    %v399 = vadd.f32 %v113, %v398
    %v400 = vpop.f32.mrb[0].mxu0
    %401 = vmatprep.mubr.f32.mxu0 0.0
    %402 = vmatmul.mubr.f32.gmra.mrb[0].mxu0 %v132
    %v403 = vpop.f32.mrb[0].mxu0
    %v404 = vadd.f32 %v113, %v403
    %v405 = vpop.f32.mrb[0].mxu0
    %406 = vmatprep.mubr.f32.mxu0 0.0
    %407 = vmatmul.mubr.f32.gmra.mrb[0].mxu0 %v135
    %v408 = vpop.f32.mrb[0].mxu0
    %v409 = vadd.f32 %v113, %v408
    %v410 = vpop.f32.mrb[0].mxu0
    %411 = vmatprep.mubr.f32.mxu0 0.0
    %412 = vmatmul.mubr.f32.gmra.mrb[0].mxu0 %v138
    %v413 = vpop.f32.mrb[0].mxu0
    %v414 = vadd.f32 %v113, %v413
    %v415 = vpop.f32.mrb[0].mxu0
    %416 = vmatprep.mubr.f32.mxu0 0.0
    %417 = vmatmul.mubr.f32.gmra.mrb[0].mxu0 %v141
    %v418 = vpop.f32.mrb[0].mxu0
    %v419 = vadd.f32 %v113, %v418
    %v420 = vpop.f32.mrb[0].mxu0
    %421 = vmatprep.mubr.f32.mxu0 0.0
    %422 = vmatmul.mubr.f32.gmra.mrb[0].mxu0 %v144
    %v423 = vpop.f32.mrb[0].mxu0
    %v424 = vadd.f32 %v113, %v423
    %v425 = vpop.f32.mrb[0].mxu0
    %426 = vmatprep.mubr.f32.mxu0 0.0
    %427 = vmatmul.mubr.f32.gmra.mrb[0].mxu0 %v147
    %v428 = vpop.f32.mrb[0].mxu0
    %v429 = vadd.f32 %v113, %v428
    %v430 = vpop.f32.mrb[0].mxu0
    %431 = vmatprep.mubr.f32.mxu0 0.0
    %432 = vmatmul.mubr.f32.gmra.mrb[0].mxu0 %v150
    %v433 = vpop.f32.mrb[0].mxu0
    %v434 = vadd.f32 %v113, %v433
    %v435 = vpop.f32.mrb[0].mxu0
    %436 = vmatprep.mubr.f32.mxu0 0.0
    %437 = vmatmul.mubr.f32.gmra.mrb[0].mxu0 %v153
    %v438 = vpop.f32.mrb[0].mxu0
    %v439 = vadd.f32 %v113, %v438
    %v440 = vpop.f32.mrb[0].mxu0
    %441 = vmatprep.mubr.f32.mxu0 0.0
    %442 = vmatmul.mubr.f32.gmra.mrb[0].mxu0 %v156
    %v443 = vpop.f32.mrb[0].mxu0
    %v444 = vadd.f32 %v113, %v443
    %v445 = vpop.f32.mrb[0].mxu0
    %446 = vmatprep.mubr.f32.mxu0 0.0
    %447 = vmatmul.mubr.f32.gmra.mrb[0].mxu0 %v159
    %v448 = vpop.f32.mrb[0].mxu0
    %v449 = vadd.f32 %v113, %v448
    %v450 = vpop.f32.mrb[0].mxu0
    %451 = vmatprep.mubr.f32.mxu0 0.0
    %452 = vmatmul.mubr.f32.gmra.mrb[0].mxu0 %v162
    %v453 = vpop.f32.mrb[0].mxu0
    %v454 = vadd.f32 %v113, %v453
    %v455 = vpop.f32.mrb[0].mxu0
    %456 = vmatprep.mubr.f32.mxu0 0.0
    %457 = vmatmul.mubr.f32.gmra.mrb[0].mxu0 %v165
    %v458 = vpop.f32.mrb[0].mxu0
    %v459 = vadd.f32 %v113, %v458
    %v460 = vpop.f32.mrb[0].mxu0
    %461 = vmatprep.mubr.f32.mxu0 0.0
    %462 = vmatmul.mubr.f32.gmra.mrb[0].mxu0 %v168
    %v463 = vpop.f32.mrb[0].mxu0
    %v464 = vadd.f32 %v113, %v463
    %v465 = vpop.f32.mrb[0].mxu0
    %466 = vmatprep.mubr.f32.mxu0 0.0
    %467 = vmatmul.mubr.f32.gmra.mrb[0].mxu0 %v171
    %v468 = vpop.f32.mrb[0].mxu0
    %v469 = vadd.f32 %v113, %v468
    %v470 = vpop.f32.mrb[0].mxu0
    %471 = vmatprep.mubr.f32.mxu0 0.0
    %472 = vmatmul.mubr.f32.gmra.mrb[0].mxu0 %v174
    %v473 = vpop.f32.mrb[0].mxu0
    %v474 = vadd.f32 %v113, %v473
    %v475 = vpop.f32.mrb[0].mxu0
    %476 = vmatprep.mubr.f32.mxu0 0.0
    %477 = vmatmul.mubr.f32.gmra.mrb[0].mxu0 %v177
    %v478 = vpop.f32.mrb[0].mxu0
    %v479 = vadd.f32 %v113, %v478
    %v480 = vpop.f32.mrb[0].mxu0
    %481 = vmatprep.mubr.f32.mxu0 0.0
    %482 = vmatmul.mubr.f32.gmra.mrb[0].mxu0 %v180
    %v483 = vpop.f32.mrb[0].mxu0
    %v484 = vadd.f32 %v113, %v483
    %v485 = vpop.f32.mrb[0].mxu0
    %486 = vmatprep.mubr.f32.mxu0 0.0
    %487 = vmatmul.mubr.f32.gmra.mrb[0].mxu0 %v183
    %v488 = vpop.f32.mrb[0].mxu0
    %v489 = vadd.f32 %v113, %v488
    %v490 = vpop.f32.mrb[0].mxu0
    %491 = vmatprep.mubr.f32.mxu0 0.0
    %492 = vmatmul.mubr.f32.gmra.mrb[0].mxu0 %v186
    %v493 = vpop.f32.mrb[0].mxu0
    %v494 = vadd.f32 %v113, %v493
    %v495 = vpop.f32.mrb[0].mxu0
    %496 = vmatprep.mubr.f32.mxu0 0.0
    %497 = vmatmul.mubr.f32.gmra.mrb[0].mxu0 %v189
    %v498 = vpop.f32.mrb[0].mxu0
    %v499 = vadd.f32 %v113, %v498
    %v500 = vpop.f32.mrb[0].mxu0
    %501 = vmatprep.mubr.f32.mxu0 0.0
    %502 = vmatmul.mubr.f32.gmra.mrb[0].mxu0 %v192
    %v503 = vpop.f32.mrb[0].mxu0
    %v504 = vadd.f32 %v113, %v503
    %v505 = vpop.f32.mrb[0].mxu0
    %506 = vmatprep.mubr.f32.mxu0 0.0
    %507 = vmatmul.mubr.f32.gmra.mrb[0].mxu0 %v195
    %v508 = vpop.f32.mrb[0].mxu0
    %v509 = vadd.f32 %v113, %v508
    %v510 = vpop.f32.mrb[0].mxu0
    %511 = vmatprep.mubr.f32.mxu0 0.0
    %512 = vmatmul.mubr.f32.gmra.mrb[0].mxu0 %v198
    %v513 = vpop.f32.mrb[0].mxu0
    %v514 = vadd.f32 %v113, %v513
    %v515 = vpop.f32.mrb[0].mxu0
    %516 = vmatprep.mubr.f32.mxu0 0.0
    %517 = vmatmul.mubr.f32.gmra.mrb[0].mxu0 %v201
    %v518 = vpop.f32.mrb[0].mxu0
    %v519 = vadd.f32 %v113, %v518
    %v520 = vpop.f32.mrb[0].mxu0
    %521 = vmatprep.mubr.f32.mxu0 0.0
    %522 = vmatmul.mubr.f32.gmra.mrb[0].mxu0 %v204
    %v523 = vpop.f32.mrb[0].mxu0
    %v524 = vadd.f32 %v113, %v523
    %v525 = vpop.f32.mrb[0].mxu0
    %526 = vmatprep.mubr.f32.mxu0 0.0
    %527 = vmatmul.mubr.f32.gmra.mrb[0].mxu0 %v207
    %v528 = vpop.f32.mrb[0].mxu0
    %v529 = vadd.f32 %v113, %v528
    %v530 = vpop.f32.mrb[0].mxu0
    %531 = vmatprep.mubr.f32.mxu0 0.0
    %532 = vmatmul.mubr.f32.gmra.mrb[0].mxu0 %v210
    %v533 = vpop.f32.mrb[0].mxu0
    %v534 = vadd.f32 %v113, %v533
    %v535 = vpop.f32.mrb[0].mxu0
    %536 = vmatprep.mubr.f32.mxu0 0.0
    %537 = vmatmul.mubr.f32.gmra.mrb[0].mxu0 %v213
    %v538 = vpop.f32.mrb[0].mxu0
    %v539 = vadd.f32 %v113, %v538
    %v540 = vpop.f32.mrb[0].mxu0
    %541 = vmatprep.mubr.f32.mxu0 0.0
    %542 = vmatmul.mubr.f32.gmra.mrb[0].mxu0 %v216
    %v543 = vpop.f32.mrb[0].mxu0
    %v544 = vadd.f32 %v113, %v543
    %v545 = vpop.f32.mrb[0].mxu0
    %546 = vmatprep.mubr.f32.mxu0 0.0
    %547 = vmatmul.mubr.f32.gmra.mrb[0].mxu0 %v219
    %v548 = vpop.f32.mrb[0].mxu0
    %v549 = vadd.f32 %v113, %v548
    %v550 = vpop.f32.mrb[0].mxu0
    %551 = vmatprep.mubr.f32.mxu0 0.0
    %552 = vmatmul.mubr.f32.gmra.mrb[0].mxu0 %v222
    %v553 = vpop.f32.mrb[0].mxu0
    %v554 = vadd.f32 %v113, %v553
    %v555 = vpop.f32.mrb[0].mxu0
    %556 = vmatprep.mubr.f32.mxu0 0.0
    %557 = vmatmul.mubr.f32.gmra.mrb[0].mxu0 %v225
    %v558 = vpop.f32.mrb[0].mxu0
    %v559 = vadd.f32 %v113, %v558
    %v560 = vpop.f32.mrb[0].mxu0
    %561 = vmatprep.mubr.f32.mxu0 0.0
    %562 = vmatmul.mubr.f32.gmra.mrb[0].mxu0 %v228
    %v563 = vpop.f32.mrb[0].mxu0
    %v564 = vadd.f32 %v113, %v563
    %v565 = vpop.f32.mrb[0].mxu0
    %566 = vmatprep.mubr.f32.mxu0 0.0
    %567 = vmatmul.mubr.f32.gmra.mrb[0].mxu0 %v231
    %v568 = vpop.f32.mrb[0].mxu0
    %v569 = vadd.f32 %v113, %v568
    %v570 = vpop.f32.mrb[0].mxu0
    %571 = vmatprep.mubr.f32.mxu0 0.0
    %572 = vmatmul.mubr.f32.gmra.mrb[0].mxu0 %v234
    %v573 = vpop.f32.mrb[0].mxu0
    %v574 = vadd.f32 %v113, %v573
    %v575 = vpop.f32.mrb[0].mxu0
    %576 = vmatprep.mubr.f32.mxu0 0.0
    %577 = vmatmul.mubr.f32.gmra.mrb[0].mxu0 %v237
    %v578 = vpop.f32.mrb[0].mxu0
    %v579 = vadd.f32 %v113, %v578
    %v580 = vpop.f32.mrb[0].mxu0
    %581 = vmatprep.mubr.f32.mxu0 0.0
    %582 = vmatmul.mubr.f32.gmra.mrb[0].mxu0 %v240
    %v583 = vpop.f32.mrb[0].mxu0
    %v584 = vadd.f32 %v113, %v583
    %v585 = vpop.f32.mrb[0].mxu0
    %586 = vmatprep.mubr.f32.mxu0 0.0
    %587 = vmatmul.mubr.f32.gmra.mrb[0].mxu0 %v243
    %v588 = vpop.f32.mrb[0].mxu0
    %v589 = vadd.f32 %v113, %v588
    %v590 = vpop.f32.mrb[0].mxu0
    %591 = vmatprep.mubr.f32.mxu0 0.0
    %592 = vmatmul.mubr.f32.gmra.mrb[0].mxu0 %v246
    %v593 = vpop.f32.mrb[0].mxu0
    %v594 = vadd.f32 %v113, %v593
    %v595 = vpop.f32.mrb[0].mxu0
    %596 = vmatprep.mubr.f32.mxu0 0.0
    %597 = vmatmul.mubr.f32.gmra.mrb[0].mxu0 %v249
    %v598 = vpop.f32.mrb[0].mxu0
    %v599 = vadd.f32 %v113, %v598
    %v600 = vpop.f32.mrb[0].mxu0
    %601 = vmatprep.mubr.f32.mxu0 0.0
    %602 = vmatmul.mubr.f32.gmra.mrb[0].mxu0 %v252
    %v603 = vpop.f32.mrb[0].mxu0
    %v604 = vadd.f32 %v113, %v603
    %v605 = vpop.f32.mrb[0].mxu0
    %606 = vmatprep.mubr.f32.mxu0 0.0
    %607 = vmatmul.mubr.f32.gmra.mrb[0].mxu0 %v255
    %v608 = vpop.f32.mrb[0].mxu0
    %v609 = vadd.f32 %v113, %v608
    %v610 = vpop.f32.mrb[0].mxu0
    %611 = vmatprep.mubr.f32.mxu0 0.0
    %612 = vmatmul.mubr.f32.gmra.mrb[0].mxu0 %v258
    %v613 = vpop.f32.mrb[0].mxu0
    %v614 = vadd.f32 %v113, %v613
    %v615 = vpop.f32.mrb[0].mxu0
    %616 = vmatprep.mubr.f32.mxu0 0.0
    %617 = vmatmul.mubr.f32.gmra.mrb[0].mxu0 %v261
    %v618 = vpop.f32.mrb[0].mxu0
    %v619 = vadd.f32 %v113, %v618
    %v620 = vpop.f32.mrb[0].mxu0
    %621 = vmatprep.mubr.f32.mxu0 0.0
    %622 = vmatmul.mubr.f32.gmra.mrb[0].mxu0 %v264
    %v623 = vpop.f32.mrb[0].mxu0
    %v624 = vadd.f32 %v113, %v623
    %v625 = vpop.f32.mrb[0].mxu0
    %626 = vmatprep.mubr.f32.mxu0 0.0
    %627 = vmatmul.mubr.f32.gmra.mrb[0].mxu0 %v267
    %v628 = vpop.f32.mrb[0].mxu0
    %v629 = vadd.f32 %v113, %v628
    %v630 = vpop.f32.mrb[0].mxu0
    %631 = vmatprep.mubr.f32.mxu0 0.0
    %632 = vmatmul.mubr.f32.gmra.mrb[0].mxu0 %v270
    %v633 = vpop.f32.mrb[0].mxu0
    %v634 = vadd.f32 %v113, %v633
    %v635 = vpop.f32.mrb[0].mxu0
    %636 = vmatprep.mubr.f32.mxu0 0.0
    %637 = vmatmul.mubr.f32.gmra.mrb[0].mxu0 %v273
    %v638 = vpop.f32.mrb[0].mxu0
    %v639 = vadd.f32 %v113, %v638
    %v640 = vpop.f32.mrb[0].mxu0
    %641 = vmatprep.mubr.f32.mxu0 0.0
    %642 = vmatmul.mubr.f32.gmra.mrb[0].mxu0 %v276
    %v643 = vpop.f32.mrb[0].mxu0
    %v644 = vadd.f32 %v113, %v643
    %v645 = vpop.f32.mrb[0].mxu0
    %646 = vmatprep.mubr.f32.mxu0 0.0
    %647 = vmatmul.mubr.f32.gmra.mrb[0].mxu0 %v279
    %v648 = vpop.f32.mrb[0].mxu0
    %v649 = vadd.f32 %v113, %v648
    %v650 = vpop.f32.mrb[0].mxu0
    %651 = vmatprep.mubr.f32.mxu0 0.0
    %652 = vmatmul.mubr.f32.gmra.mrb[0].mxu0 %v282
    %v653 = vpop.f32.mrb[0].mxu0
    %v654 = vadd.f32 %v113, %v653
    %v655 = vpop.f32.mrb[0].mxu0
    %656 = vmatprep.mubr.f32.mxu0 0.0
    %657 = vmatmul.mubr.f32.gmra.mrb[0].mxu0 %v285
    %v658 = vpop.f32.mrb[0].mxu0
    %v659 = vadd.f32 %v113, %v658
    %v660 = vpop.f32.mrb[0].mxu0
    %661 = vmatprep.mubr.f32.mxu0 0.0
    %662 = vmatmul.mubr.f32.gmra.mrb[0].mxu0 %v288
    %v663 = vpop.f32.mrb[0].mxu0
    %v664 = vadd.f32 %v113, %v663
    %v665 = vpop.f32.mrb[0].mxu0
    %666 = vmatprep.mubr.f32.mxu0 0.0
    %667 = vmatmul.mubr.f32.gmra.mrb[0].mxu0 %v291
    %v668 = vpop.f32.mrb[0].mxu0
    %v669 = vadd.f32 %v113, %v668
    %v670 = vpop.f32.mrb[0].mxu0
    %671 = vmatprep.mubr.f32.mxu0 0.0
    %672 = vmatmul.mubr.f32.gmra.mrb[0].mxu0 %v294
    %v673 = vpop.f32.mrb[0].mxu0
    %v674 = vadd.f32 %v113, %v673
    %v675 = vpop.f32.mrb[0].mxu0
    %676 = vmatprep.mubr.f32.mxu0 0.0
    %677 = vmatmul.mubr.f32.gmra.mrb[0].mxu0 %v297
    %v678 = vpop.f32.mrb[0].mxu0
    %v679 = vadd.f32 %v113, %v678
    %v680 = vpop.f32.mrb[0].mxu0
    %681 = vmatprep.mubr.f32.mxu0 0.0
    %682 = vmatmul.mubr.f32.gmra.mrb[0].mxu0 %v300
    %v683 = vpop.f32.mrb[0].mxu0
    %v684 = vadd.f32 %v113, %v683
    %v685 = vpop.f32.mrb[0].mxu0
    %686 = vmatprep.mubr.f32.mxu0 0.0
    %687 = vmatmul.mubr.f32.gmra.mrb[0].mxu0 %v303
    %v688 = vpop.f32.mrb[0].mxu0
    %v689 = vadd.f32 %v113, %v688
    %v690 = vpop.f32.mrb[0].mxu0
    %691 = vmatprep.mubr.f32.mxu0 0.0
    %692 = vmatmul.mubr.f32.gmra.mrb[0].mxu0 %v306
    %v693 = vpop.f32.mrb[0].mxu0
    %v694 = vadd.f32 %v113, %v693
    %v695 = vpop.f32.mrb[0].mxu0
    %696 = vdwg.mxu0
    %v697 = vmax.f32 %v379, 0.0
    %v698 = vmax.f32 %v384, 0.0
    %v699 = vmax.f32 %v389, 0.0
    %v700 = vmax.f32 %v394, 0.0
    %v701 = vmax.f32 %v399, 0.0
    %v702 = vmax.f32 %v404, 0.0
    %v703 = vmax.f32 %v409, 0.0
    %v704 = vmax.f32 %v414, 0.0
    %v705 = vmax.f32 %v419, 0.0
    %v706 = vmax.f32 %v424, 0.0
    %v707 = vmax.f32 %v429, 0.0
    %v708 = vmax.f32 %v434, 0.0
    %v709 = vmax.f32 %v439, 0.0
    %v710 = vmax.f32 %v444, 0.0
    %v711 = vmax.f32 %v449, 0.0
    %v712 = vmax.f32 %v454, 0.0
    %v713 = vmax.f32 %v459, 0.0
    %v714 = vmax.f32 %v464, 0.0
    %v715 = vmax.f32 %v469, 0.0
    %v716 = vmax.f32 %v474, 0.0
    %v717 = vmax.f32 %v479, 0.0
    %v718 = vmax.f32 %v484, 0.0
    %v719 = vmax.f32 %v489, 0.0
    %v720 = vmax.f32 %v494, 0.0
    %v721 = vmax.f32 %v499, 0.0
    %v722 = vmax.f32 %v504, 0.0
    %v723 = vmax.f32 %v509, 0.0
    %v724 = vmax.f32 %v514, 0.0
    %v725 = vmax.f32 %v519, 0.0
    %v726 = vmax.f32 %v524, 0.0
    %v727 = vmax.f32 %v529, 0.0
    %v728 = vmax.f32 %v534, 0.0
    %v729 = vmax.f32 %v539, 0.0
    %v730 = vmax.f32 %v544, 0.0
    %v731 = vmax.f32 %v549, 0.0
    %v732 = vmax.f32 %v554, 0.0
    %v733 = vmax.f32 %v559, 0.0
    %v734 = vmax.f32 %v564, 0.0
    %v735 = vmax.f32 %v569, 0.0
    %v736 = vmax.f32 %v574, 0.0
    %v737 = vmax.f32 %v579, 0.0
    %v738 = vmax.f32 %v584, 0.0
    %v739 = vmax.f32 %v589, 0.0
    %v740 = vmax.f32 %v594, 0.0
    %v741 = vmax.f32 %v599, 0.0
    %v742 = vmax.f32 %v604, 0.0
    %v743 = vmax.f32 %v609, 0.0
    %v744 = vmax.f32 %v614, 0.0
    %v745 = vmax.f32 %v619, 0.0
    %v746 = vmax.f32 %v624, 0.0
    %v747 = vmax.f32 %v629, 0.0
    %v748 = vmax.f32 %v634, 0.0
    %v749 = vmax.f32 %v639, 0.0
    %v750 = vmax.f32 %v644, 0.0
    %v751 = vmax.f32 %v649, 0.0
    %v752 = vmax.f32 %v654, 0.0
    %v753 = vmax.f32 %v659, 0.0
    %v754 = vmax.f32 %v664, 0.0
    %v755 = vmax.f32 %v669, 0.0
    %v756 = vmax.f32 %v674, 0.0
    %v757 = vmax.f32 %v679, 0.0
    %v758 = vmax.f32 %v684, 0.0
    %v759 = vmax.f32 %v689, 0.0
    %v760 = vmax.f32 %v694, 0.0
    %vm761 = vcmask 523264
    %762 = vst.msk [vmem:[#allocation2] sm:$0xff] %vm761, %v697
    %763 = vst.msk [vmem:[#allocation2 + $0x8] sm:$0xff] %vm761, %v698
    %764 = vst.msk [vmem:[#allocation2 + $0x10] sm:$0xff] %vm761, %v699
    %765 = vst.msk [vmem:[#allocation2 + $0x18] sm:$0xff] %vm761, %v700
    %766 = vst.msk [vmem:[#allocation2 + $0x20] sm:$0xff] %vm761, %v701
    %767 = vst.msk [vmem:[#allocation2 + $0x28] sm:$0xff] %vm761, %v702
    %768 = vst.msk [vmem:[#allocation2 + $0x30] sm:$0xff] %vm761, %v703
    %769 = vst.msk [vmem:[#allocation2 + $0x38] sm:$0xff] %vm761, %v704
    %770 = vst.msk [vmem:[#allocation2 + $0x40] sm:$0xff] %vm761, %v705
    %771 = vst.msk [vmem:[#allocation2 + $0x48] sm:$0xff] %vm761, %v706
    %772 = vst.msk [vmem:[#allocation2 + $0x50] sm:$0xff] %vm761, %v707
    %773 = vst.msk [vmem:[#allocation2 + $0x58] sm:$0xff] %vm761, %v708
    %774 = vst.msk [vmem:[#allocation2 + $0x60] sm:$0xff] %vm761, %v709
    %775 = vst.msk [vmem:[#allocation2 + $0x68] sm:$0xff] %vm761, %v710
    %776 = vst.msk [vmem:[#allocation2 + $0x70] sm:$0xff] %vm761, %v711
    %777 = vst.msk [vmem:[#allocation2 + $0x78] sm:$0xff] %vm761, %v712
    %778 = vst.msk [vmem:[#allocation2 + $0x80] sm:$0xff] %vm761, %v713
    %779 = vst.msk [vmem:[#allocation2 + $0x88] sm:$0xff] %vm761, %v714
    %780 = vst.msk [vmem:[#allocation2 + $0x90] sm:$0xff] %vm761, %v715
    %781 = vst.msk [vmem:[#allocation2 + $0x98] sm:$0xff] %vm761, %v716
    %782 = vst.msk [vmem:[#allocation2 + $0xa0] sm:$0xff] %vm761, %v717
    %783 = vst.msk [vmem:[#allocation2 + $0xa8] sm:$0xff] %vm761, %v718
    %784 = vst.msk [vmem:[#allocation2 + $0xb0] sm:$0xff] %vm761, %v719
    %785 = vst.msk [vmem:[#allocation2 + $0xb8] sm:$0xff] %vm761, %v720
    %786 = vst.msk [vmem:[#allocation2 + $0xc0] sm:$0xff] %vm761, %v721
    %787 = vst.msk [vmem:[#allocation2 + $0xc8] sm:$0xff] %vm761, %v722
    %788 = vst.msk [vmem:[#allocation2 + $0xd0] sm:$0xff] %vm761, %v723
    %789 = vst.msk [vmem:[#allocation2 + $0xd8] sm:$0xff] %vm761, %v724
    %790 = vst.msk [vmem:[#allocation2 + $0xe0] sm:$0xff] %vm761, %v725
    %791 = vst.msk [vmem:[#allocation2 + $0xe8] sm:$0xff] %vm761, %v726
    %792 = vst.msk [vmem:[#allocation2 + $0xf0] sm:$0xff] %vm761, %v727
    %793 = vst.msk [vmem:[#allocation2 + $0xf8] sm:$0xff] %vm761, %v728
    %794 = vst.msk [vmem:[#allocation2 + $0x100] sm:$0xff] %vm761, %v729
    %795 = vst.msk [vmem:[#allocation2 + $0x108] sm:$0xff] %vm761, %v730
    %796 = vst.msk [vmem:[#allocation2 + $0x110] sm:$0xff] %vm761, %v731
    %797 = vst.msk [vmem:[#allocation2 + $0x118] sm:$0xff] %vm761, %v732
    %798 = vst.msk [vmem:[#allocation2 + $0x120] sm:$0xff] %vm761, %v733
    %799 = vst.msk [vmem:[#allocation2 + $0x128] sm:$0xff] %vm761, %v734
    %800 = vst.msk [vmem:[#allocation2 + $0x130] sm:$0xff] %vm761, %v735
    %801 = vst.msk [vmem:[#allocation2 + $0x138] sm:$0xff] %vm761, %v736
    %802 = vst.msk [vmem:[#allocation2 + $0x140] sm:$0xff] %vm761, %v737
    %803 = vst.msk [vmem:[#allocation2 + $0x148] sm:$0xff] %vm761, %v738
    %804 = vst.msk [vmem:[#allocation2 + $0x150] sm:$0xff] %vm761, %v739
    %805 = vst.msk [vmem:[#allocation2 + $0x158] sm:$0xff] %vm761, %v740
    %806 = vst.msk [vmem:[#allocation2 + $0x160] sm:$0xff] %vm761, %v741
    %807 = vst.msk [vmem:[#allocation2 + $0x168] sm:$0xff] %vm761, %v742
    %808 = vst.msk [vmem:[#allocation2 + $0x170] sm:$0xff] %vm761, %v743
    %809 = vst.msk [vmem:[#allocation2 + $0x178] sm:$0xff] %vm761, %v744
    %810 = vst.msk [vmem:[#allocation2 + $0x180] sm:$0xff] %vm761, %v745
    %811 = vst.msk [vmem:[#allocation2 + $0x188] sm:$0xff] %vm761, %v746
    %812 = vst.msk [vmem:[#allocation2 + $0x190] sm:$0xff] %vm761, %v747
    %813 = vst.msk [vmem:[#allocation2 + $0x198] sm:$0xff] %vm761, %v748
    %814 = vst.msk [vmem:[#allocation2 + $0x1a0] sm:$0xff] %vm761, %v749
    %815 = vst.msk [vmem:[#allocation2 + $0x1a8] sm:$0xff] %vm761, %v750
    %816 = vst.msk [vmem:[#allocation2 + $0x1b0] sm:$0xff] %vm761, %v751
    %817 = vst.msk [vmem:[#allocation2 + $0x1b8] sm:$0xff] %vm761, %v752
    %818 = vst.msk [vmem:[#allocation2 + $0x1c0] sm:$0xff] %vm761, %v753
    %819 = vst.msk [vmem:[#allocation2 + $0x1c8] sm:$0xff] %vm761, %v754
    %820 = vst.msk [vmem:[#allocation2 + $0x1d0] sm:$0xff] %vm761, %v755
    %821 = vst.msk [vmem:[#allocation2 + $0x1d8] sm:$0xff] %vm761, %v756
    %822 = vst.msk [vmem:[#allocation2 + $0x1e0] sm:$0xff] %vm761, %v757
    %823 = vst.msk [vmem:[#allocation2 + $0x1e8] sm:$0xff] %vm761, %v758
    %824 = vst.msk [vmem:[#allocation2 + $0x1f0] sm:$0xff] %vm761, %v759
    %825 = vst.msk [vmem:[#allocation2 + $0x1f8] sm:$0xff] %vm761, %v760
    %826 = vst.msk [vmem:[#allocation3] sm:$0xff] %vm761, 0.0
    %827 = vst.msk [vmem:[#allocation3 + $0x8] sm:$0xff] %vm761, 0.0
    %828 = vst.msk [vmem:[#allocation3 + $0x10] sm:$0xff] %vm761, 0.0
    %829 = vst.msk [vmem:[#allocation3 + $0x18] sm:$0xff] %vm761, 0.0
    %830 = vst.msk [vmem:[#allocation3 + $0x20] sm:$0xff] %vm761, 0.0
    %831 = vst.msk [vmem:[#allocation3 + $0x28] sm:$0xff] %vm761, 0.0
    %832 = vst.msk [vmem:[#allocation3 + $0x30] sm:$0xff] %vm761, 0.0
    %833 = vst.msk [vmem:[#allocation3 + $0x38] sm:$0xff] %vm761, 0.0
    %834 = vst.msk [vmem:[#allocation3 + $0x40] sm:$0xff] %vm761, 0.0
    %835 = vst.msk [vmem:[#allocation3 + $0x48] sm:$0xff] %vm761, 0.0
    %836 = vst.msk [vmem:[#allocation3 + $0x50] sm:$0xff] %vm761, 0.0
    %837 = vst.msk [vmem:[#allocation3 + $0x58] sm:$0xff] %vm761, 0.0
    %838 = vst.msk [vmem:[#allocation3 + $0x60] sm:$0xff] %vm761, 0.0
    %839 = vst.msk [vmem:[#allocation3 + $0x68] sm:$0xff] %vm761, 0.0
    %840 = vst.msk [vmem:[#allocation3 + $0x70] sm:$0xff] %vm761, 0.0
    %841 = vst.msk [vmem:[#allocation3 + $0x78] sm:$0xff] %vm761, 0.0
    %842 = vst.msk [vmem:[#allocation3 + $0x80] sm:$0xff] %vm761, 0.0
    %843 = vst.msk [vmem:[#allocation3 + $0x88] sm:$0xff] %vm761, 0.0
    %844 = vst.msk [vmem:[#allocation3 + $0x90] sm:$0xff] %vm761, 0.0
    %845 = vst.msk [vmem:[#allocation3 + $0x98] sm:$0xff] %vm761, 0.0
    %846 = vst.msk [vmem:[#allocation3 + $0xa0] sm:$0xff] %vm761, 0.0
    %847 = vst.msk [vmem:[#allocation3 + $0xa8] sm:$0xff] %vm761, 0.0
    %848 = vst.msk [vmem:[#allocation3 + $0xb0] sm:$0xff] %vm761, 0.0
    %849 = vst.msk [vmem:[#allocation3 + $0xb8] sm:$0xff] %vm761, 0.0
    %850 = vst.msk [vmem:[#allocation3 + $0xc0] sm:$0xff] %vm761, 0.0
    %851 = vst.msk [vmem:[#allocation3 + $0xc8] sm:$0xff] %vm761, 0.0
    %852 = vst.msk [vmem:[#allocation3 + $0xd0] sm:$0xff] %vm761, 0.0
    %853 = vst.msk [vmem:[#allocation3 + $0xd8] sm:$0xff] %vm761, 0.0
    %v854 = vld [vmem:[#allocation2] ss:$2 sm:$0xff]
    %s855 = scalar_lea.vmem [#allocation2], 1
    %v856 = vld [vmem:[%s855] ss:$2 sm:$0xff]
    %v857 = vmax.f32 %v854, %v856
    %s858 = scalar_lea.vmem [#allocation2], 16
    %v859 = vld [vmem:[%s858] ss:$2 sm:$0xff]
    %v860 = vmax.f32 %v857, %v859
    %s861 = scalar_lea.vmem [#allocation2], 17
    %v862 = vld [vmem:[%s861] ss:$2 sm:$0xff]
    %v863 = vmax.f32 %v860, %v862
    %864 = vst.msk [vmem:[#allocation3 + $0xb] sm:$0xff] %vm761, %v863
    %s865 = scalar_lea.vmem [#allocation2], 32
    %v866 = vld [vmem:[%s865] ss:$2 sm:$0xff]
    %s867 = scalar_lea.vmem [#allocation2], 33
    %v868 = vld [vmem:[%s867] ss:$2 sm:$0xff]
    %v869 = vmax.f32 %v866, %v868
    %s870 = scalar_lea.vmem [#allocation2], 48
    %v871 = vld [vmem:[%s870] ss:$2 sm:$0xff]
    %v872 = vmax.f32 %v869, %v871
    %s873 = scalar_lea.vmem [#allocation2], 49
    %v874 = vld [vmem:[%s873] ss:$2 sm:$0xff]
    %v875 = vmax.f32 %v872, %v874
    %876 = vst.msk [vmem:[#allocation3 + $0x15] sm:$0xff] %vm761, %v875
    %s877 = scalar_lea.vmem [#allocation2], 64
    %v878 = vld [vmem:[%s877] ss:$2 sm:$0xff]
    %s879 = scalar_lea.vmem [#allocation2], 65
    %v880 = vld [vmem:[%s879] ss:$2 sm:$0xff]
    %v881 = vmax.f32 %v878, %v880
    %s882 = scalar_lea.vmem [#allocation2], 80
    %v883 = vld [vmem:[%s882] ss:$2 sm:$0xff]
    %v884 = vmax.f32 %v881, %v883
    %s885 = scalar_lea.vmem [#allocation2], 81
    %v886 = vld [vmem:[%s885] ss:$2 sm:$0xff]
    %v887 = vmax.f32 %v884, %v886
    %888 = vst.msk [vmem:[#allocation3 + $0x1f] sm:$0xff] %vm761, %v887
    %s889 = scalar_lea.vmem [#allocation2], 96
    %v890 = vld [vmem:[%s889] ss:$2 sm:$0xff]
    %s891 = scalar_lea.vmem [#allocation2], 97
    %v892 = vld [vmem:[%s891] ss:$2 sm:$0xff]
    %v893 = vmax.f32 %v890, %v892
    %s894 = scalar_lea.vmem [#allocation2], 112
    %v895 = vld [vmem:[%s894] ss:$2 sm:$0xff]
    %v896 = vmax.f32 %v893, %v895
    %s897 = scalar_lea.vmem [#allocation2], 113
    %v898 = vld [vmem:[%s897] ss:$2 sm:$0xff]
    %v899 = vmax.f32 %v896, %v898
    %900 = vst.msk [vmem:[#allocation3 + $0x29] sm:$0xff] %vm761, %v899
    %s901 = scalar_lea.vmem [#allocation2], 128
    %v902 = vld [vmem:[%s901] ss:$2 sm:$0xff]
    %s903 = scalar_lea.vmem [#allocation2], 129
    %v904 = vld [vmem:[%s903] ss:$2 sm:$0xff]
    %v905 = vmax.f32 %v902, %v904
    %s906 = scalar_lea.vmem [#allocation2], 144
    %v907 = vld [vmem:[%s906] ss:$2 sm:$0xff]
    %v908 = vmax.f32 %v905, %v907
    %s909 = scalar_lea.vmem [#allocation2], 145
    %v910 = vld [vmem:[%s909] ss:$2 sm:$0xff]
    %v911 = vmax.f32 %v908, %v910
    %912 = vst.msk [vmem:[#allocation3 + $0x33] sm:$0xff] %vm761, %v911
    %s913 = scalar_lea.vmem [#allocation2], 160
    %v914 = vld [vmem:[%s913] ss:$2 sm:$0xff]
    %s915 = scalar_lea.vmem [#allocation2], 161
    %v916 = vld [vmem:[%s915] ss:$2 sm:$0xff]
    %v917 = vmax.f32 %v914, %v916
    %s918 = scalar_lea.vmem [#allocation2], 176
    %v919 = vld [vmem:[%s918] ss:$2 sm:$0xff]
    %v920 = vmax.f32 %v917, %v919
    %s921 = scalar_lea.vmem [#allocation2], 177
    %v922 = vld [vmem:[%s921] ss:$2 sm:$0xff]
    %v923 = vmax.f32 %v920, %v922
    %924 = vst.msk [vmem:[#allocation3 + $0x3d] sm:$0xff] %vm761, %v923
    %s925 = scalar_lea.vmem [#allocation2], 192
    %v926 = vld [vmem:[%s925] ss:$2 sm:$0xff]
    %s927 = scalar_lea.vmem [#allocation2], 193
    %v928 = vld [vmem:[%s927] ss:$2 sm:$0xff]
    %v929 = vmax.f32 %v926, %v928
    %s930 = scalar_lea.vmem [#allocation2], 208
    %v931 = vld [vmem:[%s930] ss:$2 sm:$0xff]
    %v932 = vmax.f32 %v929, %v931
    %s933 = scalar_lea.vmem [#allocation2], 209
    %v934 = vld [vmem:[%s933] ss:$2 sm:$0xff]
    %v935 = vmax.f32 %v932, %v934
    %936 = vst.msk [vmem:[#allocation3 + $0x47] sm:$0xff] %vm761, %v935
    %s937 = scalar_lea.vmem [#allocation2], 224
    %v938 = vld [vmem:[%s937] ss:$2 sm:$0xff]
    %s939 = scalar_lea.vmem [#allocation2], 225
    %v940 = vld [vmem:[%s939] ss:$2 sm:$0xff]
    %v941 = vmax.f32 %v938, %v940
    %s942 = scalar_lea.vmem [#allocation2], 240
    %v943 = vld [vmem:[%s942] ss:$2 sm:$0xff]
    %v944 = vmax.f32 %v941, %v943
    %s945 = scalar_lea.vmem [#allocation2], 241
    %v946 = vld [vmem:[%s945] ss:$2 sm:$0xff]
    %v947 = vmax.f32 %v944, %v946
    %948 = vst.msk [vmem:[#allocation3 + $0x51] sm:$0xff] %vm761, %v947
    %s949 = scalar_lea.vmem [#allocation2], 256
    %v950 = vld [vmem:[%s949] ss:$2 sm:$0xff]
    %s951 = scalar_lea.vmem [#allocation2], 257
    %v952 = vld [vmem:[%s951] ss:$2 sm:$0xff]
    %v953 = vmax.f32 %v950, %v952
    %s954 = scalar_lea.vmem [#allocation2], 272
    %v955 = vld [vmem:[%s954] ss:$2 sm:$0xff]
    %v956 = vmax.f32 %v953, %v955
    %s957 = scalar_lea.vmem [#allocation2], 273
    %v958 = vld [vmem:[%s957] ss:$2 sm:$0xff]
    %v959 = vmax.f32 %v956, %v958
    %960 = vst.msk [vmem:[#allocation3 + $0x6f] sm:$0xff] %vm761, %v959
    %s961 = scalar_lea.vmem [#allocation2], 288
    %v962 = vld [vmem:[%s961] ss:$2 sm:$0xff]
    %s963 = scalar_lea.vmem [#allocation2], 289
    %v964 = vld [vmem:[%s963] ss:$2 sm:$0xff]
    %v965 = vmax.f32 %v962, %v964
    %s966 = scalar_lea.vmem [#allocation2], 304
    %v967 = vld [vmem:[%s966] ss:$2 sm:$0xff]
    %v968 = vmax.f32 %v965, %v967
    %s969 = scalar_lea.vmem [#allocation2], 305
    %v970 = vld [vmem:[%s969] ss:$2 sm:$0xff]
    %v971 = vmax.f32 %v968, %v970
    %972 = vst.msk [vmem:[#allocation3 + $0x79] sm:$0xff] %vm761, %v971
    %s973 = scalar_lea.vmem [#allocation2], 320
    %v974 = vld [vmem:[%s973] ss:$2 sm:$0xff]
    %s975 = scalar_lea.vmem [#allocation2], 321
    %v976 = vld [vmem:[%s975] ss:$2 sm:$0xff]
    %v977 = vmax.f32 %v974, %v976
    %s978 = scalar_lea.vmem [#allocation2], 336
    %v979 = vld [vmem:[%s978] ss:$2 sm:$0xff]
    %v980 = vmax.f32 %v977, %v979
    %s981 = scalar_lea.vmem [#allocation2], 337
    %v982 = vld [vmem:[%s981] ss:$2 sm:$0xff]
    %v983 = vmax.f32 %v980, %v982
    %984 = vst.msk [vmem:[#allocation3 + $0x83] sm:$0xff] %vm761, %v983
    %s985 = scalar_lea.vmem [#allocation2], 352
    %v986 = vld [vmem:[%s985] ss:$2 sm:$0xff]
    %s987 = scalar_lea.vmem [#allocation2], 353
    %v988 = vld [vmem:[%s987] ss:$2 sm:$0xff]
    %v989 = vmax.f32 %v986, %v988
    %s990 = scalar_lea.vmem [#allocation2], 368
    %v991 = vld [vmem:[%s990] ss:$2 sm:$0xff]
    %v992 = vmax.f32 %v989, %v991
    %s993 = scalar_lea.vmem [#allocation2], 369
    %v994 = vld [vmem:[%s993] ss:$2 sm:$0xff]
    %v995 = vmax.f32 %v992, %v994
    %996 = vst.msk [vmem:[#allocation3 + $0x8d] sm:$0xff] %vm761, %v995
    %s997 = scalar_lea.vmem [#allocation2], 384
    %v998 = vld [vmem:[%s997] ss:$2 sm:$0xff]
    %s999 = scalar_lea.vmem [#allocation2], 385
    %v1000 = vld [vmem:[%s999] ss:$2 sm:$0xff]
    %v1001 = vmax.f32 %v998, %v1000
    %s1002 = scalar_lea.vmem [#allocation2], 400
    %v1003 = vld [vmem:[%s1002] ss:$2 sm:$0xff]
    %v1004 = vmax.f32 %v1001, %v1003
    %s1005 = scalar_lea.vmem [#allocation2], 401
    %v1006 = vld [vmem:[%s1005] ss:$2 sm:$0xff]
    %v1007 = vmax.f32 %v1004, %v1006
    %1008 = vst.msk [vmem:[#allocation3 + $0x97] sm:$0xff] %vm761, %v1007
    %s1009 = scalar_lea.vmem [#allocation2], 416
    %v1010 = vld [vmem:[%s1009] ss:$2 sm:$0xff]
    %s1011 = scalar_lea.vmem [#allocation2], 417
    %v1012 = vld [vmem:[%s1011] ss:$2 sm:$0xff]
    %v1013 = vmax.f32 %v1010, %v1012
    %s1014 = scalar_lea.vmem [#allocation2], 432
    %v1015 = vld [vmem:[%s1014] ss:$2 sm:$0xff]
    %v1016 = vmax.f32 %v1013, %v1015
    %s1017 = scalar_lea.vmem [#allocation2], 433
    %v1018 = vld [vmem:[%s1017] ss:$2 sm:$0xff]
    %v1019 = vmax.f32 %v1016, %v1018
    %1020 = vst.msk [vmem:[#allocation3 + $0xa1] sm:$0xff] %vm761, %v1019
    %s1021 = scalar_lea.vmem [#allocation2], 448
    %v1022 = vld [vmem:[%s1021] ss:$2 sm:$0xff]
    %s1023 = scalar_lea.vmem [#allocation2], 449
    %v1024 = vld [vmem:[%s1023] ss:$2 sm:$0xff]
    %v1025 = vmax.f32 %v1022, %v1024
    %s1026 = scalar_lea.vmem [#allocation2], 464
    %v1027 = vld [vmem:[%s1026] ss:$2 sm:$0xff]
    %v1028 = vmax.f32 %v1025, %v1027
    %s1029 = scalar_lea.vmem [#allocation2], 465
    %v1030 = vld [vmem:[%s1029] ss:$2 sm:$0xff]
    %v1031 = vmax.f32 %v1028, %v1030
    %1032 = vst.msk [vmem:[#allocation3 + $0xab] sm:$0xff] %vm761, %v1031
    %s1033 = scalar_lea.vmem [#allocation2], 480
    %v1034 = vld [vmem:[%s1033] ss:$2 sm:$0xff]
    %s1035 = scalar_lea.vmem [#allocation2], 481
    %v1036 = vld [vmem:[%s1035] ss:$2 sm:$0xff]
    %v1037 = vmax.f32 %v1034, %v1036
    %s1038 = scalar_lea.vmem [#allocation2], 496
    %v1039 = vld [vmem:[%s1038] ss:$2 sm:$0xff]
    %v1040 = vmax.f32 %v1037, %v1039
    %s1041 = scalar_lea.vmem [#allocation2], 497
    %v1042 = vld [vmem:[%s1041] ss:$2 sm:$0xff]
    %v1043 = vmax.f32 %v1040, %v1042
    %1044 = vst.msk [vmem:[#allocation3 + $0xb5] sm:$0xff] %vm761, %v1043
    %v1045 = vld [vmem:[#allocation3] sm:$0xff]
    %v1046 = vld [vmem:[#allocation3 + $0x8] sm:$0xff]
    %v1047 = vld [vmem:[#allocation3 + $0x10] sm:$0xff]
    %v1048 = vld [vmem:[#allocation3 + $0x18] sm:$0xff]
    %v1049 = vld [vmem:[#allocation3 + $0x20] sm:$0xff]
    %v1050 = vld [vmem:[#allocation3 + $0x28] sm:$0xff]
    %v1051 = vld [vmem:[#allocation3 + $0x30] sm:$0xff]
    %v1052 = vld [vmem:[#allocation3 + $0x38] sm:$0xff]
    %v1053 = vld [vmem:[#allocation3 + $0x40] sm:$0xff]
    %v1054 = vld [vmem:[#allocation3 + $0x48] sm:$0xff]
    %v1055 = vld [vmem:[#allocation3 + $0x50] sm:$0xff]
    %v1056 = vld [vmem:[#allocation3 + $0x58] sm:$0xff]
    %v1057 = vld [vmem:[#allocation3 + $0x60] sm:$0xff]
    %v1058 = vld [vmem:[#allocation3 + $0x68] sm:$0xff]
    %v1059 = vld [vmem:[#allocation3 + $0x70] sm:$0xff]
    %v1060 = vld [vmem:[#allocation3 + $0x78] sm:$0xff]
    %v1061 = vld [vmem:[#allocation3 + $0x80] sm:$0xff]
    %v1062 = vld [vmem:[#allocation3 + $0x88] sm:$0xff]
    %v1063 = vld [vmem:[#allocation3 + $0x90] sm:$0xff]
    %v1064 = vld [vmem:[#allocation3 + $0x98] sm:$0xff]
    %v1065 = vld [vmem:[#allocation3 + $0xa0] sm:$0xff]
    %v1066 = vld [vmem:[#allocation3 + $0xa8] sm:$0xff]
    %v1067 = vld [vmem:[#allocation3 + $0xb0] sm:$0xff]
    %v1068 = vld [vmem:[#allocation3 + $0xb8] sm:$0xff]
    %v1069 = vld [vmem:[#allocation3 + $0xc0] sm:$0xff]
    %v1070 = vld [vmem:[%s3] sm:$0xff]
    %v1071 = vld [vmem:[%s3 + $0x8] sm:$0xff]
    %v1072 = vld [vmem:[%s3 + $0x10] sm:$0xff]
    %v1073 = vld [vmem:[%s3 + $0x18] sm:$0xff]
    %v1074 = vld [vmem:[%s3 + $0x20] sm:$0xff]
    %v1075 = vld [vmem:[%s3 + $0x28] sm:$0xff]
    %v1076 = vld [vmem:[%s3 + $0x30] sm:$0xff]
    %v1077 = vld [vmem:[%s3 + $0x38] sm:$0xff]
    %v1078 = vld [vmem:[#allocation3 + $0x1] sm:$0xff]
    %v1079 = vld [vmem:[#allocation3 + $0x9] sm:$0xff]
    %v1080 = vld [vmem:[#allocation3 + $0x11] sm:$0xff]
    %v1081 = vld [vmem:[#allocation3 + $0x19] sm:$0xff]
    %v1082 = vld [vmem:[#allocation3 + $0x21] sm:$0xff]
    %v1083 = vld [vmem:[#allocation3 + $0x29] sm:$0xff]
    %v1084 = vld [vmem:[#allocation3 + $0x31] sm:$0xff]
    %v1085 = vld [vmem:[#allocation3 + $0x39] sm:$0xff]
    %v1086 = vld [vmem:[#allocation3 + $0x41] sm:$0xff]
    %v1087 = vld [vmem:[#allocation3 + $0x49] sm:$0xff]
    %v1088 = vld [vmem:[#allocation3 + $0x51] sm:$0xff]
    %v1089 = vld [vmem:[#allocation3 + $0x59] sm:$0xff]
    %v1090 = vld [vmem:[#allocation3 + $0x61] sm:$0xff]
    %v1091 = vld [vmem:[#allocation3 + $0x69] sm:$0xff]
    %v1092 = vld [vmem:[#allocation3 + $0x71] sm:$0xff]
    %v1093 = vld [vmem:[#allocation3 + $0x79] sm:$0xff]
    %v1094 = vld [vmem:[#allocation3 + $0x81] sm:$0xff]
    %v1095 = vld [vmem:[#allocation3 + $0x89] sm:$0xff]
    %v1096 = vld [vmem:[#allocation3 + $0x91] sm:$0xff]
    %v1097 = vld [vmem:[#allocation3 + $0x99] sm:$0xff]
    %v1098 = vld [vmem:[#allocation3 + $0xa1] sm:$0xff]
    %v1099 = vld [vmem:[#allocation3 + $0xa9] sm:$0xff]
    %v1100 = vld [vmem:[#allocation3 + $0xb1] sm:$0xff]
    %v1101 = vld [vmem:[#allocation3 + $0xb9] sm:$0xff]
    %v1102 = vld [vmem:[#allocation3 + $0xc1] sm:$0xff]
    %s1103 = scalar_lea.vmem %s3, 64
    %v1104 = vld [vmem:[%s1103] sm:$0xff]
    %v1105 = vld [vmem:[%s1103 + $0x8] sm:$0xff]
    %v1106 = vld [vmem:[%s1103 + $0x10] sm:$0xff]
    %v1107 = vld [vmem:[%s1103 + $0x18] sm:$0xff]
    %v1108 = vld [vmem:[%s1103 + $0x20] sm:$0xff]
    %v1109 = vld [vmem:[%s1103 + $0x28] sm:$0xff]
    %v1110 = vld [vmem:[%s1103 + $0x30] sm:$0xff]
    %v1111 = vld [vmem:[%s1103 + $0x38] sm:$0xff]
    %v1113 = vsel %vm761, %v1078, 0
    %v1116 = vsel %vm761, %v1079, 0
    %v1119 = vsel %vm761, %v1080, 0
    %v1122 = vsel %vm761, %v1081, 0
    %v1125 = vsel %vm761, %v1082, 0
    %v1128 = vsel %vm761, %v1083, 0
    %v1131 = vsel %vm761, %v1084, 0
    %v1134 = vsel %vm761, %v1085, 0
    %v1137 = vsel %vm761, %v1086, 0
    %v1140 = vsel %vm761, %v1087, 0
    %v1143 = vsel %vm761, %v1088, 0
    %v1146 = vsel %vm761, %v1089, 0
    %v1149 = vsel %vm761, %v1090, 0
    %v1152 = vsel %vm761, %v1091, 0
    %v1155 = vsel %vm761, %v1092, 0
    %v1158 = vsel %vm761, %v1093, 0
    %v1161 = vsel %vm761, %v1094, 0
    %v1164 = vsel %vm761, %v1095, 0
    %v1167 = vsel %vm761, %v1096, 0
    %v1170 = vsel %vm761, %v1097, 0
    %v1173 = vsel %vm761, %v1098, 0
    %v1176 = vsel %vm761, %v1099, 0
    %v1179 = vsel %vm761, %v1100, 0
    %v1182 = vsel %vm761, %v1101, 0
    %v1185 = vsel %vm761, %v1102, 0
    %1187 = vmatprep.subr.mxu0 0.0
    %1188 = vmatpush1.msra.mxu0 %v1104
    %1189 = vmatprep.subr.mxu0 0.0
    %1190 = vmatpush1.msra.mxu0 %v1105
    %1191 = vmatprep.subr.mxu0 0.0
    %1192 = vmatpush1.msra.mxu0 %v1106
    %1193 = vmatprep.subr.mxu0 0.0
    %1194 = vmatpush1.msra.mxu0 %v1107
    %1195 = vmatprep.subr.mxu0 0.0
    %1196 = vmatpush1.msra.mxu0 %v1108
    %1197 = vmatprep.subr.mxu0 0.0
    %1198 = vmatpush1.msra.mxu0 %v1109
    %1199 = vmatprep.subr.mxu0 0.0
    %1200 = vmatpush1.msra.mxu0 %v1110
    %1201 = vmatprep.subr.mxu0 0.0
    %1202 = vmatpush1.msra.mxu0 %v1111
    %1203 = vmatprep.subr.mxu0 0.0
    %1204 = vmatpush1.msra.mxu0 0.0
    %1205 = vmatprep.subr.mxu0 0.0
    %1206 = vmatpush1.msra.mxu0 0.0
    %1207 = vmatprep.subr.mxu0 0.0
    %1208 = vmatpush1.msra.mxu0 0.0
    %1209 = vmatprep.subr.mxu0 0.0
    %1210 = vmatpush1.msra.mxu0 0.0
    %1211 = vmatprep.subr.mxu0 0.0
    %1212 = vmatpush1.msra.mxu0 0.0
    %1213 = vmatprep.subr.mxu0 0.0
    %1214 = vmatpush1.msra.mxu0 0.0
    %1215 = vmatprep.subr.mxu0 0.0
    %1216 = vmatpush1.msra.mxu0 0.0
    %1217 = vmatprep.subr.mxu0 0.0
    %1218 = vmatpush1.msra.mxu0 0.0
    %1219 = vmatprep.subr.mxu0 0.0
    %1220 = vmatpush1.msra.mxu0 0.0
    %1221 = vmatprep.subr.mxu0 0.0
    %1222 = vmatpush1.msra.mxu0 0.0
    %1223 = vmatprep.subr.mxu0 0.0
    %1224 = vmatpush1.msra.mxu0 0.0
    %1225 = vmatprep.subr.mxu0 0.0
    %1226 = vmatpush1.msra.mxu0 0.0
    %1227 = vmatprep.subr.mxu0 0.0
    %1228 = vmatpush1.msra.mxu0 0.0
    %1229 = vmatprep.subr.mxu0 0.0
    %1230 = vmatpush1.msra.mxu0 0.0
    %1231 = vmatprep.subr.mxu0 0.0
    %1232 = vmatpush1.msra.mxu0 0.0
    %1233 = vmatprep.subr.mxu0 0.0
    %1234 = vmatpush1.msra.mxu0 0.0
    %1235 = vmatprep.subr.mxu0 0.0
    %1236 = vmatpush1.msra.mxu0 0.0
    %1237 = vmatprep.subr.mxu0 0.0
    %1238 = vmatpush1.msra.mxu0 0.0
    %1239 = vmatprep.subr.mxu0 0.0
    %1240 = vmatpush1.msra.mxu0 0.0
    %1241 = vmatprep.subr.mxu0 0.0
    %1242 = vmatpush1.msra.mxu0 0.0
    %1243 = vmatprep.subr.mxu0 0.0
    %1244 = vmatpush1.msra.mxu0 0.0
    %1245 = vmatprep.subr.mxu0 0.0
    %1246 = vmatpush1.msra.mxu0 0.0
    %1247 = vmatprep.subr.mxu0 0.0
    %1248 = vmatpush1.msra.mxu0 0.0
    %1249 = vmatprep.subr.mxu0 0.0
    %1250 = vmatpush1.msra.mxu0 0.0
    %1251 = vmatprep.mubr.f32.mxu0 0.0
    %1252 = vmatmul.mubr.f32.gmra.mrb[0].mxu0 %v1113
    %v1253 = vpop.f32.mrb[0].mxu0
    %v1254 = vadd.f32 0.0, %v1253
    %v1255 = vpop.f32.mrb[0].mxu0
    %1256 = vmatprep.mubr.f32.mxu0 0.0
    %1257 = vmatmul.mubr.f32.gmra.mrb[0].mxu0 %v1116
    %v1258 = vpop.f32.mrb[0].mxu0
    %v1259 = vadd.f32 0.0, %v1258
    %v1260 = vpop.f32.mrb[0].mxu0
    %1261 = vmatprep.mubr.f32.mxu0 0.0
    %1262 = vmatmul.mubr.f32.gmra.mrb[0].mxu0 %v1119
    %v1263 = vpop.f32.mrb[0].mxu0
    %v1264 = vadd.f32 0.0, %v1263
    %v1265 = vpop.f32.mrb[0].mxu0
    %1266 = vmatprep.mubr.f32.mxu0 0.0
    %1267 = vmatmul.mubr.f32.gmra.mrb[0].mxu0 %v1122
    %v1268 = vpop.f32.mrb[0].mxu0
    %v1269 = vadd.f32 0.0, %v1268
    %v1270 = vpop.f32.mrb[0].mxu0
    %1271 = vmatprep.mubr.f32.mxu0 0.0
    %1272 = vmatmul.mubr.f32.gmra.mrb[0].mxu0 %v1125
    %v1273 = vpop.f32.mrb[0].mxu0
    %v1274 = vadd.f32 0.0, %v1273
    %v1275 = vpop.f32.mrb[0].mxu0
    %1276 = vmatprep.mubr.f32.mxu0 0.0
    %1277 = vmatmul.mubr.f32.gmra.mrb[0].mxu0 %v1128
    %v1278 = vpop.f32.mrb[0].mxu0
    %v1279 = vadd.f32 0.0, %v1278
    %v1280 = vpop.f32.mrb[0].mxu0
    %1281 = vmatprep.mubr.f32.mxu0 0.0
    %1282 = vmatmul.mubr.f32.gmra.mrb[0].mxu0 %v1131
    %v1283 = vpop.f32.mrb[0].mxu0
    %v1284 = vadd.f32 0.0, %v1283
    %v1285 = vpop.f32.mrb[0].mxu0
    %1286 = vmatprep.mubr.f32.mxu0 0.0
    %1287 = vmatmul.mubr.f32.gmra.mrb[0].mxu0 %v1134
    %v1288 = vpop.f32.mrb[0].mxu0
    %v1289 = vadd.f32 0.0, %v1288
    %v1290 = vpop.f32.mrb[0].mxu0
    %1291 = vmatprep.mubr.f32.mxu0 0.0
    %1292 = vmatmul.mubr.f32.gmra.mrb[0].mxu0 %v1137
    %v1293 = vpop.f32.mrb[0].mxu0
    %v1294 = vadd.f32 0.0, %v1293
    %v1295 = vpop.f32.mrb[0].mxu0
    %1296 = vmatprep.mubr.f32.mxu0 0.0
    %1297 = vmatmul.mubr.f32.gmra.mrb[0].mxu0 %v1140
    %v1298 = vpop.f32.mrb[0].mxu0
    %v1299 = vadd.f32 0.0, %v1298
    %v1300 = vpop.f32.mrb[0].mxu0
    %1301 = vmatprep.mubr.f32.mxu0 0.0
    %1302 = vmatmul.mubr.f32.gmra.mrb[0].mxu0 %v1143
    %v1303 = vpop.f32.mrb[0].mxu0
    %v1304 = vadd.f32 0.0, %v1303
    %v1305 = vpop.f32.mrb[0].mxu0
    %1306 = vmatprep.mubr.f32.mxu0 0.0
    %1307 = vmatmul.mubr.f32.gmra.mrb[0].mxu0 %v1146
    %v1308 = vpop.f32.mrb[0].mxu0
    %v1309 = vadd.f32 0.0, %v1308
    %v1310 = vpop.f32.mrb[0].mxu0
    %1311 = vmatprep.mubr.f32.mxu0 0.0
    %1312 = vmatmul.mubr.f32.gmra.mrb[0].mxu0 %v1149
    %v1313 = vpop.f32.mrb[0].mxu0
    %v1314 = vadd.f32 0.0, %v1313
    %v1315 = vpop.f32.mrb[0].mxu0
    %1316 = vmatprep.mubr.f32.mxu0 0.0
    %1317 = vmatmul.mubr.f32.gmra.mrb[0].mxu0 %v1152
    %v1318 = vpop.f32.mrb[0].mxu0
    %v1319 = vadd.f32 0.0, %v1318
    %v1320 = vpop.f32.mrb[0].mxu0
    %1321 = vmatprep.mubr.f32.mxu0 0.0
    %1322 = vmatmul.mubr.f32.gmra.mrb[0].mxu0 %v1155
    %v1323 = vpop.f32.mrb[0].mxu0
    %v1324 = vadd.f32 0.0, %v1323
    %v1325 = vpop.f32.mrb[0].mxu0
    %1326 = vmatprep.mubr.f32.mxu0 0.0
    %1327 = vmatmul.mubr.f32.gmra.mrb[0].mxu0 %v1158
    %v1328 = vpop.f32.mrb[0].mxu0
    %v1329 = vadd.f32 0.0, %v1328
    %v1330 = vpop.f32.mrb[0].mxu0
    %1331 = vmatprep.mubr.f32.mxu0 0.0
    %1332 = vmatmul.mubr.f32.gmra.mrb[0].mxu0 %v1161
    %v1333 = vpop.f32.mrb[0].mxu0
    %v1334 = vadd.f32 0.0, %v1333
    %v1335 = vpop.f32.mrb[0].mxu0
    %1336 = vmatprep.mubr.f32.mxu0 0.0
    %1337 = vmatmul.mubr.f32.gmra.mrb[0].mxu0 %v1164
    %v1338 = vpop.f32.mrb[0].mxu0
    %v1339 = vadd.f32 0.0, %v1338
    %v1340 = vpop.f32.mrb[0].mxu0
    %1341 = vmatprep.mubr.f32.mxu0 0.0
    %1342 = vmatmul.mubr.f32.gmra.mrb[0].mxu0 %v1167
    %v1343 = vpop.f32.mrb[0].mxu0
    %v1344 = vadd.f32 0.0, %v1343
    %v1345 = vpop.f32.mrb[0].mxu0
    %1346 = vmatprep.mubr.f32.mxu0 0.0
    %1347 = vmatmul.mubr.f32.gmra.mrb[0].mxu0 %v1170
    %v1348 = vpop.f32.mrb[0].mxu0
    %v1349 = vadd.f32 0.0, %v1348
    %v1350 = vpop.f32.mrb[0].mxu0
    %1351 = vmatprep.mubr.f32.mxu0 0.0
    %1352 = vmatmul.mubr.f32.gmra.mrb[0].mxu0 %v1173
    %v1353 = vpop.f32.mrb[0].mxu0
    %v1354 = vadd.f32 0.0, %v1353
    %v1355 = vpop.f32.mrb[0].mxu0
    %1356 = vmatprep.mubr.f32.mxu0 0.0
    %1357 = vmatmul.mubr.f32.gmra.mrb[0].mxu0 %v1176
    %v1358 = vpop.f32.mrb[0].mxu0
    %v1359 = vadd.f32 0.0, %v1358
    %v1360 = vpop.f32.mrb[0].mxu0
    %1361 = vmatprep.mubr.f32.mxu0 0.0
    %1362 = vmatmul.mubr.f32.gmra.mrb[0].mxu0 %v1179
    %v1363 = vpop.f32.mrb[0].mxu0
    %v1364 = vadd.f32 0.0, %v1363
    %v1365 = vpop.f32.mrb[0].mxu0
    %1366 = vmatprep.mubr.f32.mxu0 0.0
    %1367 = vmatmul.mubr.f32.gmra.mrb[0].mxu0 %v1182
    %v1368 = vpop.f32.mrb[0].mxu0
    %v1369 = vadd.f32 0.0, %v1368
    %v1370 = vpop.f32.mrb[0].mxu0
    %1371 = vmatprep.mubr.f32.mxu0 0.0
    %1372 = vmatmul.mubr.f32.gmra.mrb[0].mxu0 %v1185
    %v1373 = vpop.f32.mrb[0].mxu0
    %v1374 = vadd.f32 0.0, %v1373
    %v1375 = vpop.f32.mrb[0].mxu0
    %1376 = vdwg.mxu0
    %v1377 = vld [vmem:[#allocation3 + $0x2] sm:$0xff]
    %v1378 = vld [vmem:[#allocation3 + $0xa] sm:$0xff]
    %v1379 = vld [vmem:[#allocation3 + $0x12] sm:$0xff]
    %v1380 = vld [vmem:[#allocation3 + $0x1a] sm:$0xff]
    %v1381 = vld [vmem:[#allocation3 + $0x22] sm:$0xff]
    %v1382 = vld [vmem:[#allocation3 + $0x2a] sm:$0xff]
    %v1383 = vld [vmem:[#allocation3 + $0x32] sm:$0xff]
    %v1384 = vld [vmem:[#allocation3 + $0x3a] sm:$0xff]
    %v1385 = vld [vmem:[#allocation3 + $0x42] sm:$0xff]
    %v1386 = vld [vmem:[#allocation3 + $0x4a] sm:$0xff]
    %v1387 = vld [vmem:[#allocation3 + $0x52] sm:$0xff]
    %v1388 = vld [vmem:[#allocation3 + $0x5a] sm:$0xff]
    %v1389 = vld [vmem:[#allocation3 + $0x62] sm:$0xff]
    %v1390 = vld [vmem:[#allocation3 + $0x6a] sm:$0xff]
    %v1391 = vld [vmem:[#allocation3 + $0x72] sm:$0xff]
    %v1392 = vld [vmem:[#allocation3 + $0x7a] sm:$0xff]
    %v1393 = vld [vmem:[#allocation3 + $0x82] sm:$0xff]
    %v1394 = vld [vmem:[#allocation3 + $0x8a] sm:$0xff]
    %v1395 = vld [vmem:[#allocation3 + $0x92] sm:$0xff]
    %v1396 = vld [vmem:[#allocation3 + $0x9a] sm:$0xff]
    %v1397 = vld [vmem:[#allocation3 + $0xa2] sm:$0xff]
    %v1398 = vld [vmem:[#allocation3 + $0xaa] sm:$0xff]
    %v1399 = vld [vmem:[#allocation3 + $0xb2] sm:$0xff]
    %v1400 = vld [vmem:[#allocation3 + $0xba] sm:$0xff]
    %v1401 = vld [vmem:[#allocation3 + $0xc2] sm:$0xff]
    %s1402 = scalar_lea.vmem %s3, 128
    %v1403 = vld [vmem:[%s1402] sm:$0xff]
    %v1404 = vld [vmem:[%s1402 + $0x8] sm:$0xff]
    %v1405 = vld [vmem:[%s1402 + $0x10] sm:$0xff]
    %v1406 = vld [vmem:[%s1402 + $0x18] sm:$0xff]
    %v1407 = vld [vmem:[%s1402 + $0x20] sm:$0xff]
    %v1408 = vld [vmem:[%s1402 + $0x28] sm:$0xff]
    %v1409 = vld [vmem:[%s1402 + $0x30] sm:$0xff]
    %v1410 = vld [vmem:[%s1402 + $0x38] sm:$0xff]
    %v1411 = vld [vmem:[#allocation3 + $0xca] sm:$0xff]
    %s1412 = scalar_lea.vmem %s3, 192
    %v1413 = vld [vmem:[%s1412] sm:$0xff]
    %v1414 = vld [vmem:[%s1412 + $0x8] sm:$0xff]
    %v1415 = vld [vmem:[%s1412 + $0x10] sm:$0xff]
    %v1416 = vld [vmem:[%s1412 + $0x18] sm:$0xff]
    %v1417 = vld [vmem:[%s1412 + $0x20] sm:$0xff]
    %v1418 = vld [vmem:[%s1412 + $0x28] sm:$0xff]
    %v1419 = vld [vmem:[%s1412 + $0x30] sm:$0xff]
    %v1420 = vld [vmem:[%s1412 + $0x38] sm:$0xff]
    %v1422 = vsel %vm761, %v1378, 0
    %v1425 = vsel %vm761, %v1379, 0
    %v1428 = vsel %vm761, %v1380, 0
    %v1431 = vsel %vm761, %v1381, 0
    %v1434 = vsel %vm761, %v1382, 0
    %v1437 = vsel %vm761, %v1383, 0
    %v1440 = vsel %vm761, %v1384, 0
    %v1443 = vsel %vm761, %v1385, 0
    %v1446 = vsel %vm761, %v1386, 0
    %v1449 = vsel %vm761, %v1387, 0
    %v1452 = vsel %vm761, %v1388, 0
    %v1455 = vsel %vm761, %v1389, 0
    %v1458 = vsel %vm761, %v1390, 0
    %v1461 = vsel %vm761, %v1391, 0
    %v1464 = vsel %vm761, %v1392, 0
    %v1467 = vsel %vm761, %v1393, 0
    %v1470 = vsel %vm761, %v1394, 0
    %v1473 = vsel %vm761, %v1395, 0
    %v1476 = vsel %vm761, %v1396, 0
    %v1479 = vsel %vm761, %v1397, 0
    %v1482 = vsel %vm761, %v1398, 0
    %v1485 = vsel %vm761, %v1399, 0
    %v1488 = vsel %vm761, %v1400, 0
    %v1491 = vsel %vm761, %v1401, 0
    %v1494 = vsel %vm761, %v1411, 0
    %1496 = vmatprep.subr.mxu0 0.0
    %1497 = vmatpush1.msra.mxu0 %v1413
    %1498 = vmatprep.subr.mxu0 0.0
    %1499 = vmatpush1.msra.mxu0 %v1414
    %1500 = vmatprep.subr.mxu0 0.0
    %1501 = vmatpush1.msra.mxu0 %v1415
    %1502 = vmatprep.subr.mxu0 0.0
    %1503 = vmatpush1.msra.mxu0 %v1416
    %1504 = vmatprep.subr.mxu0 0.0
    %1505 = vmatpush1.msra.mxu0 %v1417
    %1506 = vmatprep.subr.mxu0 0.0
    %1507 = vmatpush1.msra.mxu0 %v1418
    %1508 = vmatprep.subr.mxu0 0.0
    %1509 = vmatpush1.msra.mxu0 %v1419
    %1510 = vmatprep.subr.mxu0 0.0
    %1511 = vmatpush1.msra.mxu0 %v1420
    %1512 = vmatprep.subr.mxu0 0.0
    %1513 = vmatpush1.msra.mxu0 0.0
    %1514 = vmatprep.subr.mxu0 0.0
    %1515 = vmatpush1.msra.mxu0 0.0
    %1516 = vmatprep.subr.mxu0 0.0
    %1517 = vmatpush1.msra.mxu0 0.0
    %1518 = vmatprep.subr.mxu0 0.0
    %1519 = vmatpush1.msra.mxu0 0.0
    %1520 = vmatprep.subr.mxu0 0.0
    %1521 = vmatpush1.msra.mxu0 0.0
    %1522 = vmatprep.subr.mxu0 0.0
    %1523 = vmatpush1.msra.mxu0 0.0
    %1524 = vmatprep.subr.mxu0 0.0
    %1525 = vmatpush1.msra.mxu0 0.0
    %1526 = vmatprep.subr.mxu0 0.0
    %1527 = vmatpush1.msra.mxu0 0.0
    %1528 = vmatprep.subr.mxu0 0.0
    %1529 = vmatpush1.msra.mxu0 0.0
    %1530 = vmatprep.subr.mxu0 0.0
    %1531 = vmatpush1.msra.mxu0 0.0
    %1532 = vmatprep.subr.mxu0 0.0
    %1533 = vmatpush1.msra.mxu0 0.0
    %1534 = vmatprep.subr.mxu0 0.0
    %1535 = vmatpush1.msra.mxu0 0.0
    %1536 = vmatprep.subr.mxu0 0.0
    %1537 = vmatpush1.msra.mxu0 0.0
    %1538 = vmatprep.subr.mxu0 0.0
    %1539 = vmatpush1.msra.mxu0 0.0
    %1540 = vmatprep.subr.mxu0 0.0
    %1541 = vmatpush1.msra.mxu0 0.0
    %1542 = vmatprep.subr.mxu0 0.0
    %1543 = vmatpush1.msra.mxu0 0.0
    %1544 = vmatprep.subr.mxu0 0.0
    %1545 = vmatpush1.msra.mxu0 0.0
    %1546 = vmatprep.subr.mxu0 0.0
    %1547 = vmatpush1.msra.mxu0 0.0
    %1548 = vmatprep.subr.mxu0 0.0
    %1549 = vmatpush1.msra.mxu0 0.0
    %1550 = vmatprep.subr.mxu0 0.0
    %1551 = vmatpush1.msra.mxu0 0.0
    %1552 = vmatprep.subr.mxu0 0.0
    %1553 = vmatpush1.msra.mxu0 0.0
    %1554 = vmatprep.subr.mxu0 0.0
    %1555 = vmatpush1.msra.mxu0 0.0
    %1556 = vmatprep.subr.mxu0 0.0
    %1557 = vmatpush1.msra.mxu0 0.0
    %1558 = vmatprep.subr.mxu0 0.0
    %1559 = vmatpush1.msra.mxu0 0.0
    %1560 = vmatprep.mubr.f32.mxu0 0.0
    %1561 = vmatmul.mubr.f32.gmra.mrb[0].mxu0 %v1422
    %v1562 = vpop.f32.mrb[0].mxu0
    %v1563 = vadd.f32 0.0, %v1562
    %v1564 = vpop.f32.mrb[0].mxu0
    %1565 = vmatprep.mubr.f32.mxu0 0.0
    %1566 = vmatmul.mubr.f32.gmra.mrb[0].mxu0 %v1425
    %v1567 = vpop.f32.mrb[0].mxu0
    %v1568 = vadd.f32 0.0, %v1567
    %v1569 = vpop.f32.mrb[0].mxu0
    %1570 = vmatprep.mubr.f32.mxu0 0.0
    %1571 = vmatmul.mubr.f32.gmra.mrb[0].mxu0 %v1428
    %v1572 = vpop.f32.mrb[0].mxu0
    %v1573 = vadd.f32 0.0, %v1572
    %v1574 = vpop.f32.mrb[0].mxu0
    %1575 = vmatprep.mubr.f32.mxu0 0.0
    %1576 = vmatmul.mubr.f32.gmra.mrb[0].mxu0 %v1431
    %v1577 = vpop.f32.mrb[0].mxu0
    %v1578 = vadd.f32 0.0, %v1577
    %v1579 = vpop.f32.mrb[0].mxu0
    %1580 = vmatprep.mubr.f32.mxu0 0.0
    %1581 = vmatmul.mubr.f32.gmra.mrb[0].mxu0 %v1434
    %v1582 = vpop.f32.mrb[0].mxu0
    %v1583 = vadd.f32 0.0, %v1582
    %v1584 = vpop.f32.mrb[0].mxu0
    %1585 = vmatprep.mubr.f32.mxu0 0.0
    %1586 = vmatmul.mubr.f32.gmra.mrb[0].mxu0 %v1437
    %v1587 = vpop.f32.mrb[0].mxu0
    %v1588 = vadd.f32 0.0, %v1587
    %v1589 = vpop.f32.mrb[0].mxu0
    %1590 = vmatprep.mubr.f32.mxu0 0.0
    %1591 = vmatmul.mubr.f32.gmra.mrb[0].mxu0 %v1440
    %v1592 = vpop.f32.mrb[0].mxu0
    %v1593 = vadd.f32 0.0, %v1592
    %v1594 = vpop.f32.mrb[0].mxu0
    %1595 = vmatprep.mubr.f32.mxu0 0.0
    %1596 = vmatmul.mubr.f32.gmra.mrb[0].mxu0 %v1443
    %v1597 = vpop.f32.mrb[0].mxu0
    %v1598 = vadd.f32 0.0, %v1597
    %v1599 = vpop.f32.mrb[0].mxu0
    %1600 = vmatprep.mubr.f32.mxu0 0.0
    %1601 = vmatmul.mubr.f32.gmra.mrb[0].mxu0 %v1446
    %v1602 = vpop.f32.mrb[0].mxu0
    %v1603 = vadd.f32 0.0, %v1602
    %v1604 = vpop.f32.mrb[0].mxu0
    %1605 = vmatprep.mubr.f32.mxu0 0.0
    %1606 = vmatmul.mubr.f32.gmra.mrb[0].mxu0 %v1449
    %v1607 = vpop.f32.mrb[0].mxu0
    %v1608 = vadd.f32 0.0, %v1607
    %v1609 = vpop.f32.mrb[0].mxu0
    %1610 = vmatprep.mubr.f32.mxu0 0.0
    %1611 = vmatmul.mubr.f32.gmra.mrb[0].mxu0 %v1452
    %v1612 = vpop.f32.mrb[0].mxu0
    %v1613 = vadd.f32 0.0, %v1612
    %v1614 = vpop.f32.mrb[0].mxu0
    %1615 = vmatprep.mubr.f32.mxu0 0.0
    %1616 = vmatmul.mubr.f32.gmra.mrb[0].mxu0 %v1455
    %v1617 = vpop.f32.mrb[0].mxu0
    %v1618 = vadd.f32 0.0, %v1617
    %v1619 = vpop.f32.mrb[0].mxu0
    %1620 = vmatprep.mubr.f32.mxu0 0.0
    %1621 = vmatmul.mubr.f32.gmra.mrb[0].mxu0 %v1458
    %v1622 = vpop.f32.mrb[0].mxu0
    %v1623 = vadd.f32 0.0, %v1622
    %v1624 = vpop.f32.mrb[0].mxu0
    %1625 = vmatprep.mubr.f32.mxu0 0.0
    %1626 = vmatmul.mubr.f32.gmra.mrb[0].mxu0 %v1461
    %v1627 = vpop.f32.mrb[0].mxu0
    %v1628 = vadd.f32 0.0, %v1627
    %v1629 = vpop.f32.mrb[0].mxu0
    %1630 = vmatprep.mubr.f32.mxu0 0.0
    %1631 = vmatmul.mubr.f32.gmra.mrb[0].mxu0 %v1464
    %v1632 = vpop.f32.mrb[0].mxu0
    %v1633 = vadd.f32 0.0, %v1632
    %v1634 = vpop.f32.mrb[0].mxu0
    %1635 = vmatprep.mubr.f32.mxu0 0.0
    %1636 = vmatmul.mubr.f32.gmra.mrb[0].mxu0 %v1467
    %v1637 = vpop.f32.mrb[0].mxu0
    %v1638 = vadd.f32 0.0, %v1637
    %v1639 = vpop.f32.mrb[0].mxu0
    %1640 = vmatprep.mubr.f32.mxu0 0.0
    %1641 = vmatmul.mubr.f32.gmra.mrb[0].mxu0 %v1470
    %v1642 = vpop.f32.mrb[0].mxu0
    %v1643 = vadd.f32 0.0, %v1642
    %v1644 = vpop.f32.mrb[0].mxu0
    %1645 = vmatprep.mubr.f32.mxu0 0.0
    %1646 = vmatmul.mubr.f32.gmra.mrb[0].mxu0 %v1473
    %v1647 = vpop.f32.mrb[0].mxu0
    %v1648 = vadd.f32 0.0, %v1647
    %v1649 = vpop.f32.mrb[0].mxu0
    %1650 = vmatprep.mubr.f32.mxu0 0.0
    %1651 = vmatmul.mubr.f32.gmra.mrb[0].mxu0 %v1476
    %v1652 = vpop.f32.mrb[0].mxu0
    %v1653 = vadd.f32 0.0, %v1652
    %v1654 = vpop.f32.mrb[0].mxu0
    %1655 = vmatprep.mubr.f32.mxu0 0.0
    %1656 = vmatmul.mubr.f32.gmra.mrb[0].mxu0 %v1479
    %v1657 = vpop.f32.mrb[0].mxu0
    %v1658 = vadd.f32 0.0, %v1657
    %v1659 = vpop.f32.mrb[0].mxu0
    %1660 = vmatprep.mubr.f32.mxu0 0.0
    %1661 = vmatmul.mubr.f32.gmra.mrb[0].mxu0 %v1482
    %v1662 = vpop.f32.mrb[0].mxu0
    %v1663 = vadd.f32 0.0, %v1662
    %v1664 = vpop.f32.mrb[0].mxu0
    %1665 = vmatprep.mubr.f32.mxu0 0.0
    %1666 = vmatmul.mubr.f32.gmra.mrb[0].mxu0 %v1485
    %v1667 = vpop.f32.mrb[0].mxu0
    %v1668 = vadd.f32 0.0, %v1667
    %v1669 = vpop.f32.mrb[0].mxu0
    %1670 = vmatprep.mubr.f32.mxu0 0.0
    %1671 = vmatmul.mubr.f32.gmra.mrb[0].mxu0 %v1488
    %v1672 = vpop.f32.mrb[0].mxu0
    %v1673 = vadd.f32 0.0, %v1672
    %v1674 = vpop.f32.mrb[0].mxu0
    %1675 = vmatprep.mubr.f32.mxu0 0.0
    %1676 = vmatmul.mubr.f32.gmra.mrb[0].mxu0 %v1491
    %v1677 = vpop.f32.mrb[0].mxu0
    %v1678 = vadd.f32 0.0, %v1677
    %v1679 = vpop.f32.mrb[0].mxu0
    %1680 = vmatprep.mubr.f32.mxu0 0.0
    %1681 = vmatmul.mubr.f32.gmra.mrb[0].mxu0 %v1494
    %v1682 = vpop.f32.mrb[0].mxu0
    %v1683 = vadd.f32 0.0, %v1682
    %v1684 = vpop.f32.mrb[0].mxu0
    %1685 = vdwg.mxu0
    %v1686 = vld [vmem:[#allocation3 + $0xb] sm:$0xff]
    %v1687 = vld [vmem:[#allocation3 + $0x13] sm:$0xff]
    %v1688 = vld [vmem:[#allocation3 + $0x1b] sm:$0xff]
    %v1689 = vld [vmem:[#allocation3 + $0x23] sm:$0xff]
    %v1690 = vld [vmem:[#allocation3 + $0x2b] sm:$0xff]
    %v1691 = vld [vmem:[#allocation3 + $0x33] sm:$0xff]
    %v1692 = vld [vmem:[#allocation3 + $0x3b] sm:$0xff]
    %v1693 = vld [vmem:[#allocation3 + $0x43] sm:$0xff]
    %v1694 = vld [vmem:[#allocation3 + $0x4b] sm:$0xff]
    %v1695 = vld [vmem:[#allocation3 + $0x53] sm:$0xff]
    %v1696 = vld [vmem:[#allocation3 + $0x5b] sm:$0xff]
    %v1697 = vld [vmem:[#allocation3 + $0x63] sm:$0xff]
    %v1698 = vld [vmem:[#allocation3 + $0x6b] sm:$0xff]
    %v1699 = vld [vmem:[#allocation3 + $0x73] sm:$0xff]
    %v1700 = vld [vmem:[#allocation3 + $0x7b] sm:$0xff]
    %v1701 = vld [vmem:[#allocation3 + $0x83] sm:$0xff]
    %v1702 = vld [vmem:[#allocation3 + $0x8b] sm:$0xff]
    %v1703 = vld [vmem:[#allocation3 + $0x93] sm:$0xff]
    %v1704 = vld [vmem:[#allocation3 + $0x9b] sm:$0xff]
    %v1705 = vld [vmem:[#allocation3 + $0xa3] sm:$0xff]
    %v1706 = vld [vmem:[#allocation3 + $0xab] sm:$0xff]
    %v1707 = vld [vmem:[#allocation3 + $0xb3] sm:$0xff]
    %v1708 = vld [vmem:[#allocation3 + $0xbb] sm:$0xff]
    %v1709 = vld [vmem:[#allocation3 + $0xc3] sm:$0xff]
    %v1710 = vld [vmem:[#allocation3 + $0xcb] sm:$0xff]
    %s1711 = scalar_lea.vmem %s3, 256
    %v1712 = vld [vmem:[%s1711] sm:$0xff]
    %v1713 = vld [vmem:[%s1711 + $0x8] sm:$0xff]
    %v1714 = vld [vmem:[%s1711 + $0x10] sm:$0xff]
    %v1715 = vld [vmem:[%s1711 + $0x18] sm:$0xff]
    %v1716 = vld [vmem:[%s1711 + $0x20] sm:$0xff]
    %v1717 = vld [vmem:[%s1711 + $0x28] sm:$0xff]
    %v1718 = vld [vmem:[%s1711 + $0x30] sm:$0xff]
    %v1719 = vld [vmem:[%s1711 + $0x38] sm:$0xff]
    %v1720 = vld [vmem:[#allocation3 + $0xc] sm:$0xff]
    %v1721 = vld [vmem:[#allocation3 + $0x14] sm:$0xff]
    %v1722 = vld [vmem:[#allocation3 + $0x1c] sm:$0xff]
    %v1723 = vld [vmem:[#allocation3 + $0x24] sm:$0xff]
    %v1724 = vld [vmem:[#allocation3 + $0x2c] sm:$0xff]
    %v1725 = vld [vmem:[#allocation3 + $0x34] sm:$0xff]
    %v1726 = vld [vmem:[#allocation3 + $0x3c] sm:$0xff]
    %v1727 = vld [vmem:[#allocation3 + $0x44] sm:$0xff]
    %v1728 = vld [vmem:[#allocation3 + $0x4c] sm:$0xff]
    %v1729 = vld [vmem:[#allocation3 + $0x54] sm:$0xff]
    %v1730 = vld [vmem:[#allocation3 + $0x5c] sm:$0xff]
    %v1731 = vld [vmem:[#allocation3 + $0x64] sm:$0xff]
    %v1732 = vld [vmem:[#allocation3 + $0x6c] sm:$0xff]
    %v1733 = vld [vmem:[#allocation3 + $0x74] sm:$0xff]
    %v1734 = vld [vmem:[#allocation3 + $0x7c] sm:$0xff]
    %v1735 = vld [vmem:[#allocation3 + $0x84] sm:$0xff]
    %v1736 = vld [vmem:[#allocation3 + $0x8c] sm:$0xff]
    %v1737 = vld [vmem:[#allocation3 + $0x94] sm:$0xff]
    %v1738 = vld [vmem:[#allocation3 + $0x9c] sm:$0xff]
    %v1739 = vld [vmem:[#allocation3 + $0xa4] sm:$0xff]
    %v1740 = vld [vmem:[#allocation3 + $0xac] sm:$0xff]
    %v1741 = vld [vmem:[#allocation3 + $0xb4] sm:$0xff]
    %v1742 = vld [vmem:[#allocation3 + $0xbc] sm:$0xff]
    %v1743 = vld [vmem:[#allocation3 + $0xc4] sm:$0xff]
    %v1744 = vld [vmem:[#allocation3 + $0xcc] sm:$0xff]
    %s1745 = scalar_lea.vmem %s3, 320
    %v1746 = vld [vmem:[%s1745] sm:$0xff]
    %v1747 = vld [vmem:[%s1745 + $0x8] sm:$0xff]
    %v1748 = vld [vmem:[%s1745 + $0x10] sm:$0xff]
    %v1749 = vld [vmem:[%s1745 + $0x18] sm:$0xff]
    %v1750 = vld [vmem:[%s1745 + $0x20] sm:$0xff]
    %v1751 = vld [vmem:[%s1745 + $0x28] sm:$0xff]
    %v1752 = vld [vmem:[%s1745 + $0x30] sm:$0xff]
    %v1753 = vld [vmem:[%s1745 + $0x38] sm:$0xff]
    %v1755 = vsel %vm761, %v1720, 0
    %v1758 = vsel %vm761, %v1721, 0
    %v1761 = vsel %vm761, %v1722, 0
    %v1764 = vsel %vm761, %v1723, 0
    %v1767 = vsel %vm761, %v1724, 0
    %v1770 = vsel %vm761, %v1725, 0
    %v1773 = vsel %vm761, %v1726, 0
    %v1776 = vsel %vm761, %v1727, 0
    %v1779 = vsel %vm761, %v1728, 0
    %v1782 = vsel %vm761, %v1729, 0
    %v1785 = vsel %vm761, %v1730, 0
    %v1788 = vsel %vm761, %v1731, 0
    %v1791 = vsel %vm761, %v1732, 0
    %v1794 = vsel %vm761, %v1733, 0
    %v1797 = vsel %vm761, %v1734, 0
    %v1800 = vsel %vm761, %v1735, 0
    %v1803 = vsel %vm761, %v1736, 0
    %v1806 = vsel %vm761, %v1737, 0
    %v1809 = vsel %vm761, %v1738, 0
    %v1812 = vsel %vm761, %v1739, 0
    %v1815 = vsel %vm761, %v1740, 0
    %v1818 = vsel %vm761, %v1741, 0
    %v1821 = vsel %vm761, %v1742, 0
    %v1824 = vsel %vm761, %v1743, 0
    %v1827 = vsel %vm761, %v1744, 0
    %1829 = vmatprep.subr.mxu0 0.0
    %1830 = vmatpush1.msra.mxu0 %v1746
    %1831 = vmatprep.subr.mxu0 0.0
    %1832 = vmatpush1.msra.mxu0 %v1747
    %1833 = vmatprep.subr.mxu0 0.0
    %1834 = vmatpush1.msra.mxu0 %v1748
    %1835 = vmatprep.subr.mxu0 0.0
    %1836 = vmatpush1.msra.mxu0 %v1749
    %1837 = vmatprep.subr.mxu0 0.0
    %1838 = vmatpush1.msra.mxu0 %v1750
    %1839 = vmatprep.subr.mxu0 0.0
    %1840 = vmatpush1.msra.mxu0 %v1751
    %1841 = vmatprep.subr.mxu0 0.0
    %1842 = vmatpush1.msra.mxu0 %v1752
    %1843 = vmatprep.subr.mxu0 0.0
    %1844 = vmatpush1.msra.mxu0 %v1753
    %1845 = vmatprep.subr.mxu0 0.0
    %1846 = vmatpush1.msra.mxu0 0.0
    %1847 = vmatprep.subr.mxu0 0.0
    %1848 = vmatpush1.msra.mxu0 0.0
    %1849 = vmatprep.subr.mxu0 0.0
    %1850 = vmatpush1.msra.mxu0 0.0
    %1851 = vmatprep.subr.mxu0 0.0
    %1852 = vmatpush1.msra.mxu0 0.0
    %1853 = vmatprep.subr.mxu0 0.0
    %1854 = vmatpush1.msra.mxu0 0.0
    %1855 = vmatprep.subr.mxu0 0.0
    %1856 = vmatpush1.msra.mxu0 0.0
    %1857 = vmatprep.subr.mxu0 0.0
    %1858 = vmatpush1.msra.mxu0 0.0
    %1859 = vmatprep.subr.mxu0 0.0
    %1860 = vmatpush1.msra.mxu0 0.0
    %1861 = vmatprep.subr.mxu0 0.0
    %1862 = vmatpush1.msra.mxu0 0.0
    %1863 = vmatprep.subr.mxu0 0.0
    %1864 = vmatpush1.msra.mxu0 0.0
    %1865 = vmatprep.subr.mxu0 0.0
    %1866 = vmatpush1.msra.mxu0 0.0
    %1867 = vmatprep.subr.mxu0 0.0
    %1868 = vmatpush1.msra.mxu0 0.0
    %1869 = vmatprep.subr.mxu0 0.0
    %1870 = vmatpush1.msra.mxu0 0.0
    %1871 = vmatprep.subr.mxu0 0.0
    %1872 = vmatpush1.msra.mxu0 0.0
    %1873 = vmatprep.subr.mxu0 0.0
    %1874 = vmatpush1.msra.mxu0 0.0
    %1875 = vmatprep.subr.mxu0 0.0
    %1876 = vmatpush1.msra.mxu0 0.0
    %1877 = vmatprep.subr.mxu0 0.0
    %1878 = vmatpush1.msra.mxu0 0.0
    %1879 = vmatprep.subr.mxu0 0.0
    %1880 = vmatpush1.msra.mxu0 0.0
    %1881 = vmatprep.subr.mxu0 0.0
    %1882 = vmatpush1.msra.mxu0 0.0
    %1883 = vmatprep.subr.mxu0 0.0
    %1884 = vmatpush1.msra.mxu0 0.0
    %1885 = vmatprep.subr.mxu0 0.0
    %1886 = vmatpush1.msra.mxu0 0.0
    %1887 = vmatprep.subr.mxu0 0.0
    %1888 = vmatpush1.msra.mxu0 0.0
    %1889 = vmatprep.subr.mxu0 0.0
    %1890 = vmatpush1.msra.mxu0 0.0
    %1891 = vmatprep.subr.mxu0 0.0
    %1892 = vmatpush1.msra.mxu0 0.0
    %1893 = vmatprep.mubr.f32.mxu0 0.0
    %1894 = vmatmul.mubr.f32.gmra.mrb[0].mxu0 %v1755
    %v1895 = vpop.f32.mrb[0].mxu0
    %v1896 = vadd.f32 0.0, %v1895
    %v1897 = vpop.f32.mrb[0].mxu0
    %1898 = vmatprep.mubr.f32.mxu0 0.0
    %1899 = vmatmul.mubr.f32.gmra.mrb[0].mxu0 %v1758
    %v1900 = vpop.f32.mrb[0].mxu0
    %v1901 = vadd.f32 0.0, %v1900
    %v1902 = vpop.f32.mrb[0].mxu0
    %1903 = vmatprep.mubr.f32.mxu0 0.0
    %1904 = vmatmul.mubr.f32.gmra.mrb[0].mxu0 %v1761
    %v1905 = vpop.f32.mrb[0].mxu0
    %v1906 = vadd.f32 0.0, %v1905
    %v1907 = vpop.f32.mrb[0].mxu0
    %1908 = vmatprep.mubr.f32.mxu0 0.0
    %1909 = vmatmul.mubr.f32.gmra.mrb[0].mxu0 %v1764
    %v1910 = vpop.f32.mrb[0].mxu0
    %v1911 = vadd.f32 0.0, %v1910
    %v1912 = vpop.f32.mrb[0].mxu0
    %1913 = vmatprep.mubr.f32.mxu0 0.0
    %1914 = vmatmul.mubr.f32.gmra.mrb[0].mxu0 %v1767
    %v1915 = vpop.f32.mrb[0].mxu0
    %v1916 = vadd.f32 0.0, %v1915
    %v1917 = vpop.f32.mrb[0].mxu0
    %1918 = vmatprep.mubr.f32.mxu0 0.0
    %1919 = vmatmul.mubr.f32.gmra.mrb[0].mxu0 %v1770
    %v1920 = vpop.f32.mrb[0].mxu0
    %v1921 = vadd.f32 0.0, %v1920
    %v1922 = vpop.f32.mrb[0].mxu0
    %1923 = vmatprep.mubr.f32.mxu0 0.0
    %1924 = vmatmul.mubr.f32.gmra.mrb[0].mxu0 %v1773
    %v1925 = vpop.f32.mrb[0].mxu0
    %v1926 = vadd.f32 0.0, %v1925
    %v1927 = vpop.f32.mrb[0].mxu0
    %1928 = vmatprep.mubr.f32.mxu0 0.0
    %1929 = vmatmul.mubr.f32.gmra.mrb[0].mxu0 %v1776
    %v1930 = vpop.f32.mrb[0].mxu0
    %v1931 = vadd.f32 0.0, %v1930
    %v1932 = vpop.f32.mrb[0].mxu0
    %1933 = vmatprep.mubr.f32.mxu0 0.0
    %1934 = vmatmul.mubr.f32.gmra.mrb[0].mxu0 %v1779
    %v1935 = vpop.f32.mrb[0].mxu0
    %v1936 = vadd.f32 0.0, %v1935
    %v1937 = vpop.f32.mrb[0].mxu0
    %1938 = vmatprep.mubr.f32.mxu0 0.0
    %1939 = vmatmul.mubr.f32.gmra.mrb[0].mxu0 %v1782
    %v1940 = vpop.f32.mrb[0].mxu0
    %v1941 = vadd.f32 0.0, %v1940
    %v1942 = vpop.f32.mrb[0].mxu0
    %1943 = vmatprep.mubr.f32.mxu0 0.0
    %1944 = vmatmul.mubr.f32.gmra.mrb[0].mxu0 %v1785
    %v1945 = vpop.f32.mrb[0].mxu0
    %v1946 = vadd.f32 0.0, %v1945
    %v1947 = vpop.f32.mrb[0].mxu0
    %1948 = vmatprep.mubr.f32.mxu0 0.0
    %1949 = vmatmul.mubr.f32.gmra.mrb[0].mxu0 %v1788
    %v1950 = vpop.f32.mrb[0].mxu0
    %v1951 = vadd.f32 0.0, %v1950
    %v1952 = vpop.f32.mrb[0].mxu0
    %1953 = vmatprep.mubr.f32.mxu0 0.0
    %1954 = vmatmul.mubr.f32.gmra.mrb[0].mxu0 %v1791
    %v1955 = vpop.f32.mrb[0].mxu0
    %v1956 = vadd.f32 0.0, %v1955
    %v1957 = vpop.f32.mrb[0].mxu0
    %1958 = vmatprep.mubr.f32.mxu0 0.0
    %1959 = vmatmul.mubr.f32.gmra.mrb[0].mxu0 %v1794
    %v1960 = vpop.f32.mrb[0].mxu0
    %v1961 = vadd.f32 0.0, %v1960
    %v1962 = vpop.f32.mrb[0].mxu0
    %1963 = vmatprep.mubr.f32.mxu0 0.0
    %1964 = vmatmul.mubr.f32.gmra.mrb[0].mxu0 %v1797
    %v1965 = vpop.f32.mrb[0].mxu0
    %v1966 = vadd.f32 0.0, %v1965
    %v1967 = vpop.f32.mrb[0].mxu0
    %1968 = vmatprep.mubr.f32.mxu0 0.0
    %1969 = vmatmul.mubr.f32.gmra.mrb[0].mxu0 %v1800
    %v1970 = vpop.f32.mrb[0].mxu0
    %v1971 = vadd.f32 0.0, %v1970
    %v1972 = vpop.f32.mrb[0].mxu0
    %1973 = vmatprep.mubr.f32.mxu0 0.0
    %1974 = vmatmul.mubr.f32.gmra.mrb[0].mxu0 %v1803
    %v1975 = vpop.f32.mrb[0].mxu0
    %v1976 = vadd.f32 0.0, %v1975
    %v1977 = vpop.f32.mrb[0].mxu0
    %1978 = vmatprep.mubr.f32.mxu0 0.0
    %1979 = vmatmul.mubr.f32.gmra.mrb[0].mxu0 %v1806
    %v1980 = vpop.f32.mrb[0].mxu0
    %v1981 = vadd.f32 0.0, %v1980
    %v1982 = vpop.f32.mrb[0].mxu0
    %1983 = vmatprep.mubr.f32.mxu0 0.0
    %1984 = vmatmul.mubr.f32.gmra.mrb[0].mxu0 %v1809
    %v1985 = vpop.f32.mrb[0].mxu0
    %v1986 = vadd.f32 0.0, %v1985
    %v1987 = vpop.f32.mrb[0].mxu0
    %1988 = vmatprep.mubr.f32.mxu0 0.0
    %1989 = vmatmul.mubr.f32.gmra.mrb[0].mxu0 %v1812
    %v1990 = vpop.f32.mrb[0].mxu0
    %v1991 = vadd.f32 0.0, %v1990
    %v1992 = vpop.f32.mrb[0].mxu0
    %1993 = vmatprep.mubr.f32.mxu0 0.0
    %1994 = vmatmul.mubr.f32.gmra.mrb[0].mxu0 %v1815
    %v1995 = vpop.f32.mrb[0].mxu0
    %v1996 = vadd.f32 0.0, %v1995
    %v1997 = vpop.f32.mrb[0].mxu0
    %1998 = vmatprep.mubr.f32.mxu0 0.0
    %1999 = vmatmul.mubr.f32.gmra.mrb[0].mxu0 %v1818
    %v2000 = vpop.f32.mrb[0].mxu0
    %v2001 = vadd.f32 0.0, %v2000
    %v2002 = vpop.f32.mrb[0].mxu0
    %2003 = vmatprep.mubr.f32.mxu0 0.0
    %2004 = vmatmul.mubr.f32.gmra.mrb[0].mxu0 %v1821
    %v2005 = vpop.f32.mrb[0].mxu0
    %v2006 = vadd.f32 0.0, %v2005
    %v2007 = vpop.f32.mrb[0].mxu0
    %2008 = vmatprep.mubr.f32.mxu0 0.0
    %2009 = vmatmul.mubr.f32.gmra.mrb[0].mxu0 %v1824
    %v2010 = vpop.f32.mrb[0].mxu0
    %v2011 = vadd.f32 0.0, %v2010
    %v2012 = vpop.f32.mrb[0].mxu0
    %2013 = vmatprep.mubr.f32.mxu0 0.0
    %2014 = vmatmul.mubr.f32.gmra.mrb[0].mxu0 %v1827
    %v2015 = vpop.f32.mrb[0].mxu0
    %v2016 = vadd.f32 0.0, %v2015
    %v2017 = vpop.f32.mrb[0].mxu0
    %2018 = vdwg.mxu0
    %v2019 = vld [vmem:[#allocation3 + $0x14] sm:$0xff]
    %v2020 = vld [vmem:[#allocation3 + $0x1c] sm:$0xff]
    %v2021 = vld [vmem:[#allocation3 + $0x24] sm:$0xff]
    %v2022 = vld [vmem:[#allocation3 + $0x2c] sm:$0xff]
    %v2023 = vld [vmem:[#allocation3 + $0x34] sm:$0xff]
    %v2024 = vld [vmem:[#allocation3 + $0x3c] sm:$0xff]
    %v2025 = vld [vmem:[#allocation3 + $0x44] sm:$0xff]
    %v2026 = vld [vmem:[#allocation3 + $0x4c] sm:$0xff]
    %v2027 = vld [vmem:[#allocation3 + $0x54] sm:$0xff]
    %v2028 = vld [vmem:[#allocation3 + $0x5c] sm:$0xff]
    %v2029 = vld [vmem:[#allocation3 + $0x64] sm:$0xff]
    %v2030 = vld [vmem:[#allocation3 + $0x6c] sm:$0xff]
    %v2031 = vld [vmem:[#allocation3 + $0x74] sm:$0xff]
    %v2032 = vld [vmem:[#allocation3 + $0x7c] sm:$0xff]
    %v2033 = vld [vmem:[#allocation3 + $0x84] sm:$0xff]
    %v2034 = vld [vmem:[#allocation3 + $0x8c] sm:$0xff]
    %v2035 = vld [vmem:[#allocation3 + $0x94] sm:$0xff]
    %v2036 = vld [vmem:[#allocation3 + $0x9c] sm:$0xff]
    %v2037 = vld [vmem:[#allocation3 + $0xa4] sm:$0xff]
    %v2038 = vld [vmem:[#allocation3 + $0xac] sm:$0xff]
    %v2039 = vld [vmem:[#allocation3 + $0xb4] sm:$0xff]
    %v2040 = vld [vmem:[#allocation3 + $0xbc] sm:$0xff]
    %v2041 = vld [vmem:[#allocation3 + $0xc4] sm:$0xff]
    %v2042 = vld [vmem:[#allocation3 + $0xcc] sm:$0xff]
    %v2043 = vld [vmem:[#allocation3 + $0xd4] sm:$0xff]
    %s2044 = scalar_lea.vmem %s3, 384
    %v2045 = vld [vmem:[%s2044] sm:$0xff]
    %v2046 = vld [vmem:[%s2044 + $0x8] sm:$0xff]
    %v2047 = vld [vmem:[%s2044 + $0x10] sm:$0xff]
    %v2048 = vld [vmem:[%s2044 + $0x18] sm:$0xff]
    %v2049 = vld [vmem:[%s2044 + $0x20] sm:$0xff]
    %v2050 = vld [vmem:[%s2044 + $0x28] sm:$0xff]
    %v2051 = vld [vmem:[%s2044 + $0x30] sm:$0xff]
    %v2052 = vld [vmem:[%s2044 + $0x38] sm:$0xff]
    %v2053 = vld [vmem:[#allocation3 + $0x15] sm:$0xff]
    %v2054 = vld [vmem:[#allocation3 + $0x1d] sm:$0xff]
    %v2055 = vld [vmem:[#allocation3 + $0x25] sm:$0xff]
    %v2056 = vld [vmem:[#allocation3 + $0x2d] sm:$0xff]
    %v2057 = vld [vmem:[#allocation3 + $0x35] sm:$0xff]
    %v2058 = vld [vmem:[#allocation3 + $0x3d] sm:$0xff]
    %v2059 = vld [vmem:[#allocation3 + $0x45] sm:$0xff]
    %v2060 = vld [vmem:[#allocation3 + $0x4d] sm:$0xff]
    %v2061 = vld [vmem:[#allocation3 + $0x55] sm:$0xff]
    %v2062 = vld [vmem:[#allocation3 + $0x5d] sm:$0xff]
    %v2063 = vld [vmem:[#allocation3 + $0x65] sm:$0xff]
    %v2064 = vld [vmem:[#allocation3 + $0x6d] sm:$0xff]
    %v2065 = vld [vmem:[#allocation3 + $0x75] sm:$0xff]
    %v2066 = vld [vmem:[#allocation3 + $0x7d] sm:$0xff]
    %v2067 = vld [vmem:[#allocation3 + $0x85] sm:$0xff]
    %v2068 = vld [vmem:[#allocation3 + $0x8d] sm:$0xff]
    %v2069 = vld [vmem:[#allocation3 + $0x95] sm:$0xff]
    %v2070 = vld [vmem:[#allocation3 + $0x9d] sm:$0xff]
    %v2071 = vld [vmem:[#allocation3 + $0xa5] sm:$0xff]
    %v2072 = vld [vmem:[#allocation3 + $0xad] sm:$0xff]
    %v2073 = vld [vmem:[#allocation3 + $0xb5] sm:$0xff]
    %v2074 = vld [vmem:[#allocation3 + $0xbd] sm:$0xff]
    %v2075 = vld [vmem:[#allocation3 + $0xc5] sm:$0xff]
    %v2076 = vld [vmem:[#allocation3 + $0xcd] sm:$0xff]
    %v2077 = vld [vmem:[#allocation3 + $0xd5] sm:$0xff]
    %s2078 = scalar_lea.vmem %s3, 448
    %v2079 = vld [vmem:[%s2078] sm:$0xff]
    %v2080 = vld [vmem:[%s2078 + $0x8] sm:$0xff]
    %v2081 = vld [vmem:[%s2078 + $0x10] sm:$0xff]
    %v2082 = vld [vmem:[%s2078 + $0x18] sm:$0xff]
    %v2083 = vld [vmem:[%s2078 + $0x20] sm:$0xff]
    %v2084 = vld [vmem:[%s2078 + $0x28] sm:$0xff]
    %v2085 = vld [vmem:[%s2078 + $0x30] sm:$0xff]
    %v2086 = vld [vmem:[%s2078 + $0x38] sm:$0xff]
    %v2088 = vsel %vm761, %v2053, 0
    %v2091 = vsel %vm761, %v2054, 0
    %v2094 = vsel %vm761, %v2055, 0
    %v2097 = vsel %vm761, %v2056, 0
    %v2100 = vsel %vm761, %v2057, 0
    %v2103 = vsel %vm761, %v2058, 0
    %v2106 = vsel %vm761, %v2059, 0
    %v2109 = vsel %vm761, %v2060, 0
    %v2112 = vsel %vm761, %v2061, 0
    %v2115 = vsel %vm761, %v2062, 0
    %v2118 = vsel %vm761, %v2063, 0
    %v2121 = vsel %vm761, %v2064, 0
    %v2124 = vsel %vm761, %v2065, 0
    %v2127 = vsel %vm761, %v2066, 0
    %v2130 = vsel %vm761, %v2067, 0
    %v2133 = vsel %vm761, %v2068, 0
    %v2136 = vsel %vm761, %v2069, 0
    %v2139 = vsel %vm761, %v2070, 0
    %v2142 = vsel %vm761, %v2071, 0
    %v2145 = vsel %vm761, %v2072, 0
    %v2148 = vsel %vm761, %v2073, 0
    %v2151 = vsel %vm761, %v2074, 0
    %v2154 = vsel %vm761, %v2075, 0
    %v2157 = vsel %vm761, %v2076, 0
    %v2160 = vsel %vm761, %v2077, 0
    %2162 = vmatprep.subr.mxu0 0.0
    %2163 = vmatpush1.msra.mxu0 %v2079
    %2164 = vmatprep.subr.mxu0 0.0
    %2165 = vmatpush1.msra.mxu0 %v2080
    %2166 = vmatprep.subr.mxu0 0.0
    %2167 = vmatpush1.msra.mxu0 %v2081
    %2168 = vmatprep.subr.mxu0 0.0
    %2169 = vmatpush1.msra.mxu0 %v2082
    %2170 = vmatprep.subr.mxu0 0.0
    %2171 = vmatpush1.msra.mxu0 %v2083
    %2172 = vmatprep.subr.mxu0 0.0
    %2173 = vmatpush1.msra.mxu0 %v2084
    %2174 = vmatprep.subr.mxu0 0.0
    %2175 = vmatpush1.msra.mxu0 %v2085
    %2176 = vmatprep.subr.mxu0 0.0
    %2177 = vmatpush1.msra.mxu0 %v2086
    %2178 = vmatprep.subr.mxu0 0.0
    %2179 = vmatpush1.msra.mxu0 0.0
    %2180 = vmatprep.subr.mxu0 0.0
    %2181 = vmatpush1.msra.mxu0 0.0
    %2182 = vmatprep.subr.mxu0 0.0
    %2183 = vmatpush1.msra.mxu0 0.0
    %2184 = vmatprep.subr.mxu0 0.0
    %2185 = vmatpush1.msra.mxu0 0.0
    %2186 = vmatprep.subr.mxu0 0.0
    %2187 = vmatpush1.msra.mxu0 0.0
    %2188 = vmatprep.subr.mxu0 0.0
    %2189 = vmatpush1.msra.mxu0 0.0
    %2190 = vmatprep.subr.mxu0 0.0
    %2191 = vmatpush1.msra.mxu0 0.0
    %2192 = vmatprep.subr.mxu0 0.0
    %2193 = vmatpush1.msra.mxu0 0.0
    %2194 = vmatprep.subr.mxu0 0.0
    %2195 = vmatpush1.msra.mxu0 0.0
    %2196 = vmatprep.subr.mxu0 0.0
    %2197 = vmatpush1.msra.mxu0 0.0
    %2198 = vmatprep.subr.mxu0 0.0
    %2199 = vmatpush1.msra.mxu0 0.0
    %2200 = vmatprep.subr.mxu0 0.0
    %2201 = vmatpush1.msra.mxu0 0.0
    %2202 = vmatprep.subr.mxu0 0.0
    %2203 = vmatpush1.msra.mxu0 0.0
    %2204 = vmatprep.subr.mxu0 0.0
    %2205 = vmatpush1.msra.mxu0 0.0
    %2206 = vmatprep.subr.mxu0 0.0
    %2207 = vmatpush1.msra.mxu0 0.0
    %2208 = vmatprep.subr.mxu0 0.0
    %2209 = vmatpush1.msra.mxu0 0.0
    %2210 = vmatprep.subr.mxu0 0.0
    %2211 = vmatpush1.msra.mxu0 0.0
    %2212 = vmatprep.subr.mxu0 0.0
    %2213 = vmatpush1.msra.mxu0 0.0
    %2214 = vmatprep.subr.mxu0 0.0
    %2215 = vmatpush1.msra.mxu0 0.0
    %2216 = vmatprep.subr.mxu0 0.0
    %2217 = vmatpush1.msra.mxu0 0.0
    %2218 = vmatprep.subr.mxu0 0.0
    %2219 = vmatpush1.msra.mxu0 0.0
    %2220 = vmatprep.subr.mxu0 0.0
    %2221 = vmatpush1.msra.mxu0 0.0
    %2222 = vmatprep.subr.mxu0 0.0
    %2223 = vmatpush1.msra.mxu0 0.0
    %2224 = vmatprep.subr.mxu0 0.0
    %2225 = vmatpush1.msra.mxu0 0.0
    %2226 = vmatprep.mubr.f32.mxu0 0.0
    %2227 = vmatmul.mubr.f32.gmra.mrb[0].mxu0 %v2088
    %v2228 = vpop.f32.mrb[0].mxu0
    %v2229 = vadd.f32 0.0, %v2228
    %v2230 = vpop.f32.mrb[0].mxu0
    %2231 = vmatprep.mubr.f32.mxu0 0.0
    %2232 = vmatmul.mubr.f32.gmra.mrb[0].mxu0 %v2091
    %v2233 = vpop.f32.mrb[0].mxu0
    %v2234 = vadd.f32 0.0, %v2233
    %v2235 = vpop.f32.mrb[0].mxu0
    %2236 = vmatprep.mubr.f32.mxu0 0.0
    %2237 = vmatmul.mubr.f32.gmra.mrb[0].mxu0 %v2094
    %v2238 = vpop.f32.mrb[0].mxu0
    %v2239 = vadd.f32 0.0, %v2238
    %v2240 = vpop.f32.mrb[0].mxu0
    %2241 = vmatprep.mubr.f32.mxu0 0.0
    %2242 = vmatmul.mubr.f32.gmra.mrb[0].mxu0 %v2097
    %v2243 = vpop.f32.mrb[0].mxu0
    %v2244 = vadd.f32 0.0, %v2243
    %v2245 = vpop.f32.mrb[0].mxu0
    %2246 = vmatprep.mubr.f32.mxu0 0.0
    %2247 = vmatmul.mubr.f32.gmra.mrb[0].mxu0 %v2100
    %v2248 = vpop.f32.mrb[0].mxu0
    %v2249 = vadd.f32 0.0, %v2248
    %v2250 = vpop.f32.mrb[0].mxu0
    %2251 = vmatprep.mubr.f32.mxu0 0.0
    %2252 = vmatmul.mubr.f32.gmra.mrb[0].mxu0 %v2103
    %v2253 = vpop.f32.mrb[0].mxu0
    %v2254 = vadd.f32 0.0, %v2253
    %v2255 = vpop.f32.mrb[0].mxu0
    %2256 = vmatprep.mubr.f32.mxu0 0.0
    %2257 = vmatmul.mubr.f32.gmra.mrb[0].mxu0 %v2106
    %v2258 = vpop.f32.mrb[0].mxu0
    %v2259 = vadd.f32 0.0, %v2258
    %v2260 = vpop.f32.mrb[0].mxu0
    %2261 = vmatprep.mubr.f32.mxu0 0.0
    %2262 = vmatmul.mubr.f32.gmra.mrb[0].mxu0 %v2109
    %v2263 = vpop.f32.mrb[0].mxu0
    %v2264 = vadd.f32 0.0, %v2263
    %v2265 = vpop.f32.mrb[0].mxu0
    %2266 = vmatprep.mubr.f32.mxu0 0.0
    %2267 = vmatmul.mubr.f32.gmra.mrb[0].mxu0 %v2112
    %v2268 = vpop.f32.mrb[0].mxu0
    %v2269 = vadd.f32 0.0, %v2268
    %v2270 = vpop.f32.mrb[0].mxu0
    %2271 = vmatprep.mubr.f32.mxu0 0.0
    %2272 = vmatmul.mubr.f32.gmra.mrb[0].mxu0 %v2115
    %v2273 = vpop.f32.mrb[0].mxu0
    %v2274 = vadd.f32 0.0, %v2273
    %v2275 = vpop.f32.mrb[0].mxu0
    %2276 = vmatprep.mubr.f32.mxu0 0.0
    %2277 = vmatmul.mubr.f32.gmra.mrb[0].mxu0 %v2118
    %v2278 = vpop.f32.mrb[0].mxu0
    %v2279 = vadd.f32 0.0, %v2278
    %v2280 = vpop.f32.mrb[0].mxu0
    %2281 = vmatprep.mubr.f32.mxu0 0.0
    %2282 = vmatmul.mubr.f32.gmra.mrb[0].mxu0 %v2121
    %v2283 = vpop.f32.mrb[0].mxu0
    %v2284 = vadd.f32 0.0, %v2283
    %v2285 = vpop.f32.mrb[0].mxu0
    %2286 = vmatprep.mubr.f32.mxu0 0.0
    %2287 = vmatmul.mubr.f32.gmra.mrb[0].mxu0 %v2124
    %v2288 = vpop.f32.mrb[0].mxu0
    %v2289 = vadd.f32 0.0, %v2288
    %v2290 = vpop.f32.mrb[0].mxu0
    %2291 = vmatprep.mubr.f32.mxu0 0.0
    %2292 = vmatmul.mubr.f32.gmra.mrb[0].mxu0 %v2127
    %v2293 = vpop.f32.mrb[0].mxu0
    %v2294 = vadd.f32 0.0, %v2293
    %v2295 = vpop.f32.mrb[0].mxu0
    %2296 = vmatprep.mubr.f32.mxu0 0.0
    %2297 = vmatmul.mubr.f32.gmra.mrb[0].mxu0 %v2130
    %v2298 = vpop.f32.mrb[0].mxu0
    %v2299 = vadd.f32 0.0, %v2298
    %v2300 = vpop.f32.mrb[0].mxu0
    %2301 = vmatprep.mubr.f32.mxu0 0.0
    %2302 = vmatmul.mubr.f32.gmra.mrb[0].mxu0 %v2133
    %v2303 = vpop.f32.mrb[0].mxu0
    %v2304 = vadd.f32 0.0, %v2303
    %v2305 = vpop.f32.mrb[0].mxu0
    %2306 = vmatprep.mubr.f32.mxu0 0.0
    %2307 = vmatmul.mubr.f32.gmra.mrb[0].mxu0 %v2136
    %v2308 = vpop.f32.mrb[0].mxu0
    %v2309 = vadd.f32 0.0, %v2308
    %v2310 = vpop.f32.mrb[0].mxu0
    %2311 = vmatprep.mubr.f32.mxu0 0.0
    %2312 = vmatmul.mubr.f32.gmra.mrb[0].mxu0 %v2139
    %v2313 = vpop.f32.mrb[0].mxu0
    %v2314 = vadd.f32 0.0, %v2313
    %v2315 = vpop.f32.mrb[0].mxu0
    %2316 = vmatprep.mubr.f32.mxu0 0.0
    %2317 = vmatmul.mubr.f32.gmra.mrb[0].mxu0 %v2142
    %v2318 = vpop.f32.mrb[0].mxu0
    %v2319 = vadd.f32 0.0, %v2318
    %v2320 = vpop.f32.mrb[0].mxu0
    %2321 = vmatprep.mubr.f32.mxu0 0.0
    %2322 = vmatmul.mubr.f32.gmra.mrb[0].mxu0 %v2145
    %v2323 = vpop.f32.mrb[0].mxu0
    %v2324 = vadd.f32 0.0, %v2323
    %v2325 = vpop.f32.mrb[0].mxu0
    %2326 = vmatprep.mubr.f32.mxu0 0.0
    %2327 = vmatmul.mubr.f32.gmra.mrb[0].mxu0 %v2148
    %v2328 = vpop.f32.mrb[0].mxu0
    %v2329 = vadd.f32 0.0, %v2328
    %v2330 = vpop.f32.mrb[0].mxu0
    %2331 = vmatprep.mubr.f32.mxu0 0.0
    %2332 = vmatmul.mubr.f32.gmra.mrb[0].mxu0 %v2151
    %v2333 = vpop.f32.mrb[0].mxu0
    %v2334 = vadd.f32 0.0, %v2333
    %v2335 = vpop.f32.mrb[0].mxu0
    %2336 = vmatprep.mubr.f32.mxu0 0.0
    %2337 = vmatmul.mubr.f32.gmra.mrb[0].mxu0 %v2154
    %v2338 = vpop.f32.mrb[0].mxu0
    %v2339 = vadd.f32 0.0, %v2338
    %v2340 = vpop.f32.mrb[0].mxu0
    %2341 = vmatprep.mubr.f32.mxu0 0.0
    %2342 = vmatmul.mubr.f32.gmra.mrb[0].mxu0 %v2157
    %v2343 = vpop.f32.mrb[0].mxu0
    %v2344 = vadd.f32 0.0, %v2343
    %v2345 = vpop.f32.mrb[0].mxu0
    %2346 = vmatprep.mubr.f32.mxu0 0.0
    %2347 = vmatmul.mubr.f32.gmra.mrb[0].mxu0 %v2160
    %v2348 = vpop.f32.mrb[0].mxu0
    %v2349 = vadd.f32 0.0, %v2348
    %v2350 = vpop.f32.mrb[0].mxu0
    %2351 = vdwg.mxu0
    %v2352 = vld [vmem:[#allocation3 + $0x16] sm:$0xff]
    %v2353 = vld [vmem:[#allocation3 + $0x1e] sm:$0xff]
    %v2354 = vld [vmem:[#allocation3 + $0x26] sm:$0xff]
    %v2355 = vld [vmem:[#allocation3 + $0x2e] sm:$0xff]
    %v2356 = vld [vmem:[#allocation3 + $0x36] sm:$0xff]
    %v2357 = vld [vmem:[#allocation3 + $0x3e] sm:$0xff]
    %v2358 = vld [vmem:[#allocation3 + $0x46] sm:$0xff]
    %v2359 = vld [vmem:[#allocation3 + $0x4e] sm:$0xff]
    %v2360 = vld [vmem:[#allocation3 + $0x56] sm:$0xff]
    %v2361 = vld [vmem:[#allocation3 + $0x5e] sm:$0xff]
    %v2362 = vld [vmem:[#allocation3 + $0x66] sm:$0xff]
    %v2363 = vld [vmem:[#allocation3 + $0x6e] sm:$0xff]
    %v2364 = vld [vmem:[#allocation3 + $0x76] sm:$0xff]
    %v2365 = vld [vmem:[#allocation3 + $0x7e] sm:$0xff]
    %v2366 = vld [vmem:[#allocation3 + $0x86] sm:$0xff]
    %v2367 = vld [vmem:[#allocation3 + $0x8e] sm:$0xff]
    %v2368 = vld [vmem:[#allocation3 + $0x96] sm:$0xff]
    %v2369 = vld [vmem:[#allocation3 + $0x9e] sm:$0xff]
    %v2370 = vld [vmem:[#allocation3 + $0xa6] sm:$0xff]
    %v2371 = vld [vmem:[#allocation3 + $0xae] sm:$0xff]
    %v2372 = vld [vmem:[#allocation3 + $0xb6] sm:$0xff]
    %v2373 = vld [vmem:[#allocation3 + $0xbe] sm:$0xff]
    %v2374 = vld [vmem:[#allocation3 + $0xc6] sm:$0xff]
    %v2375 = vld [vmem:[#allocation3 + $0xce] sm:$0xff]
    %v2376 = vld [vmem:[#allocation3 + $0xd6] sm:$0xff]
    %s2377 = scalar_lea.vmem %s3, 512
    %v2378 = vld [vmem:[%s2377] sm:$0xff]
    %v2379 = vld [vmem:[%s2377 + $0x8] sm:$0xff]
    %v2380 = vld [vmem:[%s2377 + $0x10] sm:$0xff]
    %v2381 = vld [vmem:[%s2377 + $0x18] sm:$0xff]
    %v2382 = vld [vmem:[%s2377 + $0x20] sm:$0xff]
    %v2383 = vld [vmem:[%s2377 + $0x28] sm:$0xff]
    %v2384 = vld [vmem:[%s2377 + $0x30] sm:$0xff]
    %v2385 = vld [vmem:[%s2377 + $0x38] sm:$0xff]
    %v2387 = vsel %vm761, %v2352, 0
    %v2390 = vsel %vm761, %v2353, 0
    %v2393 = vsel %vm761, %v2354, 0
    %v2396 = vsel %vm761, %v2355, 0
    %v2399 = vsel %vm761, %v2356, 0
    %v2402 = vsel %vm761, %v2357, 0
    %v2405 = vsel %vm761, %v2358, 0
    %v2408 = vsel %vm761, %v2359, 0
    %v2411 = vsel %vm761, %v2360, 0
    %v2414 = vsel %vm761, %v2361, 0
    %v2417 = vsel %vm761, %v2362, 0
    %v2420 = vsel %vm761, %v2363, 0
    %v2423 = vsel %vm761, %v2364, 0
    %v2426 = vsel %vm761, %v2365, 0
    %v2429 = vsel %vm761, %v2366, 0
    %v2432 = vsel %vm761, %v2367, 0
    %v2435 = vsel %vm761, %v2368, 0
    %v2438 = vsel %vm761, %v2369, 0
    %v2441 = vsel %vm761, %v2370, 0
    %v2444 = vsel %vm761, %v2371, 0
    %v2447 = vsel %vm761, %v2372, 0
    %v2450 = vsel %vm761, %v2373, 0
    %v2453 = vsel %vm761, %v2374, 0
    %v2456 = vsel %vm761, %v2375, 0
    %v2459 = vsel %vm761, %v2376, 0
    %2461 = vmatprep.subr.mxu0 0.0
    %2462 = vmatpush1.msra.mxu0 %v2378
    %2463 = vmatprep.subr.mxu0 0.0
    %2464 = vmatpush1.msra.mxu0 %v2379
    %2465 = vmatprep.subr.mxu0 0.0
    %2466 = vmatpush1.msra.mxu0 %v2380
    %2467 = vmatprep.subr.mxu0 0.0
    %2468 = vmatpush1.msra.mxu0 %v2381
    %2469 = vmatprep.subr.mxu0 0.0
    %2470 = vmatpush1.msra.mxu0 %v2382
    %2471 = vmatprep.subr.mxu0 0.0
    %2472 = vmatpush1.msra.mxu0 %v2383
    %2473 = vmatprep.subr.mxu0 0.0
    %2474 = vmatpush1.msra.mxu0 %v2384
    %2475 = vmatprep.subr.mxu0 0.0
    %2476 = vmatpush1.msra.mxu0 %v2385
    %2477 = vmatprep.subr.mxu0 0.0
    %2478 = vmatpush1.msra.mxu0 0.0
    %2479 = vmatprep.subr.mxu0 0.0
    %2480 = vmatpush1.msra.mxu0 0.0
    %2481 = vmatprep.subr.mxu0 0.0
    %2482 = vmatpush1.msra.mxu0 0.0
    %2483 = vmatprep.subr.mxu0 0.0
    %2484 = vmatpush1.msra.mxu0 0.0
    %2485 = vmatprep.subr.mxu0 0.0
    %2486 = vmatpush1.msra.mxu0 0.0
    %2487 = vmatprep.subr.mxu0 0.0
    %2488 = vmatpush1.msra.mxu0 0.0
    %2489 = vmatprep.subr.mxu0 0.0
    %2490 = vmatpush1.msra.mxu0 0.0
    %2491 = vmatprep.subr.mxu0 0.0
    %2492 = vmatpush1.msra.mxu0 0.0
    %2493 = vmatprep.subr.mxu0 0.0
    %2494 = vmatpush1.msra.mxu0 0.0
    %2495 = vmatprep.subr.mxu0 0.0
    %2496 = vmatpush1.msra.mxu0 0.0
    %2497 = vmatprep.subr.mxu0 0.0
    %2498 = vmatpush1.msra.mxu0 0.0
    %2499 = vmatprep.subr.mxu0 0.0
    %2500 = vmatpush1.msra.mxu0 0.0
    %2501 = vmatprep.subr.mxu0 0.0
    %2502 = vmatpush1.msra.mxu0 0.0
    %2503 = vmatprep.subr.mxu0 0.0
    %2504 = vmatpush1.msra.mxu0 0.0
    %2505 = vmatprep.subr.mxu0 0.0
    %2506 = vmatpush1.msra.mxu0 0.0
    %2507 = vmatprep.subr.mxu0 0.0
    %2508 = vmatpush1.msra.mxu0 0.0
    %2509 = vmatprep.subr.mxu0 0.0
    %2510 = vmatpush1.msra.mxu0 0.0
    %2511 = vmatprep.subr.mxu0 0.0
    %2512 = vmatpush1.msra.mxu0 0.0
    %2513 = vmatprep.subr.mxu0 0.0
    %2514 = vmatpush1.msra.mxu0 0.0
    %2515 = vmatprep.subr.mxu0 0.0
    %2516 = vmatpush1.msra.mxu0 0.0
    %2517 = vmatprep.subr.mxu0 0.0
    %2518 = vmatpush1.msra.mxu0 0.0
    %2519 = vmatprep.subr.mxu0 0.0
    %2520 = vmatpush1.msra.mxu0 0.0
    %2521 = vmatprep.subr.mxu0 0.0
    %2522 = vmatpush1.msra.mxu0 0.0
    %2523 = vmatprep.subr.mxu0 0.0
    %2524 = vmatpush1.msra.mxu0 0.0
    %2525 = vmatprep.mubr.f32.mxu0 0.0
    %2526 = vmatmul.mubr.f32.gmra.mrb[0].mxu0 %v2387
    %v2527 = vpop.f32.mrb[0].mxu0
    %v2528 = vadd.f32 0.0, %v2527
    %v2529 = vpop.f32.mrb[0].mxu0
    %2530 = vmatprep.mubr.f32.mxu0 0.0
    %2531 = vmatmul.mubr.f32.gmra.mrb[0].mxu0 %v2390
    %v2532 = vpop.f32.mrb[0].mxu0
    %v2533 = vadd.f32 0.0, %v2532
    %v2534 = vpop.f32.mrb[0].mxu0
    %2535 = vmatprep.mubr.f32.mxu0 0.0
    %2536 = vmatmul.mubr.f32.gmra.mrb[0].mxu0 %v2393
    %v2537 = vpop.f32.mrb[0].mxu0
    %v2538 = vadd.f32 0.0, %v2537
    %v2539 = vpop.f32.mrb[0].mxu0
    %2540 = vmatprep.mubr.f32.mxu0 0.0
    %2541 = vmatmul.mubr.f32.gmra.mrb[0].mxu0 %v2396
    %v2542 = vpop.f32.mrb[0].mxu0
    %v2543 = vadd.f32 0.0, %v2542
    %v2544 = vpop.f32.mrb[0].mxu0
    %2545 = vmatprep.mubr.f32.mxu0 0.0
    %2546 = vmatmul.mubr.f32.gmra.mrb[0].mxu0 %v2399
    %v2547 = vpop.f32.mrb[0].mxu0
    %v2548 = vadd.f32 0.0, %v2547
    %v2549 = vpop.f32.mrb[0].mxu0
    %2550 = vmatprep.mubr.f32.mxu0 0.0
    %2551 = vmatmul.mubr.f32.gmra.mrb[0].mxu0 %v2402
    %v2552 = vpop.f32.mrb[0].mxu0
    %v2553 = vadd.f32 0.0, %v2552
    %v2554 = vpop.f32.mrb[0].mxu0
    %2555 = vmatprep.mubr.f32.mxu0 0.0
    %2556 = vmatmul.mubr.f32.gmra.mrb[0].mxu0 %v2405
    %v2557 = vpop.f32.mrb[0].mxu0
    %v2558 = vadd.f32 0.0, %v2557
    %v2559 = vpop.f32.mrb[0].mxu0
    %2560 = vmatprep.mubr.f32.mxu0 0.0
    %2561 = vmatmul.mubr.f32.gmra.mrb[0].mxu0 %v2408
    %v2562 = vpop.f32.mrb[0].mxu0
    %v2563 = vadd.f32 0.0, %v2562
    %v2564 = vpop.f32.mrb[0].mxu0
    %2565 = vmatprep.mubr.f32.mxu0 0.0
    %2566 = vmatmul.mubr.f32.gmra.mrb[0].mxu0 %v2411
    %v2567 = vpop.f32.mrb[0].mxu0
    %v2568 = vadd.f32 0.0, %v2567
    %v2569 = vpop.f32.mrb[0].mxu0
    %2570 = vmatprep.mubr.f32.mxu0 0.0
    %2571 = vmatmul.mubr.f32.gmra.mrb[0].mxu0 %v2414
    %v2572 = vpop.f32.mrb[0].mxu0
    %v2573 = vadd.f32 0.0, %v2572
    %v2574 = vpop.f32.mrb[0].mxu0
    %2575 = vmatprep.mubr.f32.mxu0 0.0
    %2576 = vmatmul.mubr.f32.gmra.mrb[0].mxu0 %v2417
    %v2577 = vpop.f32.mrb[0].mxu0
    %v2578 = vadd.f32 0.0, %v2577
    %v2579 = vpop.f32.mrb[0].mxu0
    %2580 = vmatprep.mubr.f32.mxu0 0.0
    %2581 = vmatmul.mubr.f32.gmra.mrb[0].mxu0 %v2420
    %v2582 = vpop.f32.mrb[0].mxu0
    %v2583 = vadd.f32 0.0, %v2582
    %v2584 = vpop.f32.mrb[0].mxu0
    %2585 = vmatprep.mubr.f32.mxu0 0.0
    %2586 = vmatmul.mubr.f32.gmra.mrb[0].mxu0 %v2423
    %v2587 = vpop.f32.mrb[0].mxu0
    %v2588 = vadd.f32 0.0, %v2587
    %v2589 = vpop.f32.mrb[0].mxu0
    %2590 = vmatprep.mubr.f32.mxu0 0.0
    %2591 = vmatmul.mubr.f32.gmra.mrb[0].mxu0 %v2426
    %v2592 = vpop.f32.mrb[0].mxu0
    %v2593 = vadd.f32 0.0, %v2592
    %v2594 = vpop.f32.mrb[0].mxu0
    %2595 = vmatprep.mubr.f32.mxu0 0.0
    %2596 = vmatmul.mubr.f32.gmra.mrb[0].mxu0 %v2429
    %v2597 = vpop.f32.mrb[0].mxu0
    %v2598 = vadd.f32 0.0, %v2597
    %v2599 = vpop.f32.mrb[0].mxu0
    %2600 = vmatprep.mubr.f32.mxu0 0.0
    %2601 = vmatmul.mubr.f32.gmra.mrb[0].mxu0 %v2432
    %v2602 = vpop.f32.mrb[0].mxu0
    %v2603 = vadd.f32 0.0, %v2602
    %v2604 = vpop.f32.mrb[0].mxu0
    %2605 = vmatprep.mubr.f32.mxu0 0.0
    %2606 = vmatmul.mubr.f32.gmra.mrb[0].mxu0 %v2435
    %v2607 = vpop.f32.mrb[0].mxu0
    %v2608 = vadd.f32 0.0, %v2607
    %v2609 = vpop.f32.mrb[0].mxu0
    %2610 = vmatprep.mubr.f32.mxu0 0.0
    %2611 = vmatmul.mubr.f32.gmra.mrb[0].mxu0 %v2438
    %v2612 = vpop.f32.mrb[0].mxu0
    %v2613 = vadd.f32 0.0, %v2612
    %v2614 = vpop.f32.mrb[0].mxu0
    %2615 = vmatprep.mubr.f32.mxu0 0.0
    %2616 = vmatmul.mubr.f32.gmra.mrb[0].mxu0 %v2441
    %v2617 = vpop.f32.mrb[0].mxu0
    %v2618 = vadd.f32 0.0, %v2617
    %v2619 = vpop.f32.mrb[0].mxu0
    %2620 = vmatprep.mubr.f32.mxu0 0.0
    %2621 = vmatmul.mubr.f32.gmra.mrb[0].mxu0 %v2444
    %v2622 = vpop.f32.mrb[0].mxu0
    %v2623 = vadd.f32 0.0, %v2622
    %v2624 = vpop.f32.mrb[0].mxu0
    %2625 = vmatprep.mubr.f32.mxu0 0.0
    %2626 = vmatmul.mubr.f32.gmra.mrb[0].mxu0 %v2447
    %v2627 = vpop.f32.mrb[0].mxu0
    %v2628 = vadd.f32 0.0, %v2627
    %v2629 = vpop.f32.mrb[0].mxu0
    %2630 = vmatprep.mubr.f32.mxu0 0.0
    %2631 = vmatmul.mubr.f32.gmra.mrb[0].mxu0 %v2450
    %v2632 = vpop.f32.mrb[0].mxu0
    %v2633 = vadd.f32 0.0, %v2632
    %v2634 = vpop.f32.mrb[0].mxu0
    %2635 = vmatprep.mubr.f32.mxu0 0.0
    %2636 = vmatmul.mubr.f32.gmra.mrb[0].mxu0 %v2453
    %v2637 = vpop.f32.mrb[0].mxu0
    %v2638 = vadd.f32 0.0, %v2637
    %v2639 = vpop.f32.mrb[0].mxu0
    %2640 = vmatprep.mubr.f32.mxu0 0.0
    %2641 = vmatmul.mubr.f32.gmra.mrb[0].mxu0 %v2456
    %v2642 = vpop.f32.mrb[0].mxu0
    %v2643 = vadd.f32 0.0, %v2642
    %v2644 = vpop.f32.mrb[0].mxu0
    %2645 = vmatprep.mubr.f32.mxu0 0.0
    %2646 = vmatmul.mubr.f32.gmra.mrb[0].mxu0 %v2459
    %v2647 = vpop.f32.mrb[0].mxu0
    %v2648 = vadd.f32 0.0, %v2647
    %v2649 = vpop.f32.mrb[0].mxu0
    %2650 = vdwg.mxu0
    %v2652 = vsel %vm761, %v1045, 0
    %v2655 = vsel %vm761, %v1046, 0
    %v2658 = vsel %vm761, %v1047, 0
    %v2661 = vsel %vm761, %v1048, 0
    %v2664 = vsel %vm761, %v1049, 0
    %v2667 = vsel %vm761, %v1050, 0
    %v2670 = vsel %vm761, %v1051, 0
    %v2673 = vsel %vm761, %v1052, 0
    %v2676 = vsel %vm761, %v1053, 0
    %v2679 = vsel %vm761, %v1054, 0
    %v2682 = vsel %vm761, %v1055, 0
    %v2685 = vsel %vm761, %v1056, 0
    %v2688 = vsel %vm761, %v1057, 0
    %v2691 = vsel %vm761, %v1058, 0
    %v2694 = vsel %vm761, %v1059, 0
    %v2697 = vsel %vm761, %v1060, 0
    %v2700 = vsel %vm761, %v1061, 0
    %v2703 = vsel %vm761, %v1062, 0
    %v2706 = vsel %vm761, %v1063, 0
    %v2709 = vsel %vm761, %v1064, 0
    %v2712 = vsel %vm761, %v1065, 0
    %v2715 = vsel %vm761, %v1066, 0
    %v2718 = vsel %vm761, %v1067, 0
    %v2721 = vsel %vm761, %v1068, 0
    %v2724 = vsel %vm761, %v1069, 0
    %2726 = vmatprep.subr.mxu0 0.0
    %2727 = vmatpush1.msra.mxu0 %v1070
    %2728 = vmatprep.subr.mxu0 0.0
    %2729 = vmatpush1.msra.mxu0 %v1071
    %2730 = vmatprep.subr.mxu0 0.0
    %2731 = vmatpush1.msra.mxu0 %v1072
    %2732 = vmatprep.subr.mxu0 0.0
    %2733 = vmatpush1.msra.mxu0 %v1073
    %2734 = vmatprep.subr.mxu0 0.0
    %2735 = vmatpush1.msra.mxu0 %v1074
    %2736 = vmatprep.subr.mxu0 0.0
    %2737 = vmatpush1.msra.mxu0 %v1075
    %2738 = vmatprep.subr.mxu0 0.0
    %2739 = vmatpush1.msra.mxu0 %v1076
    %2740 = vmatprep.subr.mxu0 0.0
    %2741 = vmatpush1.msra.mxu0 %v1077
    %2742 = vmatprep.subr.mxu0 0.0
    %2743 = vmatpush1.msra.mxu0 0.0
    %2744 = vmatprep.subr.mxu0 0.0
    %2745 = vmatpush1.msra.mxu0 0.0
    %2746 = vmatprep.subr.mxu0 0.0
    %2747 = vmatpush1.msra.mxu0 0.0
    %2748 = vmatprep.subr.mxu0 0.0
    %2749 = vmatpush1.msra.mxu0 0.0
    %2750 = vmatprep.subr.mxu0 0.0
    %2751 = vmatpush1.msra.mxu0 0.0
    %2752 = vmatprep.subr.mxu0 0.0
    %2753 = vmatpush1.msra.mxu0 0.0
    %2754 = vmatprep.subr.mxu0 0.0
    %2755 = vmatpush1.msra.mxu0 0.0
    %2756 = vmatprep.subr.mxu0 0.0
    %2757 = vmatpush1.msra.mxu0 0.0
    %2758 = vmatprep.subr.mxu0 0.0
    %2759 = vmatpush1.msra.mxu0 0.0
    %2760 = vmatprep.subr.mxu0 0.0
    %2761 = vmatpush1.msra.mxu0 0.0
    %2762 = vmatprep.subr.mxu0 0.0
    %2763 = vmatpush1.msra.mxu0 0.0
    %2764 = vmatprep.subr.mxu0 0.0
    %2765 = vmatpush1.msra.mxu0 0.0
    %2766 = vmatprep.subr.mxu0 0.0
    %2767 = vmatpush1.msra.mxu0 0.0
    %2768 = vmatprep.subr.mxu0 0.0
    %2769 = vmatpush1.msra.mxu0 0.0
    %2770 = vmatprep.subr.mxu0 0.0
    %2771 = vmatpush1.msra.mxu0 0.0
    %2772 = vmatprep.subr.mxu0 0.0
    %2773 = vmatpush1.msra.mxu0 0.0
    %2774 = vmatprep.subr.mxu0 0.0
    %2775 = vmatpush1.msra.mxu0 0.0
    %2776 = vmatprep.subr.mxu0 0.0
    %2777 = vmatpush1.msra.mxu0 0.0
    %2778 = vmatprep.subr.mxu0 0.0
    %2779 = vmatpush1.msra.mxu0 0.0
    %2780 = vmatprep.subr.mxu0 0.0
    %2781 = vmatpush1.msra.mxu0 0.0
    %2782 = vmatprep.subr.mxu0 0.0
    %2783 = vmatpush1.msra.mxu0 0.0
    %2784 = vmatprep.subr.mxu0 0.0
    %2785 = vmatpush1.msra.mxu0 0.0
    %2786 = vmatprep.subr.mxu0 0.0
    %2787 = vmatpush1.msra.mxu0 0.0
    %2788 = vmatprep.subr.mxu0 0.0
    %2789 = vmatpush1.msra.mxu0 0.0
    %2790 = vmatprep.mubr.f32.mxu0 0.0
    %2791 = vmatmul.mubr.f32.gmra.mrb[0].mxu0 %v2652
    %v2792 = vpop.f32.mrb[0].mxu0
    %v2793 = vadd.f32 %v1254, %v2792
    %v2794 = vpop.f32.mrb[0].mxu0
    %2795 = vmatprep.mubr.f32.mxu0 0.0
    %2796 = vmatmul.mubr.f32.gmra.mrb[0].mxu0 %v2655
    %v2797 = vpop.f32.mrb[0].mxu0
    %v2798 = vadd.f32 %v1259, %v2797
    %v2799 = vpop.f32.mrb[0].mxu0
    %2800 = vmatprep.mubr.f32.mxu0 0.0
    %2801 = vmatmul.mubr.f32.gmra.mrb[0].mxu0 %v2658
    %v2802 = vpop.f32.mrb[0].mxu0
    %v2803 = vadd.f32 %v1264, %v2802
    %v2804 = vpop.f32.mrb[0].mxu0
    %2805 = vmatprep.mubr.f32.mxu0 0.0
    %2806 = vmatmul.mubr.f32.gmra.mrb[0].mxu0 %v2661
    %v2807 = vpop.f32.mrb[0].mxu0
    %v2808 = vadd.f32 %v1269, %v2807
    %v2809 = vpop.f32.mrb[0].mxu0
    %2810 = vmatprep.mubr.f32.mxu0 0.0
    %2811 = vmatmul.mubr.f32.gmra.mrb[0].mxu0 %v2664
    %v2812 = vpop.f32.mrb[0].mxu0
    %v2813 = vadd.f32 %v1274, %v2812
    %v2814 = vpop.f32.mrb[0].mxu0
    %2815 = vmatprep.mubr.f32.mxu0 0.0
    %2816 = vmatmul.mubr.f32.gmra.mrb[0].mxu0 %v2667
    %v2817 = vpop.f32.mrb[0].mxu0
    %v2818 = vadd.f32 %v1279, %v2817
    %v2819 = vpop.f32.mrb[0].mxu0
    %2820 = vmatprep.mubr.f32.mxu0 0.0
    %2821 = vmatmul.mubr.f32.gmra.mrb[0].mxu0 %v2670
    %v2822 = vpop.f32.mrb[0].mxu0
    %v2823 = vadd.f32 %v1284, %v2822
    %v2824 = vpop.f32.mrb[0].mxu0
    %2825 = vmatprep.mubr.f32.mxu0 0.0
    %2826 = vmatmul.mubr.f32.gmra.mrb[0].mxu0 %v2673
    %v2827 = vpop.f32.mrb[0].mxu0
    %v2828 = vadd.f32 %v1289, %v2827
    %v2829 = vpop.f32.mrb[0].mxu0
    %2830 = vmatprep.mubr.f32.mxu0 0.0
    %2831 = vmatmul.mubr.f32.gmra.mrb[0].mxu0 %v2676
    %v2832 = vpop.f32.mrb[0].mxu0
    %v2833 = vadd.f32 %v1294, %v2832
    %v2834 = vpop.f32.mrb[0].mxu0
    %2835 = vmatprep.mubr.f32.mxu0 0.0
    %2836 = vmatmul.mubr.f32.gmra.mrb[0].mxu0 %v2679
    %v2837 = vpop.f32.mrb[0].mxu0
    %v2838 = vadd.f32 %v1299, %v2837
    %v2839 = vpop.f32.mrb[0].mxu0
    %2840 = vmatprep.mubr.f32.mxu0 0.0
    %2841 = vmatmul.mubr.f32.gmra.mrb[0].mxu0 %v2682
    %v2842 = vpop.f32.mrb[0].mxu0
    %v2843 = vadd.f32 %v1304, %v2842
    %v2844 = vpop.f32.mrb[0].mxu0
    %2845 = vmatprep.mubr.f32.mxu0 0.0
    %2846 = vmatmul.mubr.f32.gmra.mrb[0].mxu0 %v2685
    %v2847 = vpop.f32.mrb[0].mxu0
    %v2848 = vadd.f32 %v1309, %v2847
    %v2849 = vpop.f32.mrb[0].mxu0
    %2850 = vmatprep.mubr.f32.mxu0 0.0
    %2851 = vmatmul.mubr.f32.gmra.mrb[0].mxu0 %v2688
    %v2852 = vpop.f32.mrb[0].mxu0
    %v2853 = vadd.f32 %v1314, %v2852
    %v2854 = vpop.f32.mrb[0].mxu0
    %2855 = vmatprep.mubr.f32.mxu0 0.0
    %2856 = vmatmul.mubr.f32.gmra.mrb[0].mxu0 %v2691
    %v2857 = vpop.f32.mrb[0].mxu0
    %v2858 = vadd.f32 %v1319, %v2857
    %v2859 = vpop.f32.mrb[0].mxu0
    %2860 = vmatprep.mubr.f32.mxu0 0.0
    %2861 = vmatmul.mubr.f32.gmra.mrb[0].mxu0 %v2694
    %v2862 = vpop.f32.mrb[0].mxu0
    %v2863 = vadd.f32 %v1324, %v2862
    %v2864 = vpop.f32.mrb[0].mxu0
    %2865 = vmatprep.mubr.f32.mxu0 0.0
    %2866 = vmatmul.mubr.f32.gmra.mrb[0].mxu0 %v2697
    %v2867 = vpop.f32.mrb[0].mxu0
    %v2868 = vadd.f32 %v1329, %v2867
    %v2869 = vpop.f32.mrb[0].mxu0
    %2870 = vmatprep.mubr.f32.mxu0 0.0
    %2871 = vmatmul.mubr.f32.gmra.mrb[0].mxu0 %v2700
    %v2872 = vpop.f32.mrb[0].mxu0
    %v2873 = vadd.f32 %v1334, %v2872
    %v2874 = vpop.f32.mrb[0].mxu0
    %2875 = vmatprep.mubr.f32.mxu0 0.0
    %2876 = vmatmul.mubr.f32.gmra.mrb[0].mxu0 %v2703
    %v2877 = vpop.f32.mrb[0].mxu0
    %v2878 = vadd.f32 %v1339, %v2877
    %v2879 = vpop.f32.mrb[0].mxu0
    %2880 = vmatprep.mubr.f32.mxu0 0.0
    %2881 = vmatmul.mubr.f32.gmra.mrb[0].mxu0 %v2706
    %v2882 = vpop.f32.mrb[0].mxu0
    %v2883 = vadd.f32 %v1344, %v2882
    %v2884 = vpop.f32.mrb[0].mxu0
    %2885 = vmatprep.mubr.f32.mxu0 0.0
    %2886 = vmatmul.mubr.f32.gmra.mrb[0].mxu0 %v2709
    %v2887 = vpop.f32.mrb[0].mxu0
    %v2888 = vadd.f32 %v1349, %v2887
    %v2889 = vpop.f32.mrb[0].mxu0
    %2890 = vmatprep.mubr.f32.mxu0 0.0
    %2891 = vmatmul.mubr.f32.gmra.mrb[0].mxu0 %v2712
    %v2892 = vpop.f32.mrb[0].mxu0
    %v2893 = vadd.f32 %v1354, %v2892
    %v2894 = vpop.f32.mrb[0].mxu0
    %2895 = vmatprep.mubr.f32.mxu0 0.0
    %2896 = vmatmul.mubr.f32.gmra.mrb[0].mxu0 %v2715
    %v2897 = vpop.f32.mrb[0].mxu0
    %v2898 = vadd.f32 %v1359, %v2897
    %v2899 = vpop.f32.mrb[0].mxu0
    %2900 = vmatprep.mubr.f32.mxu0 0.0
    %2901 = vmatmul.mubr.f32.gmra.mrb[0].mxu0 %v2718
    %v2902 = vpop.f32.mrb[0].mxu0
    %v2903 = vadd.f32 %v1364, %v2902
    %v2904 = vpop.f32.mrb[0].mxu0
    %2905 = vmatprep.mubr.f32.mxu0 0.0
    %2906 = vmatmul.mubr.f32.gmra.mrb[0].mxu0 %v2721
    %v2907 = vpop.f32.mrb[0].mxu0
    %v2908 = vadd.f32 %v1369, %v2907
    %v2909 = vpop.f32.mrb[0].mxu0
    %2910 = vmatprep.mubr.f32.mxu0 0.0
    %2911 = vmatmul.mubr.f32.gmra.mrb[0].mxu0 %v2724
    %v2912 = vpop.f32.mrb[0].mxu0
    %v2913 = vadd.f32 %v1374, %v2912
    %v2914 = vpop.f32.mrb[0].mxu0
    %2915 = vdwg.mxu0
    %v2917 = vsel %vm761, %v1377, 0
    %2919 = vmatprep.subr.mxu0 0.0
    %2920 = vmatpush1.msra.mxu0 %v1403
    %2921 = vmatprep.subr.mxu0 0.0
    %2922 = vmatpush1.msra.mxu0 %v1404
    %2923 = vmatprep.subr.mxu0 0.0
    %2924 = vmatpush1.msra.mxu0 %v1405
    %2925 = vmatprep.subr.mxu0 0.0
    %2926 = vmatpush1.msra.mxu0 %v1406
    %2927 = vmatprep.subr.mxu0 0.0
    %2928 = vmatpush1.msra.mxu0 %v1407
    %2929 = vmatprep.subr.mxu0 0.0
    %2930 = vmatpush1.msra.mxu0 %v1408
    %2931 = vmatprep.subr.mxu0 0.0
    %2932 = vmatpush1.msra.mxu0 %v1409
    %2933 = vmatprep.subr.mxu0 0.0
    %2934 = vmatpush1.msra.mxu0 %v1410
    %2935 = vmatprep.subr.mxu0 0.0
    %2936 = vmatpush1.msra.mxu0 0.0
    %2937 = vmatprep.subr.mxu0 0.0
    %2938 = vmatpush1.msra.mxu0 0.0
    %2939 = vmatprep.subr.mxu0 0.0
    %2940 = vmatpush1.msra.mxu0 0.0
    %2941 = vmatprep.subr.mxu0 0.0
    %2942 = vmatpush1.msra.mxu0 0.0
    %2943 = vmatprep.subr.mxu0 0.0
    %2944 = vmatpush1.msra.mxu0 0.0
    %2945 = vmatprep.subr.mxu0 0.0
    %2946 = vmatpush1.msra.mxu0 0.0
    %2947 = vmatprep.subr.mxu0 0.0
    %2948 = vmatpush1.msra.mxu0 0.0
    %2949 = vmatprep.subr.mxu0 0.0
    %2950 = vmatpush1.msra.mxu0 0.0
    %2951 = vmatprep.subr.mxu0 0.0
    %2952 = vmatpush1.msra.mxu0 0.0
    %2953 = vmatprep.subr.mxu0 0.0
    %2954 = vmatpush1.msra.mxu0 0.0
    %2955 = vmatprep.subr.mxu0 0.0
    %2956 = vmatpush1.msra.mxu0 0.0
    %2957 = vmatprep.subr.mxu0 0.0
    %2958 = vmatpush1.msra.mxu0 0.0
    %2959 = vmatprep.subr.mxu0 0.0
    %2960 = vmatpush1.msra.mxu0 0.0
    %2961 = vmatprep.subr.mxu0 0.0
    %2962 = vmatpush1.msra.mxu0 0.0
    %2963 = vmatprep.subr.mxu0 0.0
    %2964 = vmatpush1.msra.mxu0 0.0
    %2965 = vmatprep.subr.mxu0 0.0
    %2966 = vmatpush1.msra.mxu0 0.0
    %2967 = vmatprep.subr.mxu0 0.0
    %2968 = vmatpush1.msra.mxu0 0.0
    %2969 = vmatprep.subr.mxu0 0.0
    %2970 = vmatpush1.msra.mxu0 0.0
    %2971 = vmatprep.subr.mxu0 0.0
    %2972 = vmatpush1.msra.mxu0 0.0
    %2973 = vmatprep.subr.mxu0 0.0
    %2974 = vmatpush1.msra.mxu0 0.0
    %2975 = vmatprep.subr.mxu0 0.0
    %2976 = vmatpush1.msra.mxu0 0.0
    %2977 = vmatprep.subr.mxu0 0.0
    %2978 = vmatpush1.msra.mxu0 0.0
    %2979 = vmatprep.subr.mxu0 0.0
    %2980 = vmatpush1.msra.mxu0 0.0
    %2981 = vmatprep.subr.mxu0 0.0
    %2982 = vmatpush1.msra.mxu0 0.0
    %2983 = vmatprep.mubr.f32.mxu0 0.0
    %2984 = vmatmul.mubr.f32.gmra.mrb[0].mxu0 %v2917
    %v2985 = vpop.f32.mrb[0].mxu0
    %v2986 = vadd.f32 %v1563, %v2985
    %v2987 = vpop.f32.mrb[0].mxu0
    %2988 = vmatprep.mubr.f32.mxu0 0.0
    %2989 = vmatmul.mubr.f32.gmra.mrb[0].mxu0 %v1422
    %v2990 = vpop.f32.mrb[0].mxu0
    %v2991 = vadd.f32 %v1568, %v2990
    %v2992 = vpop.f32.mrb[0].mxu0
    %2993 = vmatprep.mubr.f32.mxu0 0.0
    %2994 = vmatmul.mubr.f32.gmra.mrb[0].mxu0 %v1425
    %v2995 = vpop.f32.mrb[0].mxu0
    %v2996 = vadd.f32 %v1573, %v2995
    %v2997 = vpop.f32.mrb[0].mxu0
    %2998 = vmatprep.mubr.f32.mxu0 0.0
    %2999 = vmatmul.mubr.f32.gmra.mrb[0].mxu0 %v1428
    %v3000 = vpop.f32.mrb[0].mxu0
    %v3001 = vadd.f32 %v1578, %v3000
    %v3002 = vpop.f32.mrb[0].mxu0
    %3003 = vmatprep.mubr.f32.mxu0 0.0
    %3004 = vmatmul.mubr.f32.gmra.mrb[0].mxu0 %v1431
    %v3005 = vpop.f32.mrb[0].mxu0
    %v3006 = vadd.f32 %v1583, %v3005
    %v3007 = vpop.f32.mrb[0].mxu0
    %3008 = vmatprep.mubr.f32.mxu0 0.0
    %3009 = vmatmul.mubr.f32.gmra.mrb[0].mxu0 %v1434
    %v3010 = vpop.f32.mrb[0].mxu0
    %v3011 = vadd.f32 %v1588, %v3010
    %v3012 = vpop.f32.mrb[0].mxu0
    %3013 = vmatprep.mubr.f32.mxu0 0.0
    %3014 = vmatmul.mubr.f32.gmra.mrb[0].mxu0 %v1437
    %v3015 = vpop.f32.mrb[0].mxu0
    %v3016 = vadd.f32 %v1593, %v3015
    %v3017 = vpop.f32.mrb[0].mxu0
    %3018 = vmatprep.mubr.f32.mxu0 0.0
    %3019 = vmatmul.mubr.f32.gmra.mrb[0].mxu0 %v1440
    %v3020 = vpop.f32.mrb[0].mxu0
    %v3021 = vadd.f32 %v1598, %v3020
    %v3022 = vpop.f32.mrb[0].mxu0
    %3023 = vmatprep.mubr.f32.mxu0 0.0
    %3024 = vmatmul.mubr.f32.gmra.mrb[0].mxu0 %v1443
    %v3025 = vpop.f32.mrb[0].mxu0
    %v3026 = vadd.f32 %v1603, %v3025
    %v3027 = vpop.f32.mrb[0].mxu0
    %3028 = vmatprep.mubr.f32.mxu0 0.0
    %3029 = vmatmul.mubr.f32.gmra.mrb[0].mxu0 %v1446
    %v3030 = vpop.f32.mrb[0].mxu0
    %v3031 = vadd.f32 %v1608, %v3030
    %v3032 = vpop.f32.mrb[0].mxu0
    %3033 = vmatprep.mubr.f32.mxu0 0.0
    %3034 = vmatmul.mubr.f32.gmra.mrb[0].mxu0 %v1449
    %v3035 = vpop.f32.mrb[0].mxu0
    %v3036 = vadd.f32 %v1613, %v3035
    %v3037 = vpop.f32.mrb[0].mxu0
    %3038 = vmatprep.mubr.f32.mxu0 0.0
    %3039 = vmatmul.mubr.f32.gmra.mrb[0].mxu0 %v1452
    %v3040 = vpop.f32.mrb[0].mxu0
    %v3041 = vadd.f32 %v1618, %v3040
    %v3042 = vpop.f32.mrb[0].mxu0
    %3043 = vmatprep.mubr.f32.mxu0 0.0
    %3044 = vmatmul.mubr.f32.gmra.mrb[0].mxu0 %v1455
    %v3045 = vpop.f32.mrb[0].mxu0
    %v3046 = vadd.f32 %v1623, %v3045
    %v3047 = vpop.f32.mrb[0].mxu0
    %3048 = vmatprep.mubr.f32.mxu0 0.0
    %3049 = vmatmul.mubr.f32.gmra.mrb[0].mxu0 %v1458
    %v3050 = vpop.f32.mrb[0].mxu0
    %v3051 = vadd.f32 %v1628, %v3050
    %v3052 = vpop.f32.mrb[0].mxu0
    %3053 = vmatprep.mubr.f32.mxu0 0.0
    %3054 = vmatmul.mubr.f32.gmra.mrb[0].mxu0 %v1461
    %v3055 = vpop.f32.mrb[0].mxu0
    %v3056 = vadd.f32 %v1633, %v3055
    %v3057 = vpop.f32.mrb[0].mxu0
    %3058 = vmatprep.mubr.f32.mxu0 0.0
    %3059 = vmatmul.mubr.f32.gmra.mrb[0].mxu0 %v1464
    %v3060 = vpop.f32.mrb[0].mxu0
    %v3061 = vadd.f32 %v1638, %v3060
    %v3062 = vpop.f32.mrb[0].mxu0
    %3063 = vmatprep.mubr.f32.mxu0 0.0
    %3064 = vmatmul.mubr.f32.gmra.mrb[0].mxu0 %v1467
    %v3065 = vpop.f32.mrb[0].mxu0
    %v3066 = vadd.f32 %v1643, %v3065
    %v3067 = vpop.f32.mrb[0].mxu0
    %3068 = vmatprep.mubr.f32.mxu0 0.0
    %3069 = vmatmul.mubr.f32.gmra.mrb[0].mxu0 %v1470
    %v3070 = vpop.f32.mrb[0].mxu0
    %v3071 = vadd.f32 %v1648, %v3070
    %v3072 = vpop.f32.mrb[0].mxu0
    %3073 = vmatprep.mubr.f32.mxu0 0.0
    %3074 = vmatmul.mubr.f32.gmra.mrb[0].mxu0 %v1473
    %v3075 = vpop.f32.mrb[0].mxu0
    %v3076 = vadd.f32 %v1653, %v3075
    %v3077 = vpop.f32.mrb[0].mxu0
    %3078 = vmatprep.mubr.f32.mxu0 0.0
    %3079 = vmatmul.mubr.f32.gmra.mrb[0].mxu0 %v1476
    %v3080 = vpop.f32.mrb[0].mxu0
    %v3081 = vadd.f32 %v1658, %v3080
    %v3082 = vpop.f32.mrb[0].mxu0
    %3083 = vmatprep.mubr.f32.mxu0 0.0
    %3084 = vmatmul.mubr.f32.gmra.mrb[0].mxu0 %v1479
    %v3085 = vpop.f32.mrb[0].mxu0
    %v3086 = vadd.f32 %v1663, %v3085
    %v3087 = vpop.f32.mrb[0].mxu0
    %3088 = vmatprep.mubr.f32.mxu0 0.0
    %3089 = vmatmul.mubr.f32.gmra.mrb[0].mxu0 %v1482
    %v3090 = vpop.f32.mrb[0].mxu0
    %v3091 = vadd.f32 %v1668, %v3090
    %v3092 = vpop.f32.mrb[0].mxu0
    %3093 = vmatprep.mubr.f32.mxu0 0.0
    %3094 = vmatmul.mubr.f32.gmra.mrb[0].mxu0 %v1485
    %v3095 = vpop.f32.mrb[0].mxu0
    %v3096 = vadd.f32 %v1673, %v3095
    %v3097 = vpop.f32.mrb[0].mxu0
    %3098 = vmatprep.mubr.f32.mxu0 0.0
    %3099 = vmatmul.mubr.f32.gmra.mrb[0].mxu0 %v1488
    %v3100 = vpop.f32.mrb[0].mxu0
    %v3101 = vadd.f32 %v1678, %v3100
    %v3102 = vpop.f32.mrb[0].mxu0
    %3103 = vmatprep.mubr.f32.mxu0 0.0
    %3104 = vmatmul.mubr.f32.gmra.mrb[0].mxu0 %v1491
    %v3105 = vpop.f32.mrb[0].mxu0
    %v3106 = vadd.f32 %v1683, %v3105
    %v3107 = vpop.f32.mrb[0].mxu0
    %3108 = vdwg.mxu0
    %v3110 = vsel %vm761, %v1686, 0
    %v3113 = vsel %vm761, %v1687, 0
    %v3116 = vsel %vm761, %v1688, 0
    %v3119 = vsel %vm761, %v1689, 0
    %v3122 = vsel %vm761, %v1690, 0
    %v3125 = vsel %vm761, %v1691, 0
    %v3128 = vsel %vm761, %v1692, 0
    %v3131 = vsel %vm761, %v1693, 0
    %v3134 = vsel %vm761, %v1694, 0
    %v3137 = vsel %vm761, %v1695, 0
    %v3140 = vsel %vm761, %v1696, 0
    %v3143 = vsel %vm761, %v1697, 0
    %v3146 = vsel %vm761, %v1698, 0
    %v3149 = vsel %vm761, %v1699, 0
    %v3152 = vsel %vm761, %v1700, 0
    %v3155 = vsel %vm761, %v1701, 0
    %v3158 = vsel %vm761, %v1702, 0
    %v3161 = vsel %vm761, %v1703, 0
    %v3164 = vsel %vm761, %v1704, 0
    %v3167 = vsel %vm761, %v1705, 0
    %v3170 = vsel %vm761, %v1706, 0
    %v3173 = vsel %vm761, %v1707, 0
    %v3176 = vsel %vm761, %v1708, 0
    %v3179 = vsel %vm761, %v1709, 0
    %v3182 = vsel %vm761, %v1710, 0
    %3184 = vmatprep.subr.mxu0 0.0
    %3185 = vmatpush1.msra.mxu0 %v1712
    %3186 = vmatprep.subr.mxu0 0.0
    %3187 = vmatpush1.msra.mxu0 %v1713
    %3188 = vmatprep.subr.mxu0 0.0
    %3189 = vmatpush1.msra.mxu0 %v1714
    %3190 = vmatprep.subr.mxu0 0.0
    %3191 = vmatpush1.msra.mxu0 %v1715
    %3192 = vmatprep.subr.mxu0 0.0
    %3193 = vmatpush1.msra.mxu0 %v1716
    %3194 = vmatprep.subr.mxu0 0.0
    %3195 = vmatpush1.msra.mxu0 %v1717
    %3196 = vmatprep.subr.mxu0 0.0
    %3197 = vmatpush1.msra.mxu0 %v1718
    %3198 = vmatprep.subr.mxu0 0.0
    %3199 = vmatpush1.msra.mxu0 %v1719
    %3200 = vmatprep.subr.mxu0 0.0
    %3201 = vmatpush1.msra.mxu0 0.0
    %3202 = vmatprep.subr.mxu0 0.0
    %3203 = vmatpush1.msra.mxu0 0.0
    %3204 = vmatprep.subr.mxu0 0.0
    %3205 = vmatpush1.msra.mxu0 0.0
    %3206 = vmatprep.subr.mxu0 0.0
    %3207 = vmatpush1.msra.mxu0 0.0
    %3208 = vmatprep.subr.mxu0 0.0
    %3209 = vmatpush1.msra.mxu0 0.0
    %3210 = vmatprep.subr.mxu0 0.0
    %3211 = vmatpush1.msra.mxu0 0.0
    %3212 = vmatprep.subr.mxu0 0.0
    %3213 = vmatpush1.msra.mxu0 0.0
    %3214 = vmatprep.subr.mxu0 0.0
    %3215 = vmatpush1.msra.mxu0 0.0
    %3216 = vmatprep.subr.mxu0 0.0
    %3217 = vmatpush1.msra.mxu0 0.0
    %3218 = vmatprep.subr.mxu0 0.0
    %3219 = vmatpush1.msra.mxu0 0.0
    %3220 = vmatprep.subr.mxu0 0.0
    %3221 = vmatpush1.msra.mxu0 0.0
    %3222 = vmatprep.subr.mxu0 0.0
    %3223 = vmatpush1.msra.mxu0 0.0
    %3224 = vmatprep.subr.mxu0 0.0
    %3225 = vmatpush1.msra.mxu0 0.0
    %3226 = vmatprep.subr.mxu0 0.0
    %3227 = vmatpush1.msra.mxu0 0.0
    %3228 = vmatprep.subr.mxu0 0.0
    %3229 = vmatpush1.msra.mxu0 0.0
    %3230 = vmatprep.subr.mxu0 0.0
    %3231 = vmatpush1.msra.mxu0 0.0
    %3232 = vmatprep.subr.mxu0 0.0
    %3233 = vmatpush1.msra.mxu0 0.0
    %3234 = vmatprep.subr.mxu0 0.0
    %3235 = vmatpush1.msra.mxu0 0.0
    %3236 = vmatprep.subr.mxu0 0.0
    %3237 = vmatpush1.msra.mxu0 0.0
    %3238 = vmatprep.subr.mxu0 0.0
    %3239 = vmatpush1.msra.mxu0 0.0
    %3240 = vmatprep.subr.mxu0 0.0
    %3241 = vmatpush1.msra.mxu0 0.0
    %3242 = vmatprep.subr.mxu0 0.0
    %3243 = vmatpush1.msra.mxu0 0.0
    %3244 = vmatprep.subr.mxu0 0.0
    %3245 = vmatpush1.msra.mxu0 0.0
    %3246 = vmatprep.subr.mxu0 0.0
    %3247 = vmatpush1.msra.mxu0 0.0
    %3248 = vmatprep.mubr.f32.mxu0 0.0
    %3249 = vmatmul.mubr.f32.gmra.mrb[0].mxu0 %v3110
    %v3250 = vpop.f32.mrb[0].mxu0
    %v3251 = vadd.f32 %v1896, %v3250
    %v3252 = vpop.f32.mrb[0].mxu0
    %3253 = vmatprep.mubr.f32.mxu0 0.0
    %3254 = vmatmul.mubr.f32.gmra.mrb[0].mxu0 %v3113
    %v3255 = vpop.f32.mrb[0].mxu0
    %v3256 = vadd.f32 %v1901, %v3255
    %v3257 = vpop.f32.mrb[0].mxu0
    %3258 = vmatprep.mubr.f32.mxu0 0.0
    %3259 = vmatmul.mubr.f32.gmra.mrb[0].mxu0 %v3116
    %v3260 = vpop.f32.mrb[0].mxu0
    %v3261 = vadd.f32 %v1906, %v3260
    %v3262 = vpop.f32.mrb[0].mxu0
    %3263 = vmatprep.mubr.f32.mxu0 0.0
    %3264 = vmatmul.mubr.f32.gmra.mrb[0].mxu0 %v3119
    %v3265 = vpop.f32.mrb[0].mxu0
    %v3266 = vadd.f32 %v1911, %v3265
    %v3267 = vpop.f32.mrb[0].mxu0
    %3268 = vmatprep.mubr.f32.mxu0 0.0
    %3269 = vmatmul.mubr.f32.gmra.mrb[0].mxu0 %v3122
    %v3270 = vpop.f32.mrb[0].mxu0
    %v3271 = vadd.f32 %v1916, %v3270
    %v3272 = vpop.f32.mrb[0].mxu0
    %3273 = vmatprep.mubr.f32.mxu0 0.0
    %3274 = vmatmul.mubr.f32.gmra.mrb[0].mxu0 %v3125
    %v3275 = vpop.f32.mrb[0].mxu0
    %v3276 = vadd.f32 %v1921, %v3275
    %v3277 = vpop.f32.mrb[0].mxu0
    %3278 = vmatprep.mubr.f32.mxu0 0.0
    %3279 = vmatmul.mubr.f32.gmra.mrb[0].mxu0 %v3128
    %v3280 = vpop.f32.mrb[0].mxu0
    %v3281 = vadd.f32 %v1926, %v3280
    %v3282 = vpop.f32.mrb[0].mxu0
    %3283 = vmatprep.mubr.f32.mxu0 0.0
    %3284 = vmatmul.mubr.f32.gmra.mrb[0].mxu0 %v3131
    %v3285 = vpop.f32.mrb[0].mxu0
    %v3286 = vadd.f32 %v1931, %v3285
    %v3287 = vpop.f32.mrb[0].mxu0
    %3288 = vmatprep.mubr.f32.mxu0 0.0
    %3289 = vmatmul.mubr.f32.gmra.mrb[0].mxu0 %v3134
    %v3290 = vpop.f32.mrb[0].mxu0
    %v3291 = vadd.f32 %v1936, %v3290
    %v3292 = vpop.f32.mrb[0].mxu0
    %3293 = vmatprep.mubr.f32.mxu0 0.0
    %3294 = vmatmul.mubr.f32.gmra.mrb[0].mxu0 %v3137
    %v3295 = vpop.f32.mrb[0].mxu0
    %v3296 = vadd.f32 %v1941, %v3295
    %v3297 = vpop.f32.mrb[0].mxu0
    %3298 = vmatprep.mubr.f32.mxu0 0.0
    %3299 = vmatmul.mubr.f32.gmra.mrb[0].mxu0 %v3140
    %v3300 = vpop.f32.mrb[0].mxu0
    %v3301 = vadd.f32 %v1946, %v3300
    %v3302 = vpop.f32.mrb[0].mxu0
    %3303 = vmatprep.mubr.f32.mxu0 0.0
    %3304 = vmatmul.mubr.f32.gmra.mrb[0].mxu0 %v3143
    %v3305 = vpop.f32.mrb[0].mxu0
    %v3306 = vadd.f32 %v1951, %v3305
    %v3307 = vpop.f32.mrb[0].mxu0
    %3308 = vmatprep.mubr.f32.mxu0 0.0
    %3309 = vmatmul.mubr.f32.gmra.mrb[0].mxu0 %v3146
    %v3310 = vpop.f32.mrb[0].mxu0
    %v3311 = vadd.f32 %v1956, %v3310
    %v3312 = vpop.f32.mrb[0].mxu0
    %3313 = vmatprep.mubr.f32.mxu0 0.0
    %3314 = vmatmul.mubr.f32.gmra.mrb[0].mxu0 %v3149
    %v3315 = vpop.f32.mrb[0].mxu0
    %v3316 = vadd.f32 %v1961, %v3315
    %v3317 = vpop.f32.mrb[0].mxu0
    %3318 = vmatprep.mubr.f32.mxu0 0.0
    %3319 = vmatmul.mubr.f32.gmra.mrb[0].mxu0 %v3152
    %v3320 = vpop.f32.mrb[0].mxu0
    %v3321 = vadd.f32 %v1966, %v3320
    %v3322 = vpop.f32.mrb[0].mxu0
    %3323 = vmatprep.mubr.f32.mxu0 0.0
    %3324 = vmatmul.mubr.f32.gmra.mrb[0].mxu0 %v3155
    %v3325 = vpop.f32.mrb[0].mxu0
    %v3326 = vadd.f32 %v1971, %v3325
    %v3327 = vpop.f32.mrb[0].mxu0
    %3328 = vmatprep.mubr.f32.mxu0 0.0
    %3329 = vmatmul.mubr.f32.gmra.mrb[0].mxu0 %v3158
    %v3330 = vpop.f32.mrb[0].mxu0
    %v3331 = vadd.f32 %v1976, %v3330
    %v3332 = vpop.f32.mrb[0].mxu0
    %3333 = vmatprep.mubr.f32.mxu0 0.0
    %3334 = vmatmul.mubr.f32.gmra.mrb[0].mxu0 %v3161
    %v3335 = vpop.f32.mrb[0].mxu0
    %v3336 = vadd.f32 %v1981, %v3335
    %v3337 = vpop.f32.mrb[0].mxu0
    %3338 = vmatprep.mubr.f32.mxu0 0.0
    %3339 = vmatmul.mubr.f32.gmra.mrb[0].mxu0 %v3164
    %v3340 = vpop.f32.mrb[0].mxu0
    %v3341 = vadd.f32 %v1986, %v3340
    %v3342 = vpop.f32.mrb[0].mxu0
    %3343 = vmatprep.mubr.f32.mxu0 0.0
    %3344 = vmatmul.mubr.f32.gmra.mrb[0].mxu0 %v3167
    %v3345 = vpop.f32.mrb[0].mxu0
    %v3346 = vadd.f32 %v1991, %v3345
    %v3347 = vpop.f32.mrb[0].mxu0
    %3348 = vmatprep.mubr.f32.mxu0 0.0
    %3349 = vmatmul.mubr.f32.gmra.mrb[0].mxu0 %v3170
    %v3350 = vpop.f32.mrb[0].mxu0
    %v3351 = vadd.f32 %v1996, %v3350
    %v3352 = vpop.f32.mrb[0].mxu0
    %3353 = vmatprep.mubr.f32.mxu0 0.0
    %3354 = vmatmul.mubr.f32.gmra.mrb[0].mxu0 %v3173
    %v3355 = vpop.f32.mrb[0].mxu0
    %v3356 = vadd.f32 %v2001, %v3355
    %v3357 = vpop.f32.mrb[0].mxu0
    %3358 = vmatprep.mubr.f32.mxu0 0.0
    %3359 = vmatmul.mubr.f32.gmra.mrb[0].mxu0 %v3176
    %v3360 = vpop.f32.mrb[0].mxu0
    %v3361 = vadd.f32 %v2006, %v3360
    %v3362 = vpop.f32.mrb[0].mxu0
    %3363 = vmatprep.mubr.f32.mxu0 0.0
    %3364 = vmatmul.mubr.f32.gmra.mrb[0].mxu0 %v3179
    %v3365 = vpop.f32.mrb[0].mxu0
    %v3366 = vadd.f32 %v2011, %v3365
    %v3367 = vpop.f32.mrb[0].mxu0
    %3368 = vmatprep.mubr.f32.mxu0 0.0
    %3369 = vmatmul.mubr.f32.gmra.mrb[0].mxu0 %v3182
    %v3370 = vpop.f32.mrb[0].mxu0
    %v3371 = vadd.f32 %v2016, %v3370
    %v3372 = vpop.f32.mrb[0].mxu0
    %3373 = vdwg.mxu0
    %v3375 = vsel %vm761, %v2019, 0
    %v3378 = vsel %vm761, %v2020, 0
    %v3381 = vsel %vm761, %v2021, 0
    %v3384 = vsel %vm761, %v2022, 0
    %v3387 = vsel %vm761, %v2023, 0
    %v3390 = vsel %vm761, %v2024, 0
    %v3393 = vsel %vm761, %v2025, 0
    %v3396 = vsel %vm761, %v2026, 0
    %v3399 = vsel %vm761, %v2027, 0
    %v3402 = vsel %vm761, %v2028, 0
    %v3405 = vsel %vm761, %v2029, 0
    %v3408 = vsel %vm761, %v2030, 0
    %v3411 = vsel %vm761, %v2031, 0
    %v3414 = vsel %vm761, %v2032, 0
    %v3417 = vsel %vm761, %v2033, 0
    %v3420 = vsel %vm761, %v2034, 0
    %v3423 = vsel %vm761, %v2035, 0
    %v3426 = vsel %vm761, %v2036, 0
    %v3429 = vsel %vm761, %v2037, 0
    %v3432 = vsel %vm761, %v2038, 0
    %v3435 = vsel %vm761, %v2039, 0
    %v3438 = vsel %vm761, %v2040, 0
    %v3441 = vsel %vm761, %v2041, 0
    %v3444 = vsel %vm761, %v2042, 0
    %v3447 = vsel %vm761, %v2043, 0
    %3449 = vmatprep.subr.mxu0 0.0
    %3450 = vmatpush1.msra.mxu0 %v2045
    %3451 = vmatprep.subr.mxu0 0.0
    %3452 = vmatpush1.msra.mxu0 %v2046
    %3453 = vmatprep.subr.mxu0 0.0
    %3454 = vmatpush1.msra.mxu0 %v2047
    %3455 = vmatprep.subr.mxu0 0.0
    %3456 = vmatpush1.msra.mxu0 %v2048
    %3457 = vmatprep.subr.mxu0 0.0
    %3458 = vmatpush1.msra.mxu0 %v2049
    %3459 = vmatprep.subr.mxu0 0.0
    %3460 = vmatpush1.msra.mxu0 %v2050
    %3461 = vmatprep.subr.mxu0 0.0
    %3462 = vmatpush1.msra.mxu0 %v2051
    %3463 = vmatprep.subr.mxu0 0.0
    %3464 = vmatpush1.msra.mxu0 %v2052
    %3465 = vmatprep.subr.mxu0 0.0
    %3466 = vmatpush1.msra.mxu0 0.0
    %3467 = vmatprep.subr.mxu0 0.0
    %3468 = vmatpush1.msra.mxu0 0.0
    %3469 = vmatprep.subr.mxu0 0.0
    %3470 = vmatpush1.msra.mxu0 0.0
    %3471 = vmatprep.subr.mxu0 0.0
    %3472 = vmatpush1.msra.mxu0 0.0
    %3473 = vmatprep.subr.mxu0 0.0
    %3474 = vmatpush1.msra.mxu0 0.0
    %3475 = vmatprep.subr.mxu0 0.0
    %3476 = vmatpush1.msra.mxu0 0.0
    %3477 = vmatprep.subr.mxu0 0.0
    %3478 = vmatpush1.msra.mxu0 0.0
    %3479 = vmatprep.subr.mxu0 0.0
    %3480 = vmatpush1.msra.mxu0 0.0
    %3481 = vmatprep.subr.mxu0 0.0
    %3482 = vmatpush1.msra.mxu0 0.0
    %3483 = vmatprep.subr.mxu0 0.0
    %3484 = vmatpush1.msra.mxu0 0.0
    %3485 = vmatprep.subr.mxu0 0.0
    %3486 = vmatpush1.msra.mxu0 0.0
    %3487 = vmatprep.subr.mxu0 0.0
    %3488 = vmatpush1.msra.mxu0 0.0
    %3489 = vmatprep.subr.mxu0 0.0
    %3490 = vmatpush1.msra.mxu0 0.0
    %3491 = vmatprep.subr.mxu0 0.0
    %3492 = vmatpush1.msra.mxu0 0.0
    %3493 = vmatprep.subr.mxu0 0.0
    %3494 = vmatpush1.msra.mxu0 0.0
    %3495 = vmatprep.subr.mxu0 0.0
    %3496 = vmatpush1.msra.mxu0 0.0
    %3497 = vmatprep.subr.mxu0 0.0
    %3498 = vmatpush1.msra.mxu0 0.0
    %3499 = vmatprep.subr.mxu0 0.0
    %3500 = vmatpush1.msra.mxu0 0.0
    %3501 = vmatprep.subr.mxu0 0.0
    %3502 = vmatpush1.msra.mxu0 0.0
    %3503 = vmatprep.subr.mxu0 0.0
    %3504 = vmatpush1.msra.mxu0 0.0
    %3505 = vmatprep.subr.mxu0 0.0
    %3506 = vmatpush1.msra.mxu0 0.0
    %3507 = vmatprep.subr.mxu0 0.0
    %3508 = vmatpush1.msra.mxu0 0.0
    %3509 = vmatprep.subr.mxu0 0.0
    %3510 = vmatpush1.msra.mxu0 0.0
    %3511 = vmatprep.subr.mxu0 0.0
    %3512 = vmatpush1.msra.mxu0 0.0
    %3513 = vmatprep.mubr.f32.mxu0 0.0
    %3514 = vmatmul.mubr.f32.gmra.mrb[0].mxu0 %v3375
    %v3515 = vpop.f32.mrb[0].mxu0
    %v3516 = vadd.f32 %v2229, %v3515
    %v3517 = vpop.f32.mrb[0].mxu0
    %3518 = vmatprep.mubr.f32.mxu0 0.0
    %3519 = vmatmul.mubr.f32.gmra.mrb[0].mxu0 %v3378
    %v3520 = vpop.f32.mrb[0].mxu0
    %v3521 = vadd.f32 %v2234, %v3520
    %v3522 = vpop.f32.mrb[0].mxu0
    %3523 = vmatprep.mubr.f32.mxu0 0.0
    %3524 = vmatmul.mubr.f32.gmra.mrb[0].mxu0 %v3381
    %v3525 = vpop.f32.mrb[0].mxu0
    %v3526 = vadd.f32 %v2239, %v3525
    %v3527 = vpop.f32.mrb[0].mxu0
    %3528 = vmatprep.mubr.f32.mxu0 0.0
    %3529 = vmatmul.mubr.f32.gmra.mrb[0].mxu0 %v3384
    %v3530 = vpop.f32.mrb[0].mxu0
    %v3531 = vadd.f32 %v2244, %v3530
    %v3532 = vpop.f32.mrb[0].mxu0
    %3533 = vmatprep.mubr.f32.mxu0 0.0
    %3534 = vmatmul.mubr.f32.gmra.mrb[0].mxu0 %v3387
    %v3535 = vpop.f32.mrb[0].mxu0
    %v3536 = vadd.f32 %v2249, %v3535
    %v3537 = vpop.f32.mrb[0].mxu0
    %3538 = vmatprep.mubr.f32.mxu0 0.0
    %3539 = vmatmul.mubr.f32.gmra.mrb[0].mxu0 %v3390
    %v3540 = vpop.f32.mrb[0].mxu0
    %v3541 = vadd.f32 %v2254, %v3540
    %v3542 = vpop.f32.mrb[0].mxu0
    %3543 = vmatprep.mubr.f32.mxu0 0.0
    %3544 = vmatmul.mubr.f32.gmra.mrb[0].mxu0 %v3393
    %v3545 = vpop.f32.mrb[0].mxu0
    %v3546 = vadd.f32 %v2259, %v3545
    %v3547 = vpop.f32.mrb[0].mxu0
    %3548 = vmatprep.mubr.f32.mxu0 0.0
    %3549 = vmatmul.mubr.f32.gmra.mrb[0].mxu0 %v3396
    %v3550 = vpop.f32.mrb[0].mxu0
    %v3551 = vadd.f32 %v2264, %v3550
    %v3552 = vpop.f32.mrb[0].mxu0
    %3553 = vmatprep.mubr.f32.mxu0 0.0
    %3554 = vmatmul.mubr.f32.gmra.mrb[0].mxu0 %v3399
    %v3555 = vpop.f32.mrb[0].mxu0
    %v3556 = vadd.f32 %v2269, %v3555
    %v3557 = vpop.f32.mrb[0].mxu0
    %3558 = vmatprep.mubr.f32.mxu0 0.0
    %3559 = vmatmul.mubr.f32.gmra.mrb[0].mxu0 %v3402
    %v3560 = vpop.f32.mrb[0].mxu0
    %v3561 = vadd.f32 %v2274, %v3560
    %v3562 = vpop.f32.mrb[0].mxu0
    %3563 = vmatprep.mubr.f32.mxu0 0.0
    %3564 = vmatmul.mubr.f32.gmra.mrb[0].mxu0 %v3405
    %v3565 = vpop.f32.mrb[0].mxu0
    %v3566 = vadd.f32 %v2279, %v3565
    %v3567 = vpop.f32.mrb[0].mxu0
    %3568 = vmatprep.mubr.f32.mxu0 0.0
    %3569 = vmatmul.mubr.f32.gmra.mrb[0].mxu0 %v3408
    %v3570 = vpop.f32.mrb[0].mxu0
    %v3571 = vadd.f32 %v2284, %v3570
    %v3572 = vpop.f32.mrb[0].mxu0
    %3573 = vmatprep.mubr.f32.mxu0 0.0
    %3574 = vmatmul.mubr.f32.gmra.mrb[0].mxu0 %v3411
    %v3575 = vpop.f32.mrb[0].mxu0
    %v3576 = vadd.f32 %v2289, %v3575
    %v3577 = vpop.f32.mrb[0].mxu0
    %3578 = vmatprep.mubr.f32.mxu0 0.0
    %3579 = vmatmul.mubr.f32.gmra.mrb[0].mxu0 %v3414
    %v3580 = vpop.f32.mrb[0].mxu0
    %v3581 = vadd.f32 %v2294, %v3580
    %v3582 = vpop.f32.mrb[0].mxu0
    %3583 = vmatprep.mubr.f32.mxu0 0.0
    %3584 = vmatmul.mubr.f32.gmra.mrb[0].mxu0 %v3417
    %v3585 = vpop.f32.mrb[0].mxu0
    %v3586 = vadd.f32 %v2299, %v3585
    %v3587 = vpop.f32.mrb[0].mxu0
    %3588 = vmatprep.mubr.f32.mxu0 0.0
    %3589 = vmatmul.mubr.f32.gmra.mrb[0].mxu0 %v3420
    %v3590 = vpop.f32.mrb[0].mxu0
    %v3591 = vadd.f32 %v2304, %v3590
    %v3592 = vpop.f32.mrb[0].mxu0
    %3593 = vmatprep.mubr.f32.mxu0 0.0
    %3594 = vmatmul.mubr.f32.gmra.mrb[0].mxu0 %v3423
    %v3595 = vpop.f32.mrb[0].mxu0
    %v3596 = vadd.f32 %v2309, %v3595
    %v3597 = vpop.f32.mrb[0].mxu0
    %3598 = vmatprep.mubr.f32.mxu0 0.0
    %3599 = vmatmul.mubr.f32.gmra.mrb[0].mxu0 %v3426
    %v3600 = vpop.f32.mrb[0].mxu0
    %v3601 = vadd.f32 %v2314, %v3600
    %v3602 = vpop.f32.mrb[0].mxu0
    %3603 = vmatprep.mubr.f32.mxu0 0.0
    %3604 = vmatmul.mubr.f32.gmra.mrb[0].mxu0 %v3429
    %v3605 = vpop.f32.mrb[0].mxu0
    %v3606 = vadd.f32 %v2319, %v3605
    %v3607 = vpop.f32.mrb[0].mxu0
    %3608 = vmatprep.mubr.f32.mxu0 0.0
    %3609 = vmatmul.mubr.f32.gmra.mrb[0].mxu0 %v3432
    %v3610 = vpop.f32.mrb[0].mxu0
    %v3611 = vadd.f32 %v2324, %v3610
    %v3612 = vpop.f32.mrb[0].mxu0
    %3613 = vmatprep.mubr.f32.mxu0 0.0
    %3614 = vmatmul.mubr.f32.gmra.mrb[0].mxu0 %v3435
    %v3615 = vpop.f32.mrb[0].mxu0
    %v3616 = vadd.f32 %v2329, %v3615
    %v3617 = vpop.f32.mrb[0].mxu0
    %3618 = vmatprep.mubr.f32.mxu0 0.0
    %3619 = vmatmul.mubr.f32.gmra.mrb[0].mxu0 %v3438
    %v3620 = vpop.f32.mrb[0].mxu0
    %v3621 = vadd.f32 %v2334, %v3620
    %v3622 = vpop.f32.mrb[0].mxu0
    %3623 = vmatprep.mubr.f32.mxu0 0.0
    %3624 = vmatmul.mubr.f32.gmra.mrb[0].mxu0 %v3441
    %v3625 = vpop.f32.mrb[0].mxu0
    %v3626 = vadd.f32 %v2339, %v3625
    %v3627 = vpop.f32.mrb[0].mxu0
    %3628 = vmatprep.mubr.f32.mxu0 0.0
    %3629 = vmatmul.mubr.f32.gmra.mrb[0].mxu0 %v3444
    %v3630 = vpop.f32.mrb[0].mxu0
    %v3631 = vadd.f32 %v2344, %v3630
    %v3632 = vpop.f32.mrb[0].mxu0
    %3633 = vmatprep.mubr.f32.mxu0 0.0
    %3634 = vmatmul.mubr.f32.gmra.mrb[0].mxu0 %v3447
    %v3635 = vpop.f32.mrb[0].mxu0
    %v3636 = vadd.f32 %v2349, %v3635
    %v3637 = vpop.f32.mrb[0].mxu0
    %3638 = vdwg.mxu0
    %v3639 = vadd.f32 %v2793, %v2986
    %v3640 = vadd.f32 %v2798, %v2991
    %v3641 = vadd.f32 %v2803, %v2996
    %v3642 = vadd.f32 %v2808, %v3001
    %v3643 = vadd.f32 %v2813, %v3006
    %v3644 = vadd.f32 %v2818, %v3011
    %v3645 = vadd.f32 %v2823, %v3016
    %v3646 = vadd.f32 %v2828, %v3021
    %v3647 = vadd.f32 %v2833, %v3026
    %v3648 = vadd.f32 %v2838, %v3031
    %v3649 = vadd.f32 %v2843, %v3036
    %v3650 = vadd.f32 %v2848, %v3041
    %v3651 = vadd.f32 %v2853, %v3046
    %v3652 = vadd.f32 %v2858, %v3051
    %v3653 = vadd.f32 %v2863, %v3056
    %v3654 = vadd.f32 %v2868, %v3061
    %v3655 = vadd.f32 %v2873, %v3066
    %v3656 = vadd.f32 %v2878, %v3071
    %v3657 = vadd.f32 %v2883, %v3076
    %v3658 = vadd.f32 %v2888, %v3081
    %v3659 = vadd.f32 %v2893, %v3086
    %v3660 = vadd.f32 %v2898, %v3091
    %v3661 = vadd.f32 %v2903, %v3096
    %v3662 = vadd.f32 %v2908, %v3101
    %v3663 = vadd.f32 %v2913, %v3106
    %v3664 = vadd.f32 %v3251, %v3516
    %v3665 = vadd.f32 %v3256, %v3521
    %v3666 = vadd.f32 %v3261, %v3526
    %v3667 = vadd.f32 %v3266, %v3531
    %v3668 = vadd.f32 %v3271, %v3536
    %v3669 = vadd.f32 %v3276, %v3541
    %v3670 = vadd.f32 %v3281, %v3546
    %v3671 = vadd.f32 %v3286, %v3551
    %v3672 = vadd.f32 %v3291, %v3556
    %v3673 = vadd.f32 %v3296, %v3561
    %v3674 = vadd.f32 %v3301, %v3566
    %v3675 = vadd.f32 %v3306, %v3571
    %v3676 = vadd.f32 %v3311, %v3576
    %v3677 = vadd.f32 %v3316, %v3581
    %v3678 = vadd.f32 %v3321, %v3586
    %v3679 = vadd.f32 %v3326, %v3591
    %v3680 = vadd.f32 %v3331, %v3596
    %v3681 = vadd.f32 %v3336, %v3601
    %v3682 = vadd.f32 %v3341, %v3606
    %v3683 = vadd.f32 %v3346, %v3611
    %v3684 = vadd.f32 %v3351, %v3616
    %v3685 = vadd.f32 %v3356, %v3621
    %v3686 = vadd.f32 %v3361, %v3626
    %v3687 = vadd.f32 %v3366, %v3631
    %v3688 = vadd.f32 %v3371, %v3636
    %v3689 = vadd.f32 %v3639, %v3664
    %v3690 = vadd.f32 %v3640, %v3665
    %v3691 = vadd.f32 %v3641, %v3666
    %v3692 = vadd.f32 %v3642, %v3667
    %v3693 = vadd.f32 %v3643, %v3668
    %v3694 = vadd.f32 %v3644, %v3669
    %v3695 = vadd.f32 %v3645, %v3670
    %v3696 = vadd.f32 %v3646, %v3671
    %v3697 = vadd.f32 %v3647, %v3672
    %v3698 = vadd.f32 %v3648, %v3673
    %v3699 = vadd.f32 %v3649, %v3674
    %v3700 = vadd.f32 %v3650, %v3675
    %v3701 = vadd.f32 %v3651, %v3676
    %v3702 = vadd.f32 %v3652, %v3677
    %v3703 = vadd.f32 %v3653, %v3678
    %v3704 = vadd.f32 %v3654, %v3679
    %v3705 = vadd.f32 %v3655, %v3680
    %v3706 = vadd.f32 %v3656, %v3681
    %v3707 = vadd.f32 %v3657, %v3682
    %v3708 = vadd.f32 %v3658, %v3683
    %v3709 = vadd.f32 %v3659, %v3684
    %v3710 = vadd.f32 %v3660, %v3685
    %v3711 = vadd.f32 %v3661, %v3686
    %v3712 = vadd.f32 %v3662, %v3687
    %v3713 = vadd.f32 %v3663, %v3688
    %v3714 = vadd.f32 %v3689, %v2528
    %v3715 = vadd.f32 %v3690, %v2533
    %v3716 = vadd.f32 %v3691, %v2538
    %v3717 = vadd.f32 %v3692, %v2543
    %v3718 = vadd.f32 %v3693, %v2548
    %v3719 = vadd.f32 %v3694, %v2553
    %v3720 = vadd.f32 %v3695, %v2558
    %v3721 = vadd.f32 %v3696, %v2563
    %v3722 = vadd.f32 %v3697, %v2568
    %v3723 = vadd.f32 %v3698, %v2573
    %v3724 = vadd.f32 %v3699, %v2578
    %v3725 = vadd.f32 %v3700, %v2583
    %v3726 = vadd.f32 %v3701, %v2588
    %v3727 = vadd.f32 %v3702, %v2593
    %v3728 = vadd.f32 %v3703, %v2598
    %v3729 = vadd.f32 %v3704, %v2603
    %v3730 = vadd.f32 %v3705, %v2608
    %v3731 = vadd.f32 %v3706, %v2613
    %v3732 = vadd.f32 %v3707, %v2618
    %v3733 = vadd.f32 %v3708, %v2623
    %v3734 = vadd.f32 %v3709, %v2628
    %v3735 = vadd.f32 %v3710, %v2633
    %v3736 = vadd.f32 %v3711, %v2638
    %v3737 = vadd.f32 %v3712, %v2643
    %v3738 = vadd.f32 %v3713, %v2648
    %v3739 = vld [vmem:[%s4] sm:$0x1]
    %v3741 = vlaneseq
    %v3742 = vshrl.u32 %v3741, 7
    %v3743 = vsub.s32 0, %v3742
    %v3744 = vrot.slane %v3739, %v3743
    %v3746 = vadd.f32 %v3714, %v3744
    %v3747 = vadd.f32 %v3715, %v3744
    %v3748 = vadd.f32 %v3716, %v3744
    %v3749 = vadd.f32 %v3717, %v3744
    %v3750 = vadd.f32 %v3718, %v3744
    %v3751 = vadd.f32 %v3719, %v3744
    %v3752 = vadd.f32 %v3720, %v3744
    %v3753 = vadd.f32 %v3721, %v3744
    %v3754 = vadd.f32 %v3722, %v3744
    %v3755 = vadd.f32 %v3723, %v3744
    %v3756 = vadd.f32 %v3724, %v3744
    %v3757 = vadd.f32 %v3725, %v3744
    %v3758 = vadd.f32 %v3726, %v3744
    %v3759 = vadd.f32 %v3727, %v3744
    %v3760 = vadd.f32 %v3728, %v3744
    %v3761 = vadd.f32 %v3729, %v3744
    %v3762 = vadd.f32 %v3730, %v3744
    %v3763 = vadd.f32 %v3731, %v3744
    %v3764 = vadd.f32 %v3732, %v3744
    %v3765 = vadd.f32 %v3733, %v3744
    %v3766 = vadd.f32 %v3734, %v3744
    %v3767 = vadd.f32 %v3735, %v3744
    %v3768 = vadd.f32 %v3736, %v3744
    %v3769 = vadd.f32 %v3737, %v3744
    %v3770 = vadd.f32 %v3738, %v3744
    %v3771 = vmax.f32 %v3746, 0.0
    %v3772 = vmax.f32 %v3747, 0.0
    %v3773 = vmax.f32 %v3748, 0.0
    %v3774 = vmax.f32 %v3749, 0.0
    %v3775 = vmax.f32 %v3750, 0.0
    %v3776 = vmax.f32 %v3751, 0.0
    %v3777 = vmax.f32 %v3752, 0.0
    %v3778 = vmax.f32 %v3753, 0.0
    %v3779 = vmax.f32 %v3754, 0.0
    %v3780 = vmax.f32 %v3755, 0.0
    %v3781 = vmax.f32 %v3756, 0.0
    %v3782 = vmax.f32 %v3757, 0.0
    %v3783 = vmax.f32 %v3758, 0.0
    %v3784 = vmax.f32 %v3759, 0.0
    %v3785 = vmax.f32 %v3760, 0.0
    %v3786 = vmax.f32 %v3761, 0.0
    %v3787 = vmax.f32 %v3762, 0.0
    %v3788 = vmax.f32 %v3763, 0.0
    %v3789 = vmax.f32 %v3764, 0.0
    %v3790 = vmax.f32 %v3765, 0.0
    %v3791 = vmax.f32 %v3766, 0.0
    %v3792 = vmax.f32 %v3767, 0.0
    %v3793 = vmax.f32 %v3768, 0.0
    %v3794 = vmax.f32 %v3769, 0.0
    %v3795 = vmax.f32 %v3770, 0.0
    %vm3796 = vcmask 261120
    %3797 = vst.msk [vmem:[#allocation4] sm:$0xff] %vm3796, %v3771
    %3798 = vst.msk [vmem:[#allocation4 + $0x8] sm:$0xff] %vm3796, %v3772
    %3799 = vst.msk [vmem:[#allocation4 + $0x10] sm:$0xff] %vm3796, %v3773
    %3800 = vst.msk [vmem:[#allocation4 + $0x18] sm:$0xff] %vm3796, %v3774
    %3801 = vst.msk [vmem:[#allocation4 + $0x20] sm:$0xff] %vm3796, %v3775
    %3802 = vst.msk [vmem:[#allocation4 + $0x28] sm:$0xff] %vm3796, %v3776
    %3803 = vst.msk [vmem:[#allocation4 + $0x30] sm:$0xff] %vm3796, %v3777
    %3804 = vst.msk [vmem:[#allocation4 + $0x38] sm:$0xff] %vm3796, %v3778
    %3805 = vst.msk [vmem:[#allocation4 + $0x40] sm:$0xff] %vm3796, %v3779
    %3806 = vst.msk [vmem:[#allocation4 + $0x48] sm:$0xff] %vm3796, %v3780
    %3807 = vst.msk [vmem:[#allocation4 + $0x50] sm:$0xff] %vm3796, %v3781
    %3808 = vst.msk [vmem:[#allocation4 + $0x58] sm:$0xff] %vm3796, %v3782
    %3809 = vst.msk [vmem:[#allocation4 + $0x60] sm:$0xff] %vm3796, %v3783
    %3810 = vst.msk [vmem:[#allocation4 + $0x68] sm:$0xff] %vm3796, %v3784
    %3811 = vst.msk [vmem:[#allocation4 + $0x70] sm:$0xff] %vm3796, %v3785
    %3812 = vst.msk [vmem:[#allocation4 + $0x78] sm:$0xff] %vm3796, %v3786
    %3813 = vst.msk [vmem:[#allocation4 + $0x80] sm:$0xff] %vm3796, %v3787
    %3814 = vst.msk [vmem:[#allocation4 + $0x88] sm:$0xff] %vm3796, %v3788
    %3815 = vst.msk [vmem:[#allocation4 + $0x90] sm:$0xff] %vm3796, %v3789
    %3816 = vst.msk [vmem:[#allocation4 + $0x98] sm:$0xff] %vm3796, %v3790
    %3817 = vst.msk [vmem:[#allocation4 + $0xa0] sm:$0xff] %vm3796, %v3791
    %3818 = vst.msk [vmem:[#allocation4 + $0xa8] sm:$0xff] %vm3796, %v3792
    %3819 = vst.msk [vmem:[#allocation4 + $0xb0] sm:$0xff] %vm3796, %v3793
    %3820 = vst.msk [vmem:[#allocation4 + $0xb8] sm:$0xff] %vm3796, %v3794
    %3821 = vst.msk [vmem:[#allocation4 + $0xc0] sm:$0xff] %vm3796, %v3795
    %v3822 = vld [vmem:[#allocation4] ss:$100 sm:$0x3]
    %s3823 = scalar_lea.vmem [#allocation4], 1
    %v3824 = vld [vmem:[%s3823] ss:$100 sm:$0x3]
    %v3825 = vmax.f32 %v3822, %v3824
    %s3826 = scalar_lea.vmem [#allocation4], 10
    %v3827 = vld [vmem:[%s3826] ss:$100 sm:$0x3]
    %v3828 = vmax.f32 %v3825, %v3827
    %s3829 = scalar_lea.vmem [#allocation4], 11
    %v3830 = vld [vmem:[%s3829] ss:$100 sm:$0x3]
    %v3831 = vmax.f32 %v3828, %v3830
    %s3832 = scalar_lea.vmem [#allocation4], 2
    %v3833 = vld [vmem:[%s3832] ss:$100 sm:$0x3]
    %s3834 = scalar_lea.vmem [#allocation4], 3
    %v3835 = vld [vmem:[%s3834] ss:$100 sm:$0x3]
    %v3836 = vmax.f32 %v3833, %v3835
    %s3837 = scalar_lea.vmem [#allocation4], 12
    %v3838 = vld [vmem:[%s3837] ss:$100 sm:$0x3]
    %v3839 = vmax.f32 %v3836, %v3838
    %s3840 = scalar_lea.vmem [#allocation4], 13
    %v3841 = vld [vmem:[%s3840] ss:$100 sm:$0x3]
    %v3842 = vmax.f32 %v3839, %v3841
    %s3843 = scalar_lea.vmem [#allocation4], 4
    %v3844 = vld [vmem:[%s3843] ss:$100 sm:$0x3]
    %s3845 = scalar_lea.vmem [#allocation4], 5
    %v3846 = vld [vmem:[%s3845] ss:$100 sm:$0x3]
    %v3847 = vmax.f32 %v3844, %v3846
    %s3848 = scalar_lea.vmem [#allocation4], 14
    %v3849 = vld [vmem:[%s3848] ss:$100 sm:$0x3]
    %v3850 = vmax.f32 %v3847, %v3849
    %s3851 = scalar_lea.vmem [#allocation4], 15
    %v3852 = vld [vmem:[%s3851] ss:$100 sm:$0x3]
    %v3853 = vmax.f32 %v3850, %v3852
    %s3854 = scalar_lea.vmem [#allocation4], 6
    %v3855 = vld [vmem:[%s3854] ss:$100 sm:$0x3]
    %s3856 = scalar_lea.vmem [#allocation4], 7
    %v3857 = vld [vmem:[%s3856] ss:$100 sm:$0x3]
    %v3858 = vmax.f32 %v3855, %v3857
    %s3859 = scalar_lea.vmem [#allocation4], 16
    %v3860 = vld [vmem:[%s3859] ss:$100 sm:$0x3]
    %v3861 = vmax.f32 %v3858, %v3860
    %s3862 = scalar_lea.vmem [#allocation4], 17
    %v3863 = vld [vmem:[%s3862] ss:$100 sm:$0x3]
    %v3864 = vmax.f32 %v3861, %v3863
    %s3865 = scalar_lea.vmem [#allocation4], 20
    %v3866 = vld [vmem:[%s3865] ss:$100 sm:$0x3]
    %s3867 = scalar_lea.vmem [#allocation4], 21
    %v3868 = vld [vmem:[%s3867] ss:$100 sm:$0x3]
    %v3869 = vmax.f32 %v3866, %v3868
    %s3870 = scalar_lea.vmem [#allocation4], 30
    %v3871 = vld [vmem:[%s3870] ss:$100 sm:$0x3]
    %v3872 = vmax.f32 %v3869, %v3871
    %s3873 = scalar_lea.vmem [#allocation4], 31
    %v3874 = vld [vmem:[%s3873] ss:$100 sm:$0x3]
    %v3875 = vmax.f32 %v3872, %v3874
    %s3876 = scalar_lea.vmem [#allocation4], 22
    %v3877 = vld [vmem:[%s3876] ss:$100 sm:$0x3]
    %s3878 = scalar_lea.vmem [#allocation4], 23
    %v3879 = vld [vmem:[%s3878] ss:$100 sm:$0x3]
    %v3880 = vmax.f32 %v3877, %v3879
    %s3881 = scalar_lea.vmem [#allocation4], 32
    %v3882 = vld [vmem:[%s3881] ss:$100 sm:$0x3]
    %v3883 = vmax.f32 %v3880, %v3882
    %s3884 = scalar_lea.vmem [#allocation4], 33
    %v3885 = vld [vmem:[%s3884] ss:$100 sm:$0x3]
    %v3886 = vmax.f32 %v3883, %v3885
    %s3887 = scalar_lea.vmem [#allocation4], 24
    %v3888 = vld [vmem:[%s3887] ss:$100 sm:$0x3]
    %s3889 = scalar_lea.vmem [#allocation4], 25
    %v3890 = vld [vmem:[%s3889] ss:$100 sm:$0x3]
    %v3891 = vmax.f32 %v3888, %v3890
    %s3892 = scalar_lea.vmem [#allocation4], 34
    %v3893 = vld [vmem:[%s3892] ss:$100 sm:$0x3]
    %v3894 = vmax.f32 %v3891, %v3893
    %s3895 = scalar_lea.vmem [#allocation4], 35
    %v3896 = vld [vmem:[%s3895] ss:$100 sm:$0x3]
    %v3897 = vmax.f32 %v3894, %v3896
    %s3898 = scalar_lea.vmem [#allocation4], 26
    %v3899 = vld [vmem:[%s3898] ss:$100 sm:$0x3]
    %s3900 = scalar_lea.vmem [#allocation4], 27
    %v3901 = vld [vmem:[%s3900] ss:$100 sm:$0x3]
    %v3902 = vmax.f32 %v3899, %v3901
    %s3903 = scalar_lea.vmem [#allocation4], 36
    %v3904 = vld [vmem:[%s3903] ss:$100 sm:$0x3]
    %v3905 = vmax.f32 %v3902, %v3904
    %s3906 = scalar_lea.vmem [#allocation4], 37
    %v3907 = vld [vmem:[%s3906] ss:$100 sm:$0x3]
    %v3908 = vmax.f32 %v3905, %v3907
    %s3909 = scalar_lea.vmem [#allocation4], 40
    %v3910 = vld [vmem:[%s3909] ss:$100 sm:$0x3]
    %s3911 = scalar_lea.vmem [#allocation4], 41
    %v3912 = vld [vmem:[%s3911] ss:$100 sm:$0x3]
    %v3913 = vmax.f32 %v3910, %v3912
    %s3914 = scalar_lea.vmem [#allocation4], 50
    %v3915 = vld [vmem:[%s3914] ss:$100 sm:$0x3]
    %v3916 = vmax.f32 %v3913, %v3915
    %s3917 = scalar_lea.vmem [#allocation4], 51
    %v3918 = vld [vmem:[%s3917] ss:$100 sm:$0x3]
    %v3919 = vmax.f32 %v3916, %v3918
    %s3920 = scalar_lea.vmem [#allocation4], 42
    %v3921 = vld [vmem:[%s3920] ss:$100 sm:$0x3]
    %s3922 = scalar_lea.vmem [#allocation4], 43
    %v3923 = vld [vmem:[%s3922] ss:$100 sm:$0x3]
    %v3924 = vmax.f32 %v3921, %v3923
    %s3925 = scalar_lea.vmem [#allocation4], 52
    %v3926 = vld [vmem:[%s3925] ss:$100 sm:$0x3]
    %v3927 = vmax.f32 %v3924, %v3926
    %s3928 = scalar_lea.vmem [#allocation4], 53
    %v3929 = vld [vmem:[%s3928] ss:$100 sm:$0x3]
    %v3930 = vmax.f32 %v3927, %v3929
    %s3931 = scalar_lea.vmem [#allocation4], 44
    %v3932 = vld [vmem:[%s3931] ss:$100 sm:$0x3]
    %s3933 = scalar_lea.vmem [#allocation4], 45
    %v3934 = vld [vmem:[%s3933] ss:$100 sm:$0x3]
    %v3935 = vmax.f32 %v3932, %v3934
    %s3936 = scalar_lea.vmem [#allocation4], 54
    %v3937 = vld [vmem:[%s3936] ss:$100 sm:$0x3]
    %v3938 = vmax.f32 %v3935, %v3937
    %s3939 = scalar_lea.vmem [#allocation4], 55
    %v3940 = vld [vmem:[%s3939] ss:$100 sm:$0x3]
    %v3941 = vmax.f32 %v3938, %v3940
    %s3942 = scalar_lea.vmem [#allocation4], 46
    %v3943 = vld [vmem:[%s3942] ss:$100 sm:$0x3]
    %s3944 = scalar_lea.vmem [#allocation4], 47
    %v3945 = vld [vmem:[%s3944] ss:$100 sm:$0x3]
    %v3946 = vmax.f32 %v3943, %v3945
    %s3947 = scalar_lea.vmem [#allocation4], 56
    %v3948 = vld [vmem:[%s3947] ss:$100 sm:$0x3]
    %v3949 = vmax.f32 %v3946, %v3948
    %s3950 = scalar_lea.vmem [#allocation4], 57
    %v3951 = vld [vmem:[%s3950] ss:$100 sm:$0x3]
    %v3952 = vmax.f32 %v3949, %v3951
    %s3953 = scalar_lea.vmem [#allocation4], 60
    %v3954 = vld [vmem:[%s3953] ss:$100 sm:$0x3]
    %s3955 = scalar_lea.vmem [#allocation4], 61
    %v3956 = vld [vmem:[%s3955] ss:$100 sm:$0x3]
    %v3957 = vmax.f32 %v3954, %v3956
    %s3958 = scalar_lea.vmem [#allocation4], 70
    %v3959 = vld [vmem:[%s3958] ss:$100 sm:$0x3]
    %v3960 = vmax.f32 %v3957, %v3959
    %s3961 = scalar_lea.vmem [#allocation4], 71
    %v3962 = vld [vmem:[%s3961] ss:$100 sm:$0x3]
    %v3963 = vmax.f32 %v3960, %v3962
    %s3964 = scalar_lea.vmem [#allocation4], 62
    %v3965 = vld [vmem:[%s3964] ss:$100 sm:$0x3]
    %s3966 = scalar_lea.vmem [#allocation4], 63
    %v3967 = vld [vmem:[%s3966] ss:$100 sm:$0x3]
    %v3968 = vmax.f32 %v3965, %v3967
    %s3969 = scalar_lea.vmem [#allocation4], 72
    %v3970 = vld [vmem:[%s3969] ss:$100 sm:$0x3]
    %v3971 = vmax.f32 %v3968, %v3970
    %s3972 = scalar_lea.vmem [#allocation4], 73
    %v3973 = vld [vmem:[%s3972] ss:$100 sm:$0x3]
    %v3974 = vmax.f32 %v3971, %v3973
    %s3975 = scalar_lea.vmem [#allocation4], 64
    %v3976 = vld [vmem:[%s3975] ss:$100 sm:$0x3]
    %s3977 = scalar_lea.vmem [#allocation4], 65
    %v3978 = vld [vmem:[%s3977] ss:$100 sm:$0x3]
    %v3979 = vmax.f32 %v3976, %v3978
    %s3980 = scalar_lea.vmem [#allocation4], 74
    %v3981 = vld [vmem:[%s3980] ss:$100 sm:$0x3]
    %v3982 = vmax.f32 %v3979, %v3981
    %s3983 = scalar_lea.vmem [#allocation4], 75
    %v3984 = vld [vmem:[%s3983] ss:$100 sm:$0x3]
    %v3985 = vmax.f32 %v3982, %v3984
    %s3986 = scalar_lea.vmem [#allocation4], 66
    %v3987 = vld [vmem:[%s3986] ss:$100 sm:$0x3]
    %s3988 = scalar_lea.vmem [#allocation4], 67
    %v3989 = vld [vmem:[%s3988] ss:$100 sm:$0x3]
    %v3990 = vmax.f32 %v3987, %v3989
    %s3991 = scalar_lea.vmem [#allocation4], 76
    %v3992 = vld [vmem:[%s3991] ss:$100 sm:$0x3]
    %v3993 = vmax.f32 %v3990, %v3992
    %s3994 = scalar_lea.vmem [#allocation4], 77
    %v3995 = vld [vmem:[%s3994] ss:$100 sm:$0x3]
    %v3996 = vmax.f32 %v3993, %v3995
    %3998 = vrot.lane.b32.xlu0 %v3842, 32
    %v3999 = vpop.permute.xlu0 %3998
    %4002 = vrot.lane.b32.xlu0 %v3853, 64
    %v4003 = vpop.permute.xlu0 %4002
    %4006 = vrot.lane.b32.xlu0 %v3864, 96
    %v4007 = vpop.permute.xlu0 %4006
    %4010 = vrot.lane.b32.xlu0 %v3886, 32
    %v4011 = vpop.permute.xlu0 %4010
    %4014 = vrot.lane.b32.xlu0 %v3897, 64
    %v4015 = vpop.permute.xlu0 %4014
    %4018 = vrot.lane.b32.xlu0 %v3908, 96
    %v4019 = vpop.permute.xlu0 %4018
    %4022 = vrot.lane.b32.xlu0 %v3930, 32
    %v4023 = vpop.permute.xlu0 %4022
    %4026 = vrot.lane.b32.xlu0 %v3941, 64
    %v4027 = vpop.permute.xlu0 %4026
    %4030 = vrot.lane.b32.xlu0 %v3952, 96
    %v4031 = vpop.permute.xlu0 %4030
    %4034 = vrot.lane.b32.xlu0 %v3974, 32
    %v4035 = vpop.permute.xlu0 %4034
    %4038 = vrot.lane.b32.xlu0 %v3985, 64
    %v4039 = vpop.permute.xlu0 %4038
    %4042 = vrot.lane.b32.xlu0 %v3996, 96
    %v4043 = vpop.permute.xlu0 %4042
    %v4045 = vsel %vm3796, %v3831, %v3999
    %v4046 = vsel %vm761, %v4045, %v4003
    %vm4047 = vcmask 785408
    %v4048 = vsel %vm4047, %v4046, %v4007
    %v4049 = vsel %vm3796, %v3875, %v4011
    %v4050 = vsel %vm761, %v4049, %v4015
    %v4051 = vsel %vm4047, %v4050, %v4019
    %v4052 = vsel %vm3796, %v3919, %v4023
    %v4053 = vsel %vm761, %v4052, %v4027
    %v4054 = vsel %vm4047, %v4053, %v4031
    %v4055 = vsel %vm3796, %v3963, %v4035
    %v4056 = vsel %vm761, %v4055, %v4039
    %v4057 = vsel %vm4047, %v4056, %v4043
    %v4058 = vld [vmem:[%s5] sm:$0xff]
    %v4059 = vld [vmem:[%s5 + $0x8] sm:$0xff]
    %v4060 = vld [vmem:[%s5 + $0x10] sm:$0xff]
    %v4061 = vld [vmem:[%s5 + $0x18] sm:$0xff]
    %v4062 = vld [vmem:[%s5 + $0x20] sm:$0xff]
    %v4063 = vld [vmem:[%s5 + $0x28] sm:$0xff]
    %v4064 = vld [vmem:[%s5 + $0x30] sm:$0xff]
    %v4065 = vld [vmem:[%s5 + $0x38] sm:$0xff]
    %v4066 = vld [vmem:[%s5 + $0x40] sm:$0xff]
    %v4067 = vld [vmem:[%s5 + $0x48] sm:$0xff]
    %v4068 = vld [vmem:[%s5 + $0x50] sm:$0xff]
    %v4069 = vld [vmem:[%s5 + $0x58] sm:$0xff]
    %v4070 = vld [vmem:[%s5 + $0x60] sm:$0xff]
    %v4071 = vld [vmem:[%s5 + $0x68] sm:$0xff]
    %v4072 = vld [vmem:[%s5 + $0x70] sm:$0xff]
    %v4073 = vld [vmem:[%s5 + $0x78] sm:$0xff]
    %v4074 = vld [vmem:[%s5 + $0x80] sm:$0xff]
    %v4075 = vld [vmem:[%s5 + $0x88] sm:$0xff]
    %v4076 = vld [vmem:[%s5 + $0x90] sm:$0xff]
    %v4077 = vld [vmem:[%s5 + $0x98] sm:$0xff]
    %v4078 = vld [vmem:[%s5 + $0xa0] sm:$0xff]
    %v4079 = vld [vmem:[%s5 + $0xa8] sm:$0xff]
    %v4080 = vld [vmem:[%s5 + $0xb0] sm:$0xff]
    %v4081 = vld [vmem:[%s5 + $0xb8] sm:$0xff]
    %v4082 = vld [vmem:[%s5 + $0xc0] sm:$0xff]
    %v4083 = vld [vmem:[%s5 + $0xc8] sm:$0xff]
    %v4084 = vld [vmem:[%s5 + $0xd0] sm:$0xff]
    %v4085 = vld [vmem:[%s5 + $0xd8] sm:$0xff]
    %v4086 = vld [vmem:[%s5 + $0xe0] sm:$0xff]
    %v4087 = vld [vmem:[%s5 + $0xe8] sm:$0xff]
    %v4088 = vld [vmem:[%s5 + $0xf0] sm:$0xff]
    %v4089 = vld [vmem:[%s5 + $0xf8] sm:$0xff]
    %v4090 = vld [vmem:[%s5 + $0x100] sm:$0xff]
    %v4091 = vld [vmem:[%s5 + $0x108] sm:$0xff]
    %v4092 = vld [vmem:[%s5 + $0x110] sm:$0xff]
    %v4093 = vld [vmem:[%s5 + $0x118] sm:$0xff]
    %v4094 = vld [vmem:[%s5 + $0x120] sm:$0xff]
    %v4095 = vld [vmem:[%s5 + $0x128] sm:$0xff]
    %v4096 = vld [vmem:[%s5 + $0x130] sm:$0xff]
    %v4097 = vld [vmem:[%s5 + $0x138] sm:$0xff]
    %v4098 = vld [vmem:[%s5 + $0x140] sm:$0xff]
    %v4099 = vld [vmem:[%s5 + $0x148] sm:$0xff]
    %v4100 = vld [vmem:[%s5 + $0x150] sm:$0xff]
    %v4101 = vld [vmem:[%s5 + $0x158] sm:$0xff]
    %v4102 = vld [vmem:[%s5 + $0x160] sm:$0xff]
    %v4103 = vld [vmem:[%s5 + $0x168] sm:$0xff]
    %v4104 = vld [vmem:[%s5 + $0x170] sm:$0xff]
    %v4105 = vld [vmem:[%s5 + $0x178] sm:$0xff]
    %v4106 = vld [vmem:[%s5 + $0x180] sm:$0xff]
    %v4107 = vld [vmem:[%s5 + $0x188] sm:$0xff]
    %v4108 = vld [vmem:[%s5 + $0x190] sm:$0xff]
    %v4109 = vld [vmem:[%s5 + $0x198] sm:$0xff]
    %v4110 = vld [vmem:[%s5 + $0x1a0] sm:$0xff]
    %v4111 = vld [vmem:[%s5 + $0x1a8] sm:$0xff]
    %v4112 = vld [vmem:[%s5 + $0x1b0] sm:$0xff]
    %v4113 = vld [vmem:[%s5 + $0x1b8] sm:$0xff]
    %v4114 = vld [vmem:[%s5 + $0x1c0] sm:$0xff]
    %v4115 = vld [vmem:[%s5 + $0x1c8] sm:$0xff]
    %v4116 = vld [vmem:[%s5 + $0x1d0] sm:$0xff]
    %v4117 = vld [vmem:[%s5 + $0x1d8] sm:$0xff]
    %v4118 = vld [vmem:[%s5 + $0x1e0] sm:$0xff]
    %v4119 = vld [vmem:[%s5 + $0x1e8] sm:$0xff]
    %v4120 = vld [vmem:[%s5 + $0x1f0] sm:$0xff]
    %v4121 = vld [vmem:[%s5 + $0x1f8] sm:$0xff]
    %v4122 = vld [vmem:[%s6] sm:$0x1]
    %v4124 = vlaneseq
    %v4125 = vshrl.u32 %v4124, 7
    %v4126 = vsub.s32 0, %v4125
    %v4127 = vrot.slane %v4122, %v4126
    %4129 = vmatprep.subr.mxu0 0.0
    %4130 = vmatpush1.msra.mxu0 %v4058
    %4131 = vmatprep.subr.mxu0 0.0
    %4132 = vmatpush1.msra.mxu0 %v4059
    %4133 = vmatprep.subr.mxu0 0.0
    %4134 = vmatpush1.msra.mxu0 %v4060
    %4135 = vmatprep.subr.mxu0 0.0
    %4136 = vmatpush1.msra.mxu0 %v4061
    %4137 = vmatprep.subr.mxu0 0.0
    %4138 = vmatpush1.msra.mxu0 %v4062
    %4139 = vmatprep.subr.mxu0 0.0
    %4140 = vmatpush1.msra.mxu0 %v4063
    %4141 = vmatprep.subr.mxu0 0.0
    %4142 = vmatpush1.msra.mxu0 %v4064
    %4143 = vmatprep.subr.mxu0 0.0
    %4144 = vmatpush1.msra.mxu0 %v4065
    %4145 = vmatprep.subr.mxu0 0.0
    %4146 = vmatpush1.msra.mxu0 %v4066
    %4147 = vmatprep.subr.mxu0 0.0
    %4148 = vmatpush1.msra.mxu0 %v4067
    %4149 = vmatprep.subr.mxu0 0.0
    %4150 = vmatpush1.msra.mxu0 %v4068
    %4151 = vmatprep.subr.mxu0 0.0
    %4152 = vmatpush1.msra.mxu0 %v4069
    %4153 = vmatprep.subr.mxu0 0.0
    %4154 = vmatpush1.msra.mxu0 %v4070
    %4155 = vmatprep.subr.mxu0 0.0
    %4156 = vmatpush1.msra.mxu0 %v4071
    %4157 = vmatprep.subr.mxu0 0.0
    %4158 = vmatpush1.msra.mxu0 %v4072
    %4159 = vmatprep.subr.mxu0 0.0
    %4160 = vmatpush1.msra.mxu0 %v4073
    %4161 = vmatprep.subr.mxu0 0.0
    %4162 = vmatpush1.msra.mxu0 %v4074
    %4163 = vmatprep.subr.mxu0 0.0
    %4164 = vmatpush1.msra.mxu0 %v4075
    %4165 = vmatprep.subr.mxu0 0.0
    %4166 = vmatpush1.msra.mxu0 %v4076
    %4167 = vmatprep.subr.mxu0 0.0
    %4168 = vmatpush1.msra.mxu0 %v4077
    %4169 = vmatprep.subr.mxu0 0.0
    %4170 = vmatpush1.msra.mxu0 %v4078
    %4171 = vmatprep.subr.mxu0 0.0
    %4172 = vmatpush1.msra.mxu0 %v4079
    %4173 = vmatprep.subr.mxu0 0.0
    %4174 = vmatpush1.msra.mxu0 %v4080
    %4175 = vmatprep.subr.mxu0 0.0
    %4176 = vmatpush1.msra.mxu0 %v4081
    %4177 = vmatprep.subr.mxu0 0.0
    %4178 = vmatpush1.msra.mxu0 %v4082
    %4179 = vmatprep.subr.mxu0 0.0
    %4180 = vmatpush1.msra.mxu0 %v4083
    %4181 = vmatprep.subr.mxu0 0.0
    %4182 = vmatpush1.msra.mxu0 %v4084
    %4183 = vmatprep.subr.mxu0 0.0
    %4184 = vmatpush1.msra.mxu0 %v4085
    %4185 = vmatprep.subr.mxu0 0.0
    %4186 = vmatpush1.msra.mxu0 %v4086
    %4187 = vmatprep.subr.mxu0 0.0
    %4188 = vmatpush1.msra.mxu0 %v4087
    %4189 = vmatprep.subr.mxu0 0.0
    %4190 = vmatpush1.msra.mxu0 %v4088
    %4191 = vmatprep.subr.mxu0 0.0
    %4192 = vmatpush1.msra.mxu0 %v4089
    %4193 = vmatprep.mubr.f32.mxu0 %v4051
    %4194 = vmatmul.mubr.f32.gmra.mrb[0].mxu0 %v4048
    %v4195 = vpop.f32.mrb[0].mxu0
    %v4196 = vadd.f32 %v4127, %v4195
    %v4197 = vpop.f32.mrb[0].mxu0
    %4198 = vdwg.mxu0
    %4199 = vmatprep.subr.mxu0 0.0
    %4200 = vmatpush1.msra.mxu0 %v4090
    %4201 = vmatprep.subr.mxu0 0.0
    %4202 = vmatpush1.msra.mxu0 %v4091
    %4203 = vmatprep.subr.mxu0 0.0
    %4204 = vmatpush1.msra.mxu0 %v4092
    %4205 = vmatprep.subr.mxu0 0.0
    %4206 = vmatpush1.msra.mxu0 %v4093
    %4207 = vmatprep.subr.mxu0 0.0
    %4208 = vmatpush1.msra.mxu0 %v4094
    %4209 = vmatprep.subr.mxu0 0.0
    %4210 = vmatpush1.msra.mxu0 %v4095
    %4211 = vmatprep.subr.mxu0 0.0
    %4212 = vmatpush1.msra.mxu0 %v4096
    %4213 = vmatprep.subr.mxu0 0.0
    %4214 = vmatpush1.msra.mxu0 %v4097
    %4215 = vmatprep.subr.mxu0 0.0
    %4216 = vmatpush1.msra.mxu0 %v4098
    %4217 = vmatprep.subr.mxu0 0.0
    %4218 = vmatpush1.msra.mxu0 %v4099
    %4219 = vmatprep.subr.mxu0 0.0
    %4220 = vmatpush1.msra.mxu0 %v4100
    %4221 = vmatprep.subr.mxu0 0.0
    %4222 = vmatpush1.msra.mxu0 %v4101
    %4223 = vmatprep.subr.mxu0 0.0
    %4224 = vmatpush1.msra.mxu0 %v4102
    %4225 = vmatprep.subr.mxu0 0.0
    %4226 = vmatpush1.msra.mxu0 %v4103
    %4227 = vmatprep.subr.mxu0 0.0
    %4228 = vmatpush1.msra.mxu0 %v4104
    %4229 = vmatprep.subr.mxu0 0.0
    %4230 = vmatpush1.msra.mxu0 %v4105
    %4231 = vmatprep.subr.mxu0 0.0
    %4232 = vmatpush1.msra.mxu0 %v4106
    %4233 = vmatprep.subr.mxu0 0.0
    %4234 = vmatpush1.msra.mxu0 %v4107
    %4235 = vmatprep.subr.mxu0 0.0
    %4236 = vmatpush1.msra.mxu0 %v4108
    %4237 = vmatprep.subr.mxu0 0.0
    %4238 = vmatpush1.msra.mxu0 %v4109
    %4239 = vmatprep.subr.mxu0 0.0
    %4240 = vmatpush1.msra.mxu0 %v4110
    %4241 = vmatprep.subr.mxu0 0.0
    %4242 = vmatpush1.msra.mxu0 %v4111
    %4243 = vmatprep.subr.mxu0 0.0
    %4244 = vmatpush1.msra.mxu0 %v4112
    %4245 = vmatprep.subr.mxu0 0.0
    %4246 = vmatpush1.msra.mxu0 %v4113
    %4247 = vmatprep.subr.mxu0 0.0
    %4248 = vmatpush1.msra.mxu0 %v4114
    %4249 = vmatprep.subr.mxu0 0.0
    %4250 = vmatpush1.msra.mxu0 %v4115
    %4251 = vmatprep.subr.mxu0 0.0
    %4252 = vmatpush1.msra.mxu0 %v4116
    %4253 = vmatprep.subr.mxu0 0.0
    %4254 = vmatpush1.msra.mxu0 %v4117
    %4255 = vmatprep.subr.mxu0 0.0
    %4256 = vmatpush1.msra.mxu0 %v4118
    %4257 = vmatprep.subr.mxu0 0.0
    %4258 = vmatpush1.msra.mxu0 %v4119
    %4259 = vmatprep.subr.mxu0 0.0
    %4260 = vmatpush1.msra.mxu0 %v4120
    %4261 = vmatprep.subr.mxu0 0.0
    %4262 = vmatpush1.msra.mxu0 %v4121
    %4263 = vmatprep.mubr.f32.mxu0 %v4057
    %4264 = vmatmul.mubr.f32.gmra.mrb[0].mxu0 %v4054
    %v4265 = vpop.f32.mrb[0].mxu0
    %v4266 = vadd.f32 %v4196, %v4265
    %v4267 = vpop.f32.mrb[0].mxu0
    %4268 = vdwg.mxu0
    %v4269 = vmax.f32 %v4266, 0.0
    %v4270 = vld [vmem:[%s7] sm:$0xff]
    %v4271 = vld [vmem:[%s7 + $0x8] sm:$0xff]
    %v4272 = vld [vmem:[%s7 + $0x10] sm:$0xff]
    %v4273 = vld [vmem:[%s7 + $0x18] sm:$0xff]
    %v4274 = vld [vmem:[%s7 + $0x20] sm:$0xff]
    %v4275 = vld [vmem:[%s7 + $0x28] sm:$0xff]
    %v4276 = vld [vmem:[%s7 + $0x30] sm:$0xff]
    %v4277 = vld [vmem:[%s7 + $0x38] sm:$0xff]
    %v4278 = vld [vmem:[%s7 + $0x40] sm:$0xff]
    %v4279 = vld [vmem:[%s7 + $0x48] sm:$0xff]
    %v4280 = vld [vmem:[%s7 + $0x50] sm:$0xff]
    %v4281 = vld [vmem:[%s7 + $0x58] sm:$0xff]
    %v4282 = vld [vmem:[%s7 + $0x60] sm:$0xff]
    %v4283 = vld [vmem:[%s7 + $0x68] sm:$0xff]
    %v4284 = vld [vmem:[%s7 + $0x70] sm:$0xff]
    %v4285 = vld [vmem:[%s7 + $0x78] sm:$0xff]
    %v4286 = vld [vmem:[%s8] sm:$0x1]
    %v4288 = vlaneseq
    %v4289 = vshrl.u32 %v4288, 7
    %v4290 = vsub.s32 0, %v4289
    %v4291 = vrot.slane %v4286, %v4290
    %4293 = vmatprep.subr.mxu0 0.0
    %4294 = vmatpush1.msra.mxu0 %v4270
    %4295 = vmatprep.subr.mxu0 0.0
    %4296 = vmatpush1.msra.mxu0 %v4271
    %4297 = vmatprep.subr.mxu0 0.0
    %4298 = vmatpush1.msra.mxu0 %v4272
    %4299 = vmatprep.subr.mxu0 0.0
    %4300 = vmatpush1.msra.mxu0 %v4273
    %4301 = vmatprep.subr.mxu0 0.0
    %4302 = vmatpush1.msra.mxu0 %v4274
    %4303 = vmatprep.subr.mxu0 0.0
    %4304 = vmatpush1.msra.mxu0 %v4275
    %4305 = vmatprep.subr.mxu0 0.0
    %4306 = vmatpush1.msra.mxu0 %v4276
    %4307 = vmatprep.subr.mxu0 0.0
    %4308 = vmatpush1.msra.mxu0 %v4277
    %4309 = vmatprep.subr.mxu0 0.0
    %4310 = vmatpush1.msra.mxu0 %v4278
    %4311 = vmatprep.subr.mxu0 0.0
    %4312 = vmatpush1.msra.mxu0 %v4279
    %4313 = vmatprep.subr.mxu0 0.0
    %4314 = vmatpush1.msra.mxu0 %v4280
    %4315 = vmatprep.subr.mxu0 0.0
    %4316 = vmatpush1.msra.mxu0 %v4281
    %4317 = vmatprep.subr.mxu0 0.0
    %4318 = vmatpush1.msra.mxu0 %v4282
    %4319 = vmatprep.subr.mxu0 0.0
    %4320 = vmatpush1.msra.mxu0 %v4283
    %4321 = vmatprep.subr.mxu0 0.0
    %4322 = vmatpush1.msra.mxu0 %v4284
    %4323 = vmatprep.subr.mxu0 0.0
    %4324 = vmatpush1.msra.mxu0 %v4285
    %4325 = vmatprep.subr.mxu0 0.0
    %4326 = vmatpush1.msra.mxu0 0.0
    %4327 = vmatprep.subr.mxu0 0.0
    %4328 = vmatpush1.msra.mxu0 0.0
    %4329 = vmatprep.subr.mxu0 0.0
    %4330 = vmatpush1.msra.mxu0 0.0
    %4331 = vmatprep.subr.mxu0 0.0
    %4332 = vmatpush1.msra.mxu0 0.0
    %4333 = vmatprep.subr.mxu0 0.0
    %4334 = vmatpush1.msra.mxu0 0.0
    %4335 = vmatprep.subr.mxu0 0.0
    %4336 = vmatpush1.msra.mxu0 0.0
    %4337 = vmatprep.subr.mxu0 0.0
    %4338 = vmatpush1.msra.mxu0 0.0
    %4339 = vmatprep.subr.mxu0 0.0
    %4340 = vmatpush1.msra.mxu0 0.0
    %4341 = vmatprep.subr.mxu0 0.0
    %4342 = vmatpush1.msra.mxu0 0.0
    %4343 = vmatprep.subr.mxu0 0.0
    %4344 = vmatpush1.msra.mxu0 0.0
    %4345 = vmatprep.subr.mxu0 0.0
    %4346 = vmatpush1.msra.mxu0 0.0
    %4347 = vmatprep.subr.mxu0 0.0
    %4348 = vmatpush1.msra.mxu0 0.0
    %4349 = vmatprep.subr.mxu0 0.0
    %4350 = vmatpush1.msra.mxu0 0.0
    %4351 = vmatprep.subr.mxu0 0.0
    %4352 = vmatpush1.msra.mxu0 0.0
    %4353 = vmatprep.subr.mxu0 0.0
    %4354 = vmatpush1.msra.mxu0 0.0
    %4355 = vmatprep.subr.mxu0 0.0
    %4356 = vmatpush1.msra.mxu0 0.0
    %4357 = vmatprep.mubr.f32.mxu0 0.0
    %4358 = vmatmul.mubr.f32.gmra.mrb[0].mxu0 %v4269
    %v4359 = vpop.f32.mrb[0].mxu0
    %v4360 = vadd.f32 %v4291, %v4359
    %v4361 = vpop.f32.mrb[0].mxu0
    %4362 = vdwg.mxu0
    %v4363 = vmax.f32 %v4360, 0.0
    %v4364 = vld [vmem:[%s9] sm:$0xff]
    %v4365 = vld [vmem:[%s9 + $0x8] sm:$0xff]
    %v4366 = vld [vmem:[%s9 + $0x10] sm:$0xff]
    %v4367 = vld [vmem:[%s9 + $0x18] sm:$0xff]
    %v4368 = vld [vmem:[%s9 + $0x20] sm:$0xff]
    %v4369 = vld [vmem:[%s9 + $0x28] sm:$0xff]
    %v4370 = vld [vmem:[%s9 + $0x30] sm:$0xff]
    %v4371 = vld [vmem:[%s9 + $0x38] sm:$0xff]
    %v4372 = vld [vmem:[%s9 + $0x40] sm:$0xff]
    %v4373 = vld [vmem:[%s9 + $0x48] sm:$0xff]
    %v4374 = vld [vmem:[%s9 + $0x50] sm:$0xff]
    %v4375 = vld [vmem:[%s9 + $0x58] sm:$0xff]
    %v4376 = vld [vmem:[%s9 + $0x60] sm:$0xff]
    %v4377 = vld [vmem:[%s9 + $0x68] sm:$0xff]
    %v4378 = vld [vmem:[%s9 + $0x70] sm:$0xff]
    %v4379 = vld [vmem:[%s9 + $0x78] sm:$0xff]
    %v4380 = vld [vmem:[%s10] sm:$0x1]
    %v4382 = vlaneseq
    %v4383 = vshrl.u32 %v4382, 7
    %v4384 = vsub.s32 0, %v4383
    %v4385 = vrot.slane %v4380, %v4384
    %4387 = vmatprep.subr.mxu0 0.0
    %4388 = vmatpush1.msra.mxu0 %v4364
    %4389 = vmatprep.subr.mxu0 0.0
    %4390 = vmatpush1.msra.mxu0 %v4365
    %4391 = vmatprep.subr.mxu0 0.0
    %4392 = vmatpush1.msra.mxu0 %v4366
    %4393 = vmatprep.subr.mxu0 0.0
    %4394 = vmatpush1.msra.mxu0 %v4367
    %4395 = vmatprep.subr.mxu0 0.0
    %4396 = vmatpush1.msra.mxu0 %v4368
    %4397 = vmatprep.subr.mxu0 0.0
    %4398 = vmatpush1.msra.mxu0 %v4369
    %4399 = vmatprep.subr.mxu0 0.0
    %4400 = vmatpush1.msra.mxu0 %v4370
    %4401 = vmatprep.subr.mxu0 0.0
    %4402 = vmatpush1.msra.mxu0 %v4371
    %4403 = vmatprep.subr.mxu0 0.0
    %4404 = vmatpush1.msra.mxu0 %v4372
    %4405 = vmatprep.subr.mxu0 0.0
    %4406 = vmatpush1.msra.mxu0 %v4373
    %4407 = vmatprep.subr.mxu0 0.0
    %4408 = vmatpush1.msra.mxu0 %v4374
    %4409 = vmatprep.subr.mxu0 0.0
    %4410 = vmatpush1.msra.mxu0 %v4375
    %4411 = vmatprep.subr.mxu0 0.0
    %4412 = vmatpush1.msra.mxu0 %v4376
    %4413 = vmatprep.subr.mxu0 0.0
    %4414 = vmatpush1.msra.mxu0 %v4377
    %4415 = vmatprep.subr.mxu0 0.0
    %4416 = vmatpush1.msra.mxu0 %v4378
    %4417 = vmatprep.subr.mxu0 0.0
    %4418 = vmatpush1.msra.mxu0 %v4379
    %4419 = vmatprep.subr.mxu0 0.0
    %4420 = vmatpush1.msra.mxu0 0.0
    %4421 = vmatprep.subr.mxu0 0.0
    %4422 = vmatpush1.msra.mxu0 0.0
    %4423 = vmatprep.subr.mxu0 0.0
    %4424 = vmatpush1.msra.mxu0 0.0
    %4425 = vmatprep.subr.mxu0 0.0
    %4426 = vmatpush1.msra.mxu0 0.0
    %4427 = vmatprep.subr.mxu0 0.0
    %4428 = vmatpush1.msra.mxu0 0.0
    %4429 = vmatprep.subr.mxu0 0.0
    %4430 = vmatpush1.msra.mxu0 0.0
    %4431 = vmatprep.subr.mxu0 0.0
    %4432 = vmatpush1.msra.mxu0 0.0
    %4433 = vmatprep.subr.mxu0 0.0
    %4434 = vmatpush1.msra.mxu0 0.0
    %4435 = vmatprep.subr.mxu0 0.0
    %4436 = vmatpush1.msra.mxu0 0.0
    %4437 = vmatprep.subr.mxu0 0.0
    %4438 = vmatpush1.msra.mxu0 0.0
    %4439 = vmatprep.subr.mxu0 0.0
    %4440 = vmatpush1.msra.mxu0 0.0
    %4441 = vmatprep.subr.mxu0 0.0
    %4442 = vmatpush1.msra.mxu0 0.0
    %4443 = vmatprep.subr.mxu0 0.0
    %4444 = vmatpush1.msra.mxu0 0.0
    %4445 = vmatprep.subr.mxu0 0.0
    %4446 = vmatpush1.msra.mxu0 0.0
    %4447 = vmatprep.subr.mxu0 0.0
    %4448 = vmatpush1.msra.mxu0 0.0
    %4449 = vmatprep.subr.mxu0 0.0
    %4450 = vmatpush1.msra.mxu0 0.0
    %4451 = vmatprep.mubr.f32.mxu0 0.0
    %4452 = vmatmul.mubr.f32.gmra.mrb[0].mxu0 %v4363
    %v4453 = vpop.f32.mrb[0].mxu0
    %v4454 = vadd.f32 %v4385, %v4453
    %v4455 = vpop.f32.mrb[0].mxu0
    %4456 = vdwg.mxu0
    %vm4457 = vcmask 41984
    %v4458 = vsel %vm4457, %v4454, -inf
    %4459 = vmax.xlane.f32.xlu0 %v4458
    %v4460 = vpop.xlane.xlu0 %4459
    %v4461 = vsub.f32 %v4454, %v4460
    %v4462 = vmul.f32 %v4461, 1.442695
    %v4463 = vpow.pop %v4462
    %v4464 = vsel %vm4457, %v4463, 0.0
    %4465 = vadd.xlane.f32.xlu0 %v4464
    %v4466 = vpop.xlane.xlu0 %4465
    %v4467 = vrcp.pop %v4466
    %v4468 = vmul.f32 %v4463, %v4467
    %4469 = vst.msk [vmem:[#allocation5] sm:$0x3] %vm4457, %v4468
    // Predicated region
    $region46: #{cnn_agent_forward.1} parent=1 // pred_check
      _
    $region47: #{cnn_agent_forward.1} parent=1 // pred_check_branch
      %4471 = sbr.rel (0) target = $region49
    $region48: #{cnn_agent_forward.1} parent=1 // pred_region
      %s4473 = ssub.s32 32, 32
      %4474 = vsyncadd [#allocation6], %s4473
      %s4476 = sshll.u32 [#allocation5], 4
      %s4477 = int_to_ptr.vmem [resolvable:$true] %s4476
      %4479 = dma.vmem_to_hbm [thread:$0]  %s4477, 32, %s11, [#allocation6]
    $region49: #{cnn_agent_forward.1} parent=1 // pred_fallthru
      _
    // Predicated region
    $region50: #{cnn_agent_forward.1} parent=1 // pred_check
      _
    $region51: #{cnn_agent_forward.1} parent=1 // pred_check_branch
      %4481 = sbr.rel (0) target = $region53
    $region52: #{cnn_agent_forward.1} parent=1 // pred_region
      %4482 = dma.done [#allocation6], 32
    $region53: #{cnn_agent_forward.1} parent=1 // pred_fallthru
      _
    %4483 = vsyncpa [#allocation6], 1

</llo_original>
